<compile_context>
chip_gen: v6e
topology: v6e:2x2x1
jax: 0.10.0
libtpu: 0.0.40
codegen_flags: <defaults>
</compile_context>

<pallas_src>
import functools

import jax
import jax.numpy as jnp
from jax.experimental import pallas as pl
from jax.experimental.pallas import tpu as pltpu

HIDDEN = 50
N_HIDDEN_LAYERS = 5        # the five 50->50 layers between the 2->50 and 50->3 layers
OUT_LANES = 128            # lane-dense output width (real outputs live in lanes 0..2)


def _pinn_kernel(inp_ref, w1_ref, b1_ref, wh_ref, bh_ref, w7_ref, b7_ref, out_ref):
    inp = inp_ref[...]                                   # (tm, 2)
    # First layer on the VPU: K=2 would give ~2/256 MXU utilization, so use two
    # broadcast FMAs instead of a matmul.
    h = jnp.tanh(inp[:, 0:1] * w1_ref[0:1, :]
                 + inp[:, 1:2] * w1_ref[1:2, :]
                 + b1_ref[...])                          # (tm, 50)
    # Five 50x50 hidden layers on the MXU (weights packed into one resident slab).
    for li in range(N_HIDDEN_LAYERS):
        h = jnp.tanh(
            jnp.dot(h, wh_ref[li], preferred_element_type=jnp.float32)
            + bh_ref[li])                                # (tm, 50)
    # Output layer, lane-dense: w7/b7 are zero-padded to 128 lanes in the wrapper so
    # the store is an unmasked full-lane vst instead of masked partial stores.
    out_ref[...] = (
        jnp.dot(h, w7_ref[...], preferred_element_type=jnp.float32)
        + b7_ref[...]).astype(out_ref.dtype)             # (tm, 128)


def init_params(key):
    """Deterministic init mimicking PyTorch Linear default (uniform +-1/sqrt(fan_in))."""
    dims = [(2, HIDDEN)] + [(HIDDEN, HIDDEN)] * N_HIDDEN_LAYERS + [(HIDDEN, 3)]
    params = []
    for (fan_in, fan_out) in dims:
        key, kw, kb = jax.random.split(key, 3)
        bound = 1.0 / jnp.sqrt(fan_in)
        w = jax.random.uniform(kw, (fan_in, fan_out), jnp.float32, -bound, bound)
        b = jax.random.uniform(kb, (1, fan_out), jnp.float32, -bound, bound)
        params.append((w, b))
    return params


@functools.partial(jax.jit, static_argnames=("tm",))
def pinn_forward(x, y, params, *, tm=512):
    """Returns (u, v, p), each of shape (N, 1), N = x.size."""
    xf = x.reshape(-1, 1).astype(jnp.float32)
    yf = y.reshape(-1, 1).astype(jnp.float32)
    inputs = jnp.concatenate([xf, yf], axis=1)           # (N, 2)
    n = inputs.shape[0]

    # Pad the point batch up to a multiple of the row tile instead of asserting.
    n_pad = ((n + tm - 1) // tm) * tm
    if n_pad != n:
        inputs = jnp.pad(inputs, ((0, n_pad - n), (0, 0)))

    # Unpack / repack the parameters.
    w1, b1 = params[0]                                   # (2, 50), (1, 50)
    wh = jnp.stack([params[i][0] for i in range(1, 1 + N_HIDDEN_LAYERS)])  # (5, 50, 50)
    bh = jnp.stack([params[i][1] for i in range(1, 1 + N_HIDDEN_LAYERS)])  # (5, 1, 50)
    w7, b7 = params[-1]                                  # (50, 3), (1, 3)
    # Zero-pad the output projection to 128 lanes for an unmasked, lane-dense store.
    w7p = jnp.zeros((HIDDEN, OUT_LANES), jnp.float32).at[:, :3].set(w7)
    b7p = jnp.zeros((1, OUT_LANES), jnp.float32).at[:, :3].set(b7)

    grid = (n_pad // tm,)

    flops_per_pt = 2 * (2 * HIDDEN + N_HIDDEN_LAYERS * HIDDEN * HIDDEN + HIDDEN * 3)
    weight_bytes = 4 * (2 * HIDDEN + HIDDEN
                        + N_HIDDEN_LAYERS * (HIDDEN * HIDDEN + HIDDEN)
                        + HIDDEN * OUT_LANES + OUT_LANES)
    cost = pl.CostEstimate(
        flops=flops_per_pt * n_pad,
        transcendentals=(N_HIDDEN_LAYERS + 1) * HIDDEN * n_pad,
        bytes_accessed=4 * (n_pad * 2 + n_pad * OUT_LANES) + weight_bytes,
    )

    out = pl.pallas_call(
        _pinn_kernel,
        out_shape=jax.ShapeDtypeStruct((n_pad, OUT_LANES), jnp.float32),
        grid_spec=pltpu.PrefetchScalarGridSpec(
            num_scalar_prefetch=0,
            grid=grid,
            in_specs=[
                pl.BlockSpec((tm, 2), lambda i: (i, 0)),           # points
                pl.BlockSpec((2, HIDDEN), lambda i: (0, 0)),       # w1
                pl.BlockSpec((1, HIDDEN), lambda i: (0, 0)),       # b1
                pl.BlockSpec((N_HIDDEN_LAYERS, HIDDEN, HIDDEN),
                             lambda i: (0, 0, 0)),                 # hidden W slab
                pl.BlockSpec((N_HIDDEN_LAYERS, 1, HIDDEN),
                             lambda i: (0, 0, 0)),                 # hidden b slab
                pl.BlockSpec((HIDDEN, OUT_LANES), lambda i: (0, 0)),  # w7 (padded)
                pl.BlockSpec((1, OUT_LANES), lambda i: (0, 0)),       # b7 (padded)
            ],
            out_specs=pl.BlockSpec((tm, OUT_LANES), lambda i: (i, 0)),
        ),
        compiler_params=pltpu.CompilerParams(
            dimension_semantics=("parallel",),
            vmem_limit_bytes=32 * 1024 * 1024),
        cost_estimate=cost,
    )(inputs, w1, b1, wh, bh, w7p, b7p)

    return out[:n, 0:1], out[:n, 1:2], out[:n, 2:3]


def _reference(x, y, params):
    inp = jnp.concatenate(
        [x.reshape(-1, 1), y.reshape(-1, 1)], axis=1).astype(jnp.float32)
    h = inp
    for li, (w, b) in enumerate(params):
        h = h @ w + b
        if li < len(params) - 1:
            h = jnp.tanh(h)
    return h[:, 0:1], h[:, 1:2], h[:, 2:3]


if __name__ == "__main__":
    key = jax.random.PRNGKey(0)
    kx, ky, kp = jax.random.split(key, 3)

    # Small example: an 8x8 grid of collocation points -> N = 64 points
    # (batch padding inside pinn_forward handles N not divisible by tm).
    x = jax.random.uniform(kx, (8, 8), jnp.float32)
    y = jax.random.uniform(ky, (8, 8), jnp.float32)
    params = init_params(kp)

    u, v, p = pinn_forward(x, y, params)
    jax.block_until_ready((u, v, p))

    # Sanity check against a pure-JAX reference.
    ur, vr, pr = _reference(x, y, params)
    assert u.shape == (64, 1) and v.shape == (64, 1) and p.shape == (64, 1)
    assert jnp.allclose(u, ur, atol=1e-5)
    assert jnp.allclose(v, vr, atol=1e-5)
    assert jnp.allclose(p, pr, atol=1e-5)

    print("KERNEL_OK")
</pallas_src>

<mosaic_0001>
module attributes {stable_mosaic.version = 11 : i64} {
  func.func @_pinn_kernel(%arg0: i32, %arg1: memref<512x2xf32, #tpu.memory_space<vmem>>, %arg2: memref<2x50xf32, #tpu.memory_space<vmem>>, %arg3: memref<1x50xf32, #tpu.memory_space<vmem>>, %arg4: memref<5x50x50xf32, #tpu.memory_space<vmem>>, %arg5: memref<5x1x50xf32, #tpu.memory_space<vmem>>, %arg6: memref<50x128xf32, #tpu.memory_space<vmem>>, %arg7: memref<1x128xf32, #tpu.memory_space<vmem>>, %arg8: memref<512x128xf32, #tpu.memory_space<vmem>>) attributes {dimension_semantics = [#tpu.dimension_semantics<parallel>], iteration_bounds = array<i64: 1>, scalar_prefetch = 0 : i64, scratch_operands = 0 : i64, tpu.core_type = #tpu.core_type<tc>, window_params = [{transform_indices = @transform_0, window_bounds = array<i64: 512, 2>}, {pipeline_mode = #tpu.pipeline_mode<synchronous>, transform_indices = @transform_1, window_bounds = array<i64: 2, 50>}, {pipeline_mode = #tpu.pipeline_mode<synchronous>, transform_indices = @transform_2, window_bounds = array<i64: 1, 50>}, {pipeline_mode = #tpu.pipeline_mode<synchronous>, transform_indices = @transform_3, window_bounds = array<i64: 5, 50, 50>}, {pipeline_mode = #tpu.pipeline_mode<synchronous>, transform_indices = @transform_4, window_bounds = array<i64: 5, 1, 50>}, {pipeline_mode = #tpu.pipeline_mode<synchronous>, transform_indices = @transform_5, window_bounds = array<i64: 50, 128>}, {pipeline_mode = #tpu.pipeline_mode<synchronous>, transform_indices = @transform_6, window_bounds = array<i64: 1, 128>}, {transform_indices = @transform_7, window_bounds = array<i64: 512, 128>}]} {
    %c0 = arith.constant 0 : index
    %c0_0 = arith.constant 0 : index
    %0 = vector.load %arg1[%c0, %c0_0] : memref<512x2xf32, #tpu.memory_space<vmem>>, vector<512x2xf32>
    %1 = vector.extract_strided_slice %0 {offsets = [0, 0], sizes = [512, 1], strides = [1, 1]} : vector<512x2xf32> to vector<512x1xf32>
    %c0_1 = arith.constant 0 : index
    %c0_2 = arith.constant 0 : index
    %2 = vector.load %arg2[%c0_1, %c0_2] : memref<2x50xf32, #tpu.memory_space<vmem>>, vector<1x50xf32>
    %3 = vector.broadcast %1 : vector<512x1xf32> to vector<512x50xf32>
    %4 = vector.broadcast %2 : vector<1x50xf32> to vector<512x50xf32>
    %5 = arith.mulf %3, %4 : vector<512x50xf32>
    %6 = vector.extract_strided_slice %0 {offsets = [0, 1], sizes = [512, 1], strides = [1, 1]} : vector<512x2xf32> to vector<512x1xf32>
    %c1 = arith.constant 1 : index
    %c0_3 = arith.constant 0 : index
    %7 = vector.load %arg2[%c1, %c0_3] : memref<2x50xf32, #tpu.memory_space<vmem>>, vector<1x50xf32>
    %8 = vector.broadcast %6 : vector<512x1xf32> to vector<512x50xf32>
    %9 = vector.broadcast %7 : vector<1x50xf32> to vector<512x50xf32>
    %10 = arith.mulf %8, %9 : vector<512x50xf32>
    %11 = arith.addf %5, %10 : vector<512x50xf32>
    %c0_4 = arith.constant 0 : index
    %c0_5 = arith.constant 0 : index
    %12 = vector.load %arg3[%c0_4, %c0_5] : memref<1x50xf32, #tpu.memory_space<vmem>>, vector<1x50xf32>
    %13 = vector.broadcast %12 : vector<1x50xf32> to vector<512x50xf32>
    %14 = arith.addf %11, %13 : vector<512x50xf32>
    %15 = math.tanh %14 : vector<512x50xf32>
    %c0_6 = arith.constant 0 : index
    %c0_7 = arith.constant 0 : index
    %c0_8 = arith.constant 0 : index
    %16 = vector.load %arg4[%c0_6, %c0_7, %c0_8] : memref<5x50x50xf32, #tpu.memory_space<vmem>>, vector<1x50x50xf32>
    %17 = vector.shape_cast %16 : vector<1x50x50xf32> to vector<50x50xf32>
    %cst = arith.constant dense<0.000000e+00> : vector<512x50xf32>
    %18 = tpu.matmul %15, %17, %cst {dimension_numbers = #tpu.dot_dimension_numbers<[1], [0], [0], [1], [0, 0, 1, 1], [], []>} : vector<512x50xf32>, vector<50x50xf32>, vector<512x50xf32> -> vector<512x50xf32>
    %c0_9 = arith.constant 0 : index
    %c0_10 = arith.constant 0 : index
    %c0_11 = arith.constant 0 : index
    %19 = vector.load %arg5[%c0_9, %c0_10, %c0_11] : memref<5x1x50xf32, #tpu.memory_space<vmem>>, vector<1x1x50xf32>
    %20 = vector.shape_cast %19 : vector<1x1x50xf32> to vector<1x50xf32>
    %21 = vector.broadcast %20 : vector<1x50xf32> to vector<512x50xf32>
    %22 = arith.addf %18, %21 : vector<512x50xf32>
    %23 = math.tanh %22 : vector<512x50xf32>
    %c1_12 = arith.constant 1 : index
    %c0_13 = arith.constant 0 : index
    %c0_14 = arith.constant 0 : index
    %24 = vector.load %arg4[%c1_12, %c0_13, %c0_14] : memref<5x50x50xf32, #tpu.memory_space<vmem>>, vector<1x50x50xf32>
    %25 = vector.shape_cast %24 : vector<1x50x50xf32> to vector<50x50xf32>
    %cst_15 = arith.constant dense<0.000000e+00> : vector<512x50xf32>
    %26 = tpu.matmul %23, %25, %cst_15 {dimension_numbers = #tpu.dot_dimension_numbers<[1], [0], [0], [1], [0, 0, 1, 1], [], []>} : vector<512x50xf32>, vector<50x50xf32>, vector<512x50xf32> -> vector<512x50xf32>
    %c1_16 = arith.constant 1 : index
    %c0_17 = arith.constant 0 : index
    %c0_18 = arith.constant 0 : index
    %27 = vector.load %arg5[%c1_16, %c0_17, %c0_18] : memref<5x1x50xf32, #tpu.memory_space<vmem>>, vector<1x1x50xf32>
    %28 = vector.shape_cast %27 : vector<1x1x50xf32> to vector<1x50xf32>
    %29 = vector.broadcast %28 : vector<1x50xf32> to vector<512x50xf32>
    %30 = arith.addf %26, %29 : vector<512x50xf32>
    %31 = math.tanh %30 : vector<512x50xf32>
    %c2 = arith.constant 2 : index
    %c0_19 = arith.constant 0 : index
    %c0_20 = arith.constant 0 : index
    %32 = vector.load %arg4[%c2, %c0_19, %c0_20] : memref<5x50x50xf32, #tpu.memory_space<vmem>>, vector<1x50x50xf32>
    %33 = vector.shape_cast %32 : vector<1x50x50xf32> to vector<50x50xf32>
    %cst_21 = arith.constant dense<0.000000e+00> : vector<512x50xf32>
    %34 = tpu.matmul %31, %33, %cst_21 {dimension_numbers = #tpu.dot_dimension_numbers<[1], [0], [0], [1], [0, 0, 1, 1], [], []>} : vector<512x50xf32>, vector<50x50xf32>, vector<512x50xf32> -> vector<512x50xf32>
    %c2_22 = arith.constant 2 : index
    %c0_23 = arith.constant 0 : index
    %c0_24 = arith.constant 0 : index
    %35 = vector.load %arg5[%c2_22, %c0_23, %c0_24] : memref<5x1x50xf32, #tpu.memory_space<vmem>>, vector<1x1x50xf32>
    %36 = vector.shape_cast %35 : vector<1x1x50xf32> to vector<1x50xf32>
    %37 = vector.broadcast %36 : vector<1x50xf32> to vector<512x50xf32>
    %38 = arith.addf %34, %37 : vector<512x50xf32>
    %39 = math.tanh %38 : vector<512x50xf32>
    %c3 = arith.constant 3 : index
    %c0_25 = arith.constant 0 : index
    %c0_26 = arith.constant 0 : index
    %40 = vector.load %arg4[%c3, %c0_25, %c0_26] : memref<5x50x50xf32, #tpu.memory_space<vmem>>, vector<1x50x50xf32>
    %41 = vector.shape_cast %40 : vector<1x50x50xf32> to vector<50x50xf32>
    %cst_27 = arith.constant dense<0.000000e+00> : vector<512x50xf32>
    %42 = tpu.matmul %39, %41, %cst_27 {dimension_numbers = #tpu.dot_dimension_numbers<[1], [0], [0], [1], [0, 0, 1, 1], [], []>} : vector<512x50xf32>, vector<50x50xf32>, vector<512x50xf32> -> vector<512x50xf32>
    %c3_28 = arith.constant 3 : index
    %c0_29 = arith.constant 0 : index
    %c0_30 = arith.constant 0 : index
    %43 = vector.load %arg5[%c3_28, %c0_29, %c0_30] : memref<5x1x50xf32, #tpu.memory_space<vmem>>, vector<1x1x50xf32>
    %44 = vector.shape_cast %43 : vector<1x1x50xf32> to vector<1x50xf32>
    %45 = vector.broadcast %44 : vector<1x50xf32> to vector<512x50xf32>
    %46 = arith.addf %42, %45 : vector<512x50xf32>
    %47 = math.tanh %46 : vector<512x50xf32>
    %c4 = arith.constant 4 : index
    %c0_31 = arith.constant 0 : index
    %c0_32 = arith.constant 0 : index
    %48 = vector.load %arg4[%c4, %c0_31, %c0_32] : memref<5x50x50xf32, #tpu.memory_space<vmem>>, vector<1x50x50xf32>
    %49 = vector.shape_cast %48 : vector<1x50x50xf32> to vector<50x50xf32>
    %cst_33 = arith.constant dense<0.000000e+00> : vector<512x50xf32>
    %50 = tpu.matmul %47, %49, %cst_33 {dimension_numbers = #tpu.dot_dimension_numbers<[1], [0], [0], [1], [0, 0, 1, 1], [], []>} : vector<512x50xf32>, vector<50x50xf32>, vector<512x50xf32> -> vector<512x50xf32>
    %c4_34 = arith.constant 4 : index
    %c0_35 = arith.constant 0 : index
    %c0_36 = arith.constant 0 : index
    %51 = vector.load %arg5[%c4_34, %c0_35, %c0_36] : memref<5x1x50xf32, #tpu.memory_space<vmem>>, vector<1x1x50xf32>
    %52 = vector.shape_cast %51 : vector<1x1x50xf32> to vector<1x50xf32>
    %53 = vector.broadcast %52 : vector<1x50xf32> to vector<512x50xf32>
    %54 = arith.addf %50, %53 : vector<512x50xf32>
    %55 = math.tanh %54 : vector<512x50xf32>
    %c0_37 = arith.constant 0 : index
    %c0_38 = arith.constant 0 : index
    %56 = vector.load %arg6[%c0_37, %c0_38] : memref<50x128xf32, #tpu.memory_space<vmem>>, vector<50x128xf32>
    %cst_39 = arith.constant dense<0.000000e+00> : vector<512x128xf32>
    %57 = tpu.matmul %55, %56, %cst_39 {dimension_numbers = #tpu.dot_dimension_numbers<[1], [0], [0], [1], [0, 0, 1, 1], [], []>} : vector<512x50xf32>, vector<50x128xf32>, vector<512x128xf32> -> vector<512x128xf32>
    %c0_40 = arith.constant 0 : index
    %c0_41 = arith.constant 0 : index
    %58 = vector.load %arg7[%c0_40, %c0_41] : memref<1x128xf32, #tpu.memory_space<vmem>>, vector<1x128xf32>
    %59 = vector.broadcast %58 : vector<1x128xf32> to vector<512x128xf32>
    %60 = arith.addf %57, %59 : vector<512x128xf32>
    %c0_42 = arith.constant 0 : index
    %c0_43 = arith.constant 0 : index
    %61 = vector.load %arg8[%c0_42, %c0_43] : memref<512x128xf32, #tpu.memory_space<vmem>>, vector<512x128xf32>
    tpu.vector_store %arg8[%c0_42, %c0_43], %60 {strides = array<i32>} : memref<512x128xf32, #tpu.memory_space<vmem>>, vector<512x128xf32>,
    return
  }
  func.func @transform_0(%arg0: i32) -> (i32, i32) {
    %c0_i32 = arith.constant 0 : i32
    %c0_i32_0 = arith.constant 0 : i32
    return %arg0, %c0_i32 : i32, i32
  }
  func.func @transform_1(%arg0: i32) -> (i32, i32) {
    %c0_i32 = arith.constant 0 : i32
    %c0_i32_0 = arith.constant 0 : i32
    %c0_i32_1 = arith.constant 0 : i32
    return %c0_i32, %c0_i32_0 : i32, i32
  }
  func.func @transform_2(%arg0: i32) -> (i32, i32) {
    %c0_i32 = arith.constant 0 : i32
    %c0_i32_0 = arith.constant 0 : i32
    %c0_i32_1 = arith.constant 0 : i32
    return %c0_i32, %c0_i32_0 : i32, i32
  }
  func.func @transform_3(%arg0: i32) -> (i32, i32, i32) {
    %c0_i32 = arith.constant 0 : i32
    %c0_i32_0 = arith.constant 0 : i32
    %c0_i32_1 = arith.constant 0 : i32
    %c0_i32_2 = arith.constant 0 : i32
    return %c0_i32, %c0_i32_0, %c0_i32_1 : i32, i32, i32
  }
  func.func @transform_4(%arg0: i32) -> (i32, i32, i32) {
    %c0_i32 = arith.constant 0 : i32
    %c0_i32_0 = arith.constant 0 : i32
    %c0_i32_1 = arith.constant 0 : i32
    %c0_i32_2 = arith.constant 0 : i32
    return %c0_i32, %c0_i32_0, %c0_i32_1 : i32, i32, i32
  }
  func.func @transform_5(%arg0: i32) -> (i32, i32) {
    %c0_i32 = arith.constant 0 : i32
    %c0_i32_0 = arith.constant 0 : i32
    %c0_i32_1 = arith.constant 0 : i32
    return %c0_i32, %c0_i32_0 : i32, i32
  }
  func.func @transform_6(%arg0: i32) -> (i32, i32) {
    %c0_i32 = arith.constant 0 : i32
    %c0_i32_0 = arith.constant 0 : i32
    %c0_i32_1 = arith.constant 0 : i32
    return %c0_i32, %c0_i32_0 : i32, i32
  }
  func.func @transform_7(%arg0: i32) -> (i32, i32) {
    %c0_i32 = arith.constant 0 : i32
    %c0_i32_0 = arith.constant 0 : i32
    return %arg0, %c0_i32 : i32, i32
  }
}

</mosaic_0001>

<llo_original>
// kernel: pinn_forward.1
$region0: #{pinn_forward.1}
  #allocation0 [shape = 'u32[]', space=smem, size = 0x4, offset = 0x4, fixed_abs, tag = 'smem constant byte address 0x4 - core index']
  #allocation1 [shape = 'u32[144,128]{1,0:T(1,128)}', space=vmem, size = 0x12000, scoped, tag = 'internal scratch']
  %s0 = inlined_call_operand.vmem [shape: f32[512,2], index: 0, kind: input, shape index: {}]
  %s1 = inlined_call_operand.vmem [shape: f32[2,50], index: 1, kind: input, shape index: {}]
  %s2 = inlined_call_operand.vmem [shape: f32[1,50], index: 2, kind: input, shape index: {}]
  %s3 = inlined_call_operand.vmem [shape: f32[5,50,50], index: 3, kind: input, shape index: {}]
  %s4 = inlined_call_operand.vmem [shape: f32[5,1,50], index: 4, kind: input, shape index: {}]
  %s5 = inlined_call_operand.vmem [shape: f32[50,128], index: 5, kind: input, shape index: {}]
  %s6 = inlined_call_operand.vmem [shape: f32[1,128], index: 6, kind: input, shape index: {}]
  %s7 = inlined_call_operand.vmem [shape: f32[512,128], index: 7, kind: output, shape index: {}]
  %s8 = sld [smem:[#allocation0]]
  $region38: #{pinn_forward.1} parent=0
    _
  %s10 = ssub.s32 1, %s8
  %s11 = scalar_select 0, %s10, %s8
  // Predicated region
  $region2: #{pinn_forward.1} parent=0 // pred_check
    _
  $region3: #{pinn_forward.1} parent=0 // pred_check_branch
    %13 = sbr.rel (0) target = $region5
  $region4: #{pinn_forward.1} parent=0 // pred_region
    _
  $region5: #{pinn_forward.1} parent=0 // pred_fallthru
    _
  // Predicated region
  $region6: #{pinn_forward.1} parent=0 // pred_check
    _
  $region7: #{pinn_forward.1} parent=0 // pred_check_branch
    %15 = sbr.rel (0) target = $region9
  $region8: #{pinn_forward.1} parent=0 // pred_region
    _
  $region9: #{pinn_forward.1} parent=0 // pred_fallthru
    _
  // Predicated region
  $region10: #{pinn_forward.1} parent=0 // pred_check
    _
  $region11: #{pinn_forward.1} parent=0 // pred_check_branch
    %17 = sbr.rel (0) target = $region13
  $region12: #{pinn_forward.1} parent=0 // pred_region
    _
  $region13: #{pinn_forward.1} parent=0 // pred_fallthru
    _
  // Predicated region
  $region14: #{pinn_forward.1} parent=0 // pred_check
    _
  $region15: #{pinn_forward.1} parent=0 // pred_check_branch
    %19 = sbr.rel (0) target = $region17
  $region16: #{pinn_forward.1} parent=0 // pred_region
    _
  $region17: #{pinn_forward.1} parent=0 // pred_fallthru
    _
  // Predicated region
  $region18: #{pinn_forward.1} parent=0 // pred_check
    _
  $region19: #{pinn_forward.1} parent=0 // pred_check_branch
    %21 = sbr.rel (0) target = $region21
  $region20: #{pinn_forward.1} parent=0 // pred_region
    _
  $region21: #{pinn_forward.1} parent=0 // pred_fallthru
    _
  // Predicated region
  $region22: #{pinn_forward.1} parent=0 // pred_check
    _
  $region23: #{pinn_forward.1} parent=0 // pred_check_branch
    %23 = sbr.rel (0) target = $region25
  $region24: #{pinn_forward.1} parent=0 // pred_region
    _
  $region25: #{pinn_forward.1} parent=0 // pred_fallthru
    _
  // Predicated region
  $region26: #{pinn_forward.1} parent=0 // pred_check
    _
  $region27: #{pinn_forward.1} parent=0 // pred_check_branch
    %25 = sbr.rel (0) target = $region29
  $region28: #{pinn_forward.1} parent=0 // pred_region
    _
  $region29: #{pinn_forward.1} parent=0 // pred_fallthru
    _
  %v26 = vld [vmem:[%s0] sm:$0xff]
  %v27 = vld [vmem:[%s0 + $0x8] sm:$0xff]
  %v28 = vld [vmem:[%s0 + $0x10] sm:$0xff]
  %v29 = vld [vmem:[%s0 + $0x18] sm:$0xff]
  %v30 = vld [vmem:[%s0 + $0x20] sm:$0xff]
  %v31 = vld [vmem:[%s0 + $0x28] sm:$0xff]
  %v32 = vld [vmem:[%s0 + $0x30] sm:$0xff]
  %v33 = vld [vmem:[%s0 + $0x38] sm:$0xff]
  %v34 = vld [vmem:[%s0 + $0x40] sm:$0xff]
  %v35 = vld [vmem:[%s0 + $0x48] sm:$0xff]
  %v36 = vld [vmem:[%s0 + $0x50] sm:$0xff]
  %v37 = vld [vmem:[%s0 + $0x58] sm:$0xff]
  %v38 = vld [vmem:[%s0 + $0x60] sm:$0xff]
  %v39 = vld [vmem:[%s0 + $0x68] sm:$0xff]
  %v40 = vld [vmem:[%s0 + $0x70] sm:$0xff]
  %v41 = vld [vmem:[%s0 + $0x78] sm:$0xff]
  %v42 = vld [vmem:[%s0 + $0x80] sm:$0xff]
  %v43 = vld [vmem:[%s0 + $0x88] sm:$0xff]
  %v44 = vld [vmem:[%s0 + $0x90] sm:$0xff]
  %v45 = vld [vmem:[%s0 + $0x98] sm:$0xff]
  %v46 = vld [vmem:[%s0 + $0xa0] sm:$0xff]
  %v47 = vld [vmem:[%s0 + $0xa8] sm:$0xff]
  %v48 = vld [vmem:[%s0 + $0xb0] sm:$0xff]
  %v49 = vld [vmem:[%s0 + $0xb8] sm:$0xff]
  %v50 = vld [vmem:[%s0 + $0xc0] sm:$0xff]
  %v51 = vld [vmem:[%s0 + $0xc8] sm:$0xff]
  %v52 = vld [vmem:[%s0 + $0xd0] sm:$0xff]
  %v53 = vld [vmem:[%s0 + $0xd8] sm:$0xff]
  %v54 = vld [vmem:[%s0 + $0xe0] sm:$0xff]
  %v55 = vld [vmem:[%s0 + $0xe8] sm:$0xff]
  %v56 = vld [vmem:[%s0 + $0xf0] sm:$0xff]
  %v57 = vld [vmem:[%s0 + $0xf8] sm:$0xff]
  %v58 = vld [vmem:[%s0 + $0x100] sm:$0xff]
  %v59 = vld [vmem:[%s0 + $0x108] sm:$0xff]
  %v60 = vld [vmem:[%s0 + $0x110] sm:$0xff]
  %v61 = vld [vmem:[%s0 + $0x118] sm:$0xff]
  %v62 = vld [vmem:[%s0 + $0x120] sm:$0xff]
  %v63 = vld [vmem:[%s0 + $0x128] sm:$0xff]
  %v64 = vld [vmem:[%s0 + $0x130] sm:$0xff]
  %v65 = vld [vmem:[%s0 + $0x138] sm:$0xff]
  %v66 = vld [vmem:[%s0 + $0x140] sm:$0xff]
  %v67 = vld [vmem:[%s0 + $0x148] sm:$0xff]
  %v68 = vld [vmem:[%s0 + $0x150] sm:$0xff]
  %v69 = vld [vmem:[%s0 + $0x158] sm:$0xff]
  %v70 = vld [vmem:[%s0 + $0x160] sm:$0xff]
  %v71 = vld [vmem:[%s0 + $0x168] sm:$0xff]
  %v72 = vld [vmem:[%s0 + $0x170] sm:$0xff]
  %v73 = vld [vmem:[%s0 + $0x178] sm:$0xff]
  %v74 = vld [vmem:[%s0 + $0x180] sm:$0xff]
  %v75 = vld [vmem:[%s0 + $0x188] sm:$0xff]
  %v76 = vld [vmem:[%s0 + $0x190] sm:$0xff]
  %v77 = vld [vmem:[%s0 + $0x198] sm:$0xff]
  %v78 = vld [vmem:[%s0 + $0x1a0] sm:$0xff]
  %v79 = vld [vmem:[%s0 + $0x1a8] sm:$0xff]
  %v80 = vld [vmem:[%s0 + $0x1b0] sm:$0xff]
  %v81 = vld [vmem:[%s0 + $0x1b8] sm:$0xff]
  %v82 = vld [vmem:[%s0 + $0x1c0] sm:$0xff]
  %v83 = vld [vmem:[%s0 + $0x1c8] sm:$0xff]
  %v84 = vld [vmem:[%s0 + $0x1d0] sm:$0xff]
  %v85 = vld [vmem:[%s0 + $0x1d8] sm:$0xff]
  %v86 = vld [vmem:[%s0 + $0x1e0] sm:$0xff]
  %v87 = vld [vmem:[%s0 + $0x1e8] sm:$0xff]
  %v88 = vld [vmem:[%s0 + $0x1f0] sm:$0xff]
  %v89 = vld [vmem:[%s0 + $0x1f8] sm:$0xff]
  %v90 = vld [vmem:[%s1] sm:$0x1]
  %92 = vset.pattern.permute.xlu0 0
  %93 = vperm.xlu0 %92, %v26
  %v94 = vpop.permute.xlu0 %93
  %97 = vset.pattern.permute.xlu0 0
  %98 = vperm.xlu0 %97, %v27
  %v99 = vpop.permute.xlu0 %98
  %102 = vset.pattern.permute.xlu0 0
  %103 = vperm.xlu0 %102, %v28
  %v104 = vpop.permute.xlu0 %103
  %107 = vset.pattern.permute.xlu0 0
  %108 = vperm.xlu0 %107, %v29
  %v109 = vpop.permute.xlu0 %108
  %112 = vset.pattern.permute.xlu0 0
  %113 = vperm.xlu0 %112, %v30
  %v114 = vpop.permute.xlu0 %113
  %117 = vset.pattern.permute.xlu0 0
  %118 = vperm.xlu0 %117, %v31
  %v119 = vpop.permute.xlu0 %118
  %122 = vset.pattern.permute.xlu0 0
  %123 = vperm.xlu0 %122, %v32
  %v124 = vpop.permute.xlu0 %123
  %127 = vset.pattern.permute.xlu0 0
  %128 = vperm.xlu0 %127, %v33
  %v129 = vpop.permute.xlu0 %128
  %132 = vset.pattern.permute.xlu0 0
  %133 = vperm.xlu0 %132, %v34
  %v134 = vpop.permute.xlu0 %133
  %137 = vset.pattern.permute.xlu0 0
  %138 = vperm.xlu0 %137, %v35
  %v139 = vpop.permute.xlu0 %138
  %142 = vset.pattern.permute.xlu0 0
  %143 = vperm.xlu0 %142, %v36
  %v144 = vpop.permute.xlu0 %143
  %147 = vset.pattern.permute.xlu0 0
  %148 = vperm.xlu0 %147, %v37
  %v149 = vpop.permute.xlu0 %148
  %152 = vset.pattern.permute.xlu0 0
  %153 = vperm.xlu0 %152, %v38
  %v154 = vpop.permute.xlu0 %153
  %157 = vset.pattern.permute.xlu0 0
  %158 = vperm.xlu0 %157, %v39
  %v159 = vpop.permute.xlu0 %158
  %162 = vset.pattern.permute.xlu0 0
  %163 = vperm.xlu0 %162, %v40
  %v164 = vpop.permute.xlu0 %163
  %167 = vset.pattern.permute.xlu0 0
  %168 = vperm.xlu0 %167, %v41
  %v169 = vpop.permute.xlu0 %168
  %172 = vset.pattern.permute.xlu0 0
  %173 = vperm.xlu0 %172, %v42
  %v174 = vpop.permute.xlu0 %173
  %177 = vset.pattern.permute.xlu0 0
  %178 = vperm.xlu0 %177, %v43
  %v179 = vpop.permute.xlu0 %178
  %182 = vset.pattern.permute.xlu0 0
  %183 = vperm.xlu0 %182, %v44
  %v184 = vpop.permute.xlu0 %183
  %187 = vset.pattern.permute.xlu0 0
  %188 = vperm.xlu0 %187, %v45
  %v189 = vpop.permute.xlu0 %188
  %192 = vset.pattern.permute.xlu0 0
  %193 = vperm.xlu0 %192, %v46
  %v194 = vpop.permute.xlu0 %193
  %197 = vset.pattern.permute.xlu0 0
  %198 = vperm.xlu0 %197, %v47
  %v199 = vpop.permute.xlu0 %198
  %202 = vset.pattern.permute.xlu0 0
  %203 = vperm.xlu0 %202, %v48
  %v204 = vpop.permute.xlu0 %203
  %207 = vset.pattern.permute.xlu0 0
  %208 = vperm.xlu0 %207, %v49
  %v209 = vpop.permute.xlu0 %208
  %212 = vset.pattern.permute.xlu0 0
  %213 = vperm.xlu0 %212, %v50
  %v214 = vpop.permute.xlu0 %213
  %217 = vset.pattern.permute.xlu0 0
  %218 = vperm.xlu0 %217, %v51
  %v219 = vpop.permute.xlu0 %218
  %222 = vset.pattern.permute.xlu0 0
  %223 = vperm.xlu0 %222, %v52
  %v224 = vpop.permute.xlu0 %223
  %227 = vset.pattern.permute.xlu0 0
  %228 = vperm.xlu0 %227, %v53
  %v229 = vpop.permute.xlu0 %228
  %232 = vset.pattern.permute.xlu0 0
  %233 = vperm.xlu0 %232, %v54
  %v234 = vpop.permute.xlu0 %233
  %237 = vset.pattern.permute.xlu0 0
  %238 = vperm.xlu0 %237, %v55
  %v239 = vpop.permute.xlu0 %238
  %242 = vset.pattern.permute.xlu0 0
  %243 = vperm.xlu0 %242, %v56
  %v244 = vpop.permute.xlu0 %243
  %247 = vset.pattern.permute.xlu0 0
  %248 = vperm.xlu0 %247, %v57
  %v249 = vpop.permute.xlu0 %248
  %252 = vset.pattern.permute.xlu0 0
  %253 = vperm.xlu0 %252, %v58
  %v254 = vpop.permute.xlu0 %253
  %257 = vset.pattern.permute.xlu0 0
  %258 = vperm.xlu0 %257, %v59
  %v259 = vpop.permute.xlu0 %258
  %262 = vset.pattern.permute.xlu0 0
  %263 = vperm.xlu0 %262, %v60
  %v264 = vpop.permute.xlu0 %263
  %267 = vset.pattern.permute.xlu0 0
  %268 = vperm.xlu0 %267, %v61
  %v269 = vpop.permute.xlu0 %268
  %272 = vset.pattern.permute.xlu0 0
  %273 = vperm.xlu0 %272, %v62
  %v274 = vpop.permute.xlu0 %273
  %277 = vset.pattern.permute.xlu0 0
  %278 = vperm.xlu0 %277, %v63
  %v279 = vpop.permute.xlu0 %278
  %282 = vset.pattern.permute.xlu0 0
  %283 = vperm.xlu0 %282, %v64
  %v284 = vpop.permute.xlu0 %283
  %287 = vset.pattern.permute.xlu0 0
  %288 = vperm.xlu0 %287, %v65
  %v289 = vpop.permute.xlu0 %288
  %292 = vset.pattern.permute.xlu0 0
  %293 = vperm.xlu0 %292, %v66
  %v294 = vpop.permute.xlu0 %293
  %297 = vset.pattern.permute.xlu0 0
  %298 = vperm.xlu0 %297, %v67
  %v299 = vpop.permute.xlu0 %298
  %302 = vset.pattern.permute.xlu0 0
  %303 = vperm.xlu0 %302, %v68
  %v304 = vpop.permute.xlu0 %303
  %307 = vset.pattern.permute.xlu0 0
  %308 = vperm.xlu0 %307, %v69
  %v309 = vpop.permute.xlu0 %308
  %312 = vset.pattern.permute.xlu0 0
  %313 = vperm.xlu0 %312, %v70
  %v314 = vpop.permute.xlu0 %313
  %317 = vset.pattern.permute.xlu0 0
  %318 = vperm.xlu0 %317, %v71
  %v319 = vpop.permute.xlu0 %318
  %322 = vset.pattern.permute.xlu0 0
  %323 = vperm.xlu0 %322, %v72
  %v324 = vpop.permute.xlu0 %323
  %327 = vset.pattern.permute.xlu0 0
  %328 = vperm.xlu0 %327, %v73
  %v329 = vpop.permute.xlu0 %328
  %332 = vset.pattern.permute.xlu0 0
  %333 = vperm.xlu0 %332, %v74
  %v334 = vpop.permute.xlu0 %333
  %337 = vset.pattern.permute.xlu0 0
  %338 = vperm.xlu0 %337, %v75
  %v339 = vpop.permute.xlu0 %338
  %342 = vset.pattern.permute.xlu0 0
  %343 = vperm.xlu0 %342, %v76
  %v344 = vpop.permute.xlu0 %343
  %347 = vset.pattern.permute.xlu0 0
  %348 = vperm.xlu0 %347, %v77
  %v349 = vpop.permute.xlu0 %348
  %352 = vset.pattern.permute.xlu0 0
  %353 = vperm.xlu0 %352, %v78
  %v354 = vpop.permute.xlu0 %353
  %357 = vset.pattern.permute.xlu0 0
  %358 = vperm.xlu0 %357, %v79
  %v359 = vpop.permute.xlu0 %358
  %362 = vset.pattern.permute.xlu0 0
  %363 = vperm.xlu0 %362, %v80
  %v364 = vpop.permute.xlu0 %363
  %367 = vset.pattern.permute.xlu0 0
  %368 = vperm.xlu0 %367, %v81
  %v369 = vpop.permute.xlu0 %368
  %372 = vset.pattern.permute.xlu0 0
  %373 = vperm.xlu0 %372, %v82
  %v374 = vpop.permute.xlu0 %373
  %377 = vset.pattern.permute.xlu0 0
  %378 = vperm.xlu0 %377, %v83
  %v379 = vpop.permute.xlu0 %378
  %382 = vset.pattern.permute.xlu0 0
  %383 = vperm.xlu0 %382, %v84
  %v384 = vpop.permute.xlu0 %383
  %387 = vset.pattern.permute.xlu0 0
  %388 = vperm.xlu0 %387, %v85
  %v389 = vpop.permute.xlu0 %388
  %392 = vset.pattern.permute.xlu0 0
  %393 = vperm.xlu0 %392, %v86
  %v394 = vpop.permute.xlu0 %393
  %397 = vset.pattern.permute.xlu0 0
  %398 = vperm.xlu0 %397, %v87
  %v399 = vpop.permute.xlu0 %398
  %402 = vset.pattern.permute.xlu0 0
  %403 = vperm.xlu0 %402, %v88
  %v404 = vpop.permute.xlu0 %403
  %407 = vset.pattern.permute.xlu0 0
  %408 = vperm.xlu0 %407, %v89
  %v409 = vpop.permute.xlu0 %408
  %v411 = vlaneseq
  %v412 = vshrl.u32 %v411, 7
  %v413 = vsub.s32 0, %v412
  %v414 = vrot.slane %v90, %v413
  %v415 = vmul.f32 %v94, %v414
  %v416 = vmul.f32 %v99, %v414
  %v417 = vmul.f32 %v104, %v414
  %v418 = vmul.f32 %v109, %v414
  %v419 = vmul.f32 %v114, %v414
  %v420 = vmul.f32 %v119, %v414
  %v421 = vmul.f32 %v124, %v414
  %v422 = vmul.f32 %v129, %v414
  %v423 = vmul.f32 %v134, %v414
  %v424 = vmul.f32 %v139, %v414
  %v425 = vmul.f32 %v144, %v414
  %v426 = vmul.f32 %v149, %v414
  %v427 = vmul.f32 %v154, %v414
  %v428 = vmul.f32 %v159, %v414
  %v429 = vmul.f32 %v164, %v414
  %v430 = vmul.f32 %v169, %v414
  %v431 = vmul.f32 %v174, %v414
  %v432 = vmul.f32 %v179, %v414
  %v433 = vmul.f32 %v184, %v414
  %v434 = vmul.f32 %v189, %v414
  %v435 = vmul.f32 %v194, %v414
  %v436 = vmul.f32 %v199, %v414
  %v437 = vmul.f32 %v204, %v414
  %v438 = vmul.f32 %v209, %v414
  %v439 = vmul.f32 %v214, %v414
  %v440 = vmul.f32 %v219, %v414
  %v441 = vmul.f32 %v224, %v414
  %v442 = vmul.f32 %v229, %v414
  %v443 = vmul.f32 %v234, %v414
  %v444 = vmul.f32 %v239, %v414
  %v445 = vmul.f32 %v244, %v414
  %v446 = vmul.f32 %v249, %v414
  %v447 = vmul.f32 %v254, %v414
  %v448 = vmul.f32 %v259, %v414
  %v449 = vmul.f32 %v264, %v414
  %v450 = vmul.f32 %v269, %v414
  %v451 = vmul.f32 %v274, %v414
  %v452 = vmul.f32 %v279, %v414
  %v453 = vmul.f32 %v284, %v414
  %v454 = vmul.f32 %v289, %v414
  %v455 = vmul.f32 %v294, %v414
  %v456 = vmul.f32 %v299, %v414
  %v457 = vmul.f32 %v304, %v414
  %v458 = vmul.f32 %v309, %v414
  %v459 = vmul.f32 %v314, %v414
  %v460 = vmul.f32 %v319, %v414
  %v461 = vmul.f32 %v324, %v414
  %v462 = vmul.f32 %v329, %v414
  %v463 = vmul.f32 %v334, %v414
  %v464 = vmul.f32 %v339, %v414
  %v465 = vmul.f32 %v344, %v414
  %v466 = vmul.f32 %v349, %v414
  %v467 = vmul.f32 %v354, %v414
  %v468 = vmul.f32 %v359, %v414
  %v469 = vmul.f32 %v364, %v414
  %v470 = vmul.f32 %v369, %v414
  %v471 = vmul.f32 %v374, %v414
  %v472 = vmul.f32 %v379, %v414
  %v473 = vmul.f32 %v384, %v414
  %v474 = vmul.f32 %v389, %v414
  %v475 = vmul.f32 %v394, %v414
  %v476 = vmul.f32 %v399, %v414
  %v477 = vmul.f32 %v404, %v414
  %v478 = vmul.f32 %v409, %v414
  %v479 = vld [vmem:[%s1 + $0x1] sm:$0x1]
  %480 = vset.pattern.permute.xlu0 1
  %481 = vperm.xlu0 %480, %v26
  %v482 = vpop.permute.xlu0 %481
  %484 = vset.pattern.permute.xlu0 1
  %485 = vperm.xlu0 %484, %v27
  %v486 = vpop.permute.xlu0 %485
  %488 = vset.pattern.permute.xlu0 1
  %489 = vperm.xlu0 %488, %v28
  %v490 = vpop.permute.xlu0 %489
  %492 = vset.pattern.permute.xlu0 1
  %493 = vperm.xlu0 %492, %v29
  %v494 = vpop.permute.xlu0 %493
  %496 = vset.pattern.permute.xlu0 1
  %497 = vperm.xlu0 %496, %v30
  %v498 = vpop.permute.xlu0 %497
  %500 = vset.pattern.permute.xlu0 1
  %501 = vperm.xlu0 %500, %v31
  %v502 = vpop.permute.xlu0 %501
  %504 = vset.pattern.permute.xlu0 1
  %505 = vperm.xlu0 %504, %v32
  %v506 = vpop.permute.xlu0 %505
  %508 = vset.pattern.permute.xlu0 1
  %509 = vperm.xlu0 %508, %v33
  %v510 = vpop.permute.xlu0 %509
  %512 = vset.pattern.permute.xlu0 1
  %513 = vperm.xlu0 %512, %v34
  %v514 = vpop.permute.xlu0 %513
  %516 = vset.pattern.permute.xlu0 1
  %517 = vperm.xlu0 %516, %v35
  %v518 = vpop.permute.xlu0 %517
  %520 = vset.pattern.permute.xlu0 1
  %521 = vperm.xlu0 %520, %v36
  %v522 = vpop.permute.xlu0 %521
  %524 = vset.pattern.permute.xlu0 1
  %525 = vperm.xlu0 %524, %v37
  %v526 = vpop.permute.xlu0 %525
  %528 = vset.pattern.permute.xlu0 1
  %529 = vperm.xlu0 %528, %v38
  %v530 = vpop.permute.xlu0 %529
  %532 = vset.pattern.permute.xlu0 1
  %533 = vperm.xlu0 %532, %v39
  %v534 = vpop.permute.xlu0 %533
  %536 = vset.pattern.permute.xlu0 1
  %537 = vperm.xlu0 %536, %v40
  %v538 = vpop.permute.xlu0 %537
  %540 = vset.pattern.permute.xlu0 1
  %541 = vperm.xlu0 %540, %v41
  %v542 = vpop.permute.xlu0 %541
  %544 = vset.pattern.permute.xlu0 1
  %545 = vperm.xlu0 %544, %v42
  %v546 = vpop.permute.xlu0 %545
  %548 = vset.pattern.permute.xlu0 1
  %549 = vperm.xlu0 %548, %v43
  %v550 = vpop.permute.xlu0 %549
  %552 = vset.pattern.permute.xlu0 1
  %553 = vperm.xlu0 %552, %v44
  %v554 = vpop.permute.xlu0 %553
  %556 = vset.pattern.permute.xlu0 1
  %557 = vperm.xlu0 %556, %v45
  %v558 = vpop.permute.xlu0 %557
  %560 = vset.pattern.permute.xlu0 1
  %561 = vperm.xlu0 %560, %v46
  %v562 = vpop.permute.xlu0 %561
  %564 = vset.pattern.permute.xlu0 1
  %565 = vperm.xlu0 %564, %v47
  %v566 = vpop.permute.xlu0 %565
  %568 = vset.pattern.permute.xlu0 1
  %569 = vperm.xlu0 %568, %v48
  %v570 = vpop.permute.xlu0 %569
  %572 = vset.pattern.permute.xlu0 1
  %573 = vperm.xlu0 %572, %v49
  %v574 = vpop.permute.xlu0 %573
  %576 = vset.pattern.permute.xlu0 1
  %577 = vperm.xlu0 %576, %v50
  %v578 = vpop.permute.xlu0 %577
  %580 = vset.pattern.permute.xlu0 1
  %581 = vperm.xlu0 %580, %v51
  %v582 = vpop.permute.xlu0 %581
  %584 = vset.pattern.permute.xlu0 1
  %585 = vperm.xlu0 %584, %v52
  %v586 = vpop.permute.xlu0 %585
  %588 = vset.pattern.permute.xlu0 1
  %589 = vperm.xlu0 %588, %v53
  %v590 = vpop.permute.xlu0 %589
  %592 = vset.pattern.permute.xlu0 1
  %593 = vperm.xlu0 %592, %v54
  %v594 = vpop.permute.xlu0 %593
  %596 = vset.pattern.permute.xlu0 1
  %597 = vperm.xlu0 %596, %v55
  %v598 = vpop.permute.xlu0 %597
  %600 = vset.pattern.permute.xlu0 1
  %601 = vperm.xlu0 %600, %v56
  %v602 = vpop.permute.xlu0 %601
  %604 = vset.pattern.permute.xlu0 1
  %605 = vperm.xlu0 %604, %v57
  %v606 = vpop.permute.xlu0 %605
  %608 = vset.pattern.permute.xlu0 1
  %609 = vperm.xlu0 %608, %v58
  %v610 = vpop.permute.xlu0 %609
  %612 = vset.pattern.permute.xlu0 1
  %613 = vperm.xlu0 %612, %v59
  %v614 = vpop.permute.xlu0 %613
  %616 = vset.pattern.permute.xlu0 1
  %617 = vperm.xlu0 %616, %v60
  %v618 = vpop.permute.xlu0 %617
  %620 = vset.pattern.permute.xlu0 1
  %621 = vperm.xlu0 %620, %v61
  %v622 = vpop.permute.xlu0 %621
  %624 = vset.pattern.permute.xlu0 1
  %625 = vperm.xlu0 %624, %v62
  %v626 = vpop.permute.xlu0 %625
  %628 = vset.pattern.permute.xlu0 1
  %629 = vperm.xlu0 %628, %v63
  %v630 = vpop.permute.xlu0 %629
  %632 = vset.pattern.permute.xlu0 1
  %633 = vperm.xlu0 %632, %v64
  %v634 = vpop.permute.xlu0 %633
  %636 = vset.pattern.permute.xlu0 1
  %637 = vperm.xlu0 %636, %v65
  %v638 = vpop.permute.xlu0 %637
  %640 = vset.pattern.permute.xlu0 1
  %641 = vperm.xlu0 %640, %v66
  %v642 = vpop.permute.xlu0 %641
  %644 = vset.pattern.permute.xlu0 1
  %645 = vperm.xlu0 %644, %v67
  %v646 = vpop.permute.xlu0 %645
  %648 = vset.pattern.permute.xlu0 1
  %649 = vperm.xlu0 %648, %v68
  %v650 = vpop.permute.xlu0 %649
  %652 = vset.pattern.permute.xlu0 1
  %653 = vperm.xlu0 %652, %v69
  %v654 = vpop.permute.xlu0 %653
  %656 = vset.pattern.permute.xlu0 1
  %657 = vperm.xlu0 %656, %v70
  %v658 = vpop.permute.xlu0 %657
  %660 = vset.pattern.permute.xlu0 1
  %661 = vperm.xlu0 %660, %v71
  %v662 = vpop.permute.xlu0 %661
  %664 = vset.pattern.permute.xlu0 1
  %665 = vperm.xlu0 %664, %v72
  %v666 = vpop.permute.xlu0 %665
  %668 = vset.pattern.permute.xlu0 1
  %669 = vperm.xlu0 %668, %v73
  %v670 = vpop.permute.xlu0 %669
  %672 = vset.pattern.permute.xlu0 1
  %673 = vperm.xlu0 %672, %v74
  %v674 = vpop.permute.xlu0 %673
  %676 = vset.pattern.permute.xlu0 1
  %677 = vperm.xlu0 %676, %v75
  %v678 = vpop.permute.xlu0 %677
  %680 = vset.pattern.permute.xlu0 1
  %681 = vperm.xlu0 %680, %v76
  %v682 = vpop.permute.xlu0 %681
  %684 = vset.pattern.permute.xlu0 1
  %685 = vperm.xlu0 %684, %v77
  %v686 = vpop.permute.xlu0 %685
  %688 = vset.pattern.permute.xlu0 1
  %689 = vperm.xlu0 %688, %v78
  %v690 = vpop.permute.xlu0 %689
  %692 = vset.pattern.permute.xlu0 1
  %693 = vperm.xlu0 %692, %v79
  %v694 = vpop.permute.xlu0 %693
  %696 = vset.pattern.permute.xlu0 1
  %697 = vperm.xlu0 %696, %v80
  %v698 = vpop.permute.xlu0 %697
  %700 = vset.pattern.permute.xlu0 1
  %701 = vperm.xlu0 %700, %v81
  %v702 = vpop.permute.xlu0 %701
  %704 = vset.pattern.permute.xlu0 1
  %705 = vperm.xlu0 %704, %v82
  %v706 = vpop.permute.xlu0 %705
  %708 = vset.pattern.permute.xlu0 1
  %709 = vperm.xlu0 %708, %v83
  %v710 = vpop.permute.xlu0 %709
  %712 = vset.pattern.permute.xlu0 1
  %713 = vperm.xlu0 %712, %v84
  %v714 = vpop.permute.xlu0 %713
  %716 = vset.pattern.permute.xlu0 1
  %717 = vperm.xlu0 %716, %v85
  %v718 = vpop.permute.xlu0 %717
  %720 = vset.pattern.permute.xlu0 1
  %721 = vperm.xlu0 %720, %v86
  %v722 = vpop.permute.xlu0 %721
  %724 = vset.pattern.permute.xlu0 1
  %725 = vperm.xlu0 %724, %v87
  %v726 = vpop.permute.xlu0 %725
  %728 = vset.pattern.permute.xlu0 1
  %729 = vperm.xlu0 %728, %v88
  %v730 = vpop.permute.xlu0 %729
  %732 = vset.pattern.permute.xlu0 1
  %733 = vperm.xlu0 %732, %v89
  %v734 = vpop.permute.xlu0 %733
  %v736 = vlaneseq
  %v737 = vshrl.u32 %v736, 7
  %v738 = vsub.s32 0, %v737
  %v739 = vrot.slane %v479, %v738
  %v740 = vmul.f32 %v482, %v739
  %v741 = vmul.f32 %v486, %v739
  %v742 = vmul.f32 %v490, %v739
  %v743 = vmul.f32 %v494, %v739
  %v744 = vmul.f32 %v498, %v739
  %v745 = vmul.f32 %v502, %v739
  %v746 = vmul.f32 %v506, %v739
  %v747 = vmul.f32 %v510, %v739
  %v748 = vmul.f32 %v514, %v739
  %v749 = vmul.f32 %v518, %v739
  %v750 = vmul.f32 %v522, %v739
  %v751 = vmul.f32 %v526, %v739
  %v752 = vmul.f32 %v530, %v739
  %v753 = vmul.f32 %v534, %v739
  %v754 = vmul.f32 %v538, %v739
  %v755 = vmul.f32 %v542, %v739
  %v756 = vmul.f32 %v546, %v739
  %v757 = vmul.f32 %v550, %v739
  %v758 = vmul.f32 %v554, %v739
  %v759 = vmul.f32 %v558, %v739
  %v760 = vmul.f32 %v562, %v739
  %v761 = vmul.f32 %v566, %v739
  %v762 = vmul.f32 %v570, %v739
  %v763 = vmul.f32 %v574, %v739
  %v764 = vmul.f32 %v578, %v739
  %v765 = vmul.f32 %v582, %v739
  %v766 = vmul.f32 %v586, %v739
  %v767 = vmul.f32 %v590, %v739
  %v768 = vmul.f32 %v594, %v739
  %v769 = vmul.f32 %v598, %v739
  %v770 = vmul.f32 %v602, %v739
  %v771 = vmul.f32 %v606, %v739
  %v772 = vmul.f32 %v610, %v739
  %v773 = vmul.f32 %v614, %v739
  %v774 = vmul.f32 %v618, %v739
  %v775 = vmul.f32 %v622, %v739
  %v776 = vmul.f32 %v626, %v739
  %v777 = vmul.f32 %v630, %v739
  %v778 = vmul.f32 %v634, %v739
  %v779 = vmul.f32 %v638, %v739
  %v780 = vmul.f32 %v642, %v739
  %v781 = vmul.f32 %v646, %v739
  %v782 = vmul.f32 %v650, %v739
  %v783 = vmul.f32 %v654, %v739
  %v784 = vmul.f32 %v658, %v739
  %v785 = vmul.f32 %v662, %v739
  %v786 = vmul.f32 %v666, %v739
  %v787 = vmul.f32 %v670, %v739
  %v788 = vmul.f32 %v674, %v739
  %v789 = vmul.f32 %v678, %v739
  %v790 = vmul.f32 %v682, %v739
  %v791 = vmul.f32 %v686, %v739
  %v792 = vmul.f32 %v690, %v739
  %v793 = vmul.f32 %v694, %v739
  %v794 = vmul.f32 %v698, %v739
  %v795 = vmul.f32 %v702, %v739
  %v796 = vmul.f32 %v706, %v739
  %v797 = vmul.f32 %v710, %v739
  %v798 = vmul.f32 %v714, %v739
  %v799 = vmul.f32 %v718, %v739
  %v800 = vmul.f32 %v722, %v739
  %v801 = vmul.f32 %v726, %v739
  %v802 = vmul.f32 %v730, %v739
  %v803 = vmul.f32 %v734, %v739
  %v804 = vadd.f32 %v415, %v740
  %v805 = vadd.f32 %v416, %v741
  %v806 = vadd.f32 %v417, %v742
  %v807 = vadd.f32 %v418, %v743
  %v808 = vadd.f32 %v419, %v744
  %v809 = vadd.f32 %v420, %v745
  %v810 = vadd.f32 %v421, %v746
  %v811 = vadd.f32 %v422, %v747
  %v812 = vadd.f32 %v423, %v748
  %v813 = vadd.f32 %v424, %v749
  %v814 = vadd.f32 %v425, %v750
  %v815 = vadd.f32 %v426, %v751
  %v816 = vadd.f32 %v427, %v752
  %v817 = vadd.f32 %v428, %v753
  %v818 = vadd.f32 %v429, %v754
  %v819 = vadd.f32 %v430, %v755
  %v820 = vadd.f32 %v431, %v756
  %v821 = vadd.f32 %v432, %v757
  %v822 = vadd.f32 %v433, %v758
  %v823 = vadd.f32 %v434, %v759
  %v824 = vadd.f32 %v435, %v760
  %v825 = vadd.f32 %v436, %v761
  %v826 = vadd.f32 %v437, %v762
  %v827 = vadd.f32 %v438, %v763
  %v828 = vadd.f32 %v439, %v764
  %v829 = vadd.f32 %v440, %v765
  %v830 = vadd.f32 %v441, %v766
  %v831 = vadd.f32 %v442, %v767
  %v832 = vadd.f32 %v443, %v768
  %v833 = vadd.f32 %v444, %v769
  %v834 = vadd.f32 %v445, %v770
  %v835 = vadd.f32 %v446, %v771
  %v836 = vadd.f32 %v447, %v772
  %v837 = vadd.f32 %v448, %v773
  %v838 = vadd.f32 %v449, %v774
  %v839 = vadd.f32 %v450, %v775
  %v840 = vadd.f32 %v451, %v776
  %v841 = vadd.f32 %v452, %v777
  %v842 = vadd.f32 %v453, %v778
  %v843 = vadd.f32 %v454, %v779
  %v844 = vadd.f32 %v455, %v780
  %v845 = vadd.f32 %v456, %v781
  %v846 = vadd.f32 %v457, %v782
  %v847 = vadd.f32 %v458, %v783
  %v848 = vadd.f32 %v459, %v784
  %v849 = vadd.f32 %v460, %v785
  %v850 = vadd.f32 %v461, %v786
  %v851 = vadd.f32 %v462, %v787
  %v852 = vadd.f32 %v463, %v788
  %v853 = vadd.f32 %v464, %v789
  %v854 = vadd.f32 %v465, %v790
  %v855 = vadd.f32 %v466, %v791
  %v856 = vadd.f32 %v467, %v792
  %v857 = vadd.f32 %v468, %v793
  %v858 = vadd.f32 %v469, %v794
  %v859 = vadd.f32 %v470, %v795
  %v860 = vadd.f32 %v471, %v796
  %v861 = vadd.f32 %v472, %v797
  %v862 = vadd.f32 %v473, %v798
  %v863 = vadd.f32 %v474, %v799
  %v864 = vadd.f32 %v475, %v800
  %v865 = vadd.f32 %v476, %v801
  %v866 = vadd.f32 %v477, %v802
  %v867 = vadd.f32 %v478, %v803
  %v868 = vld [vmem:[%s2] sm:$0x1]
  %v870 = vlaneseq
  %v871 = vshrl.u32 %v870, 7
  %v872 = vsub.s32 0, %v871
  %v873 = vrot.slane %v868, %v872
  %v875 = vadd.f32 %v804, %v873
  %v876 = vadd.f32 %v805, %v873
  %v877 = vadd.f32 %v806, %v873
  %v878 = vadd.f32 %v807, %v873
  %v879 = vadd.f32 %v808, %v873
  %v880 = vadd.f32 %v809, %v873
  %v881 = vadd.f32 %v810, %v873
  %v882 = vadd.f32 %v811, %v873
  %v883 = vadd.f32 %v812, %v873
  %v884 = vadd.f32 %v813, %v873
  %v885 = vadd.f32 %v814, %v873
  %v886 = vadd.f32 %v815, %v873
  %v887 = vadd.f32 %v816, %v873
  %v888 = vadd.f32 %v817, %v873
  %v889 = vadd.f32 %v818, %v873
  %v890 = vadd.f32 %v819, %v873
  %v891 = vadd.f32 %v820, %v873
  %v892 = vadd.f32 %v821, %v873
  %v893 = vadd.f32 %v822, %v873
  %v894 = vadd.f32 %v823, %v873
  %v895 = vadd.f32 %v824, %v873
  %v896 = vadd.f32 %v825, %v873
  %v897 = vadd.f32 %v826, %v873
  %v898 = vadd.f32 %v827, %v873
  %v899 = vadd.f32 %v828, %v873
  %v900 = vadd.f32 %v829, %v873
  %v901 = vadd.f32 %v830, %v873
  %v902 = vadd.f32 %v831, %v873
  %v903 = vadd.f32 %v832, %v873
  %v904 = vadd.f32 %v833, %v873
  %v905 = vadd.f32 %v834, %v873
  %v906 = vadd.f32 %v835, %v873
  %v907 = vadd.f32 %v836, %v873
  %v908 = vadd.f32 %v837, %v873
  %v909 = vadd.f32 %v838, %v873
  %v910 = vadd.f32 %v839, %v873
  %v911 = vadd.f32 %v840, %v873
  %v912 = vadd.f32 %v841, %v873
  %v913 = vadd.f32 %v842, %v873
  %v914 = vadd.f32 %v843, %v873
  %v915 = vadd.f32 %v844, %v873
  %v916 = vadd.f32 %v845, %v873
  %v917 = vadd.f32 %v846, %v873
  %v918 = vadd.f32 %v847, %v873
  %v919 = vadd.f32 %v848, %v873
  %v920 = vadd.f32 %v849, %v873
  %v921 = vadd.f32 %v850, %v873
  %v922 = vadd.f32 %v851, %v873
  %v923 = vadd.f32 %v852, %v873
  %v924 = vadd.f32 %v853, %v873
  %v925 = vadd.f32 %v854, %v873
  %v926 = vadd.f32 %v855, %v873
  %v927 = vadd.f32 %v856, %v873
  %v928 = vadd.f32 %v857, %v873
  %v929 = vadd.f32 %v858, %v873
  %v930 = vadd.f32 %v859, %v873
  %v931 = vadd.f32 %v860, %v873
  %v932 = vadd.f32 %v861, %v873
  %v933 = vadd.f32 %v862, %v873
  %v934 = vadd.f32 %v863, %v873
  %v935 = vadd.f32 %v864, %v873
  %v936 = vadd.f32 %v865, %v873
  %v937 = vadd.f32 %v866, %v873
  %v938 = vadd.f32 %v867, %v873
  %v939 = vtanh.pop %v875
  %v940 = vtanh.pop %v876
  %v941 = vtanh.pop %v877
  %v942 = vtanh.pop %v878
  %v943 = vtanh.pop %v879
  %v944 = vtanh.pop %v880
  %v945 = vtanh.pop %v881
  %v946 = vtanh.pop %v882
  %v947 = vtanh.pop %v883
  %v948 = vtanh.pop %v884
  %v949 = vtanh.pop %v885
  %v950 = vtanh.pop %v886
  %v951 = vtanh.pop %v887
  %v952 = vtanh.pop %v888
  %v953 = vtanh.pop %v889
  %v954 = vtanh.pop %v890
  %v955 = vtanh.pop %v891
  %v956 = vtanh.pop %v892
  %v957 = vtanh.pop %v893
  %v958 = vtanh.pop %v894
  %v959 = vtanh.pop %v895
  %v960 = vtanh.pop %v896
  %v961 = vtanh.pop %v897
  %v962 = vtanh.pop %v898
  %v963 = vtanh.pop %v899
  %v964 = vtanh.pop %v900
  %v965 = vtanh.pop %v901
  %v966 = vtanh.pop %v902
  %v967 = vtanh.pop %v903
  %v968 = vtanh.pop %v904
  %v969 = vtanh.pop %v905
  %v970 = vtanh.pop %v906
  %v971 = vtanh.pop %v907
  %v972 = vtanh.pop %v908
  %v973 = vtanh.pop %v909
  %v974 = vtanh.pop %v910
  %v975 = vtanh.pop %v911
  %v976 = vtanh.pop %v912
  %v977 = vtanh.pop %v913
  %v978 = vtanh.pop %v914
  %v979 = vtanh.pop %v915
  %v980 = vtanh.pop %v916
  %v981 = vtanh.pop %v917
  %v982 = vtanh.pop %v918
  %v983 = vtanh.pop %v919
  %v984 = vtanh.pop %v920
  %v985 = vtanh.pop %v921
  %v986 = vtanh.pop %v922
  %v987 = vtanh.pop %v923
  %v988 = vtanh.pop %v924
  %v989 = vtanh.pop %v925
  %v990 = vtanh.pop %v926
  %v991 = vtanh.pop %v927
  %v992 = vtanh.pop %v928
  %v993 = vtanh.pop %v929
  %v994 = vtanh.pop %v930
  %v995 = vtanh.pop %v931
  %v996 = vtanh.pop %v932
  %v997 = vtanh.pop %v933
  %v998 = vtanh.pop %v934
  %v999 = vtanh.pop %v935
  %v1000 = vtanh.pop %v936
  %v1001 = vtanh.pop %v937
  %v1002 = vtanh.pop %v938
  %v1003 = vld [vmem:[%s3] sm:$0xff]
  %v1004 = vld [vmem:[%s3 + $0x8] sm:$0xff]
  %v1005 = vld [vmem:[%s3 + $0x10] sm:$0xff]
  %v1006 = vld [vmem:[%s3 + $0x18] sm:$0xff]
  %v1007 = vld [vmem:[%s3 + $0x20] sm:$0xff]
  %v1008 = vld [vmem:[%s3 + $0x28] sm:$0xff]
  %v1009 = vld [vmem:[%s3 + $0x30] sm:$0x3]
  %v1010 = vld [vmem:[%s4] sm:$0x1]
  %v1012 = vlaneseq
  %v1013 = vshrl.u32 %v1012, 7
  %v1014 = vsub.s32 0, %v1013
  %v1015 = vrot.slane %v1010, %v1014
  %vm1017 = vcmask 408576
  %v1019 = vsel %vm1017, %v939, 0
  %v1022 = vsel %vm1017, %v940, 0
  %v1025 = vsel %vm1017, %v941, 0
  %v1028 = vsel %vm1017, %v942, 0
  %v1031 = vsel %vm1017, %v943, 0
  %v1034 = vsel %vm1017, %v944, 0
  %v1037 = vsel %vm1017, %v945, 0
  %v1040 = vsel %vm1017, %v946, 0
  %v1043 = vsel %vm1017, %v947, 0
  %v1046 = vsel %vm1017, %v948, 0
  %v1049 = vsel %vm1017, %v949, 0
  %v1052 = vsel %vm1017, %v950, 0
  %v1055 = vsel %vm1017, %v951, 0
  %v1058 = vsel %vm1017, %v952, 0
  %v1061 = vsel %vm1017, %v953, 0
  %v1064 = vsel %vm1017, %v954, 0
  %v1067 = vsel %vm1017, %v955, 0
  %v1070 = vsel %vm1017, %v956, 0
  %v1073 = vsel %vm1017, %v957, 0
  %v1076 = vsel %vm1017, %v958, 0
  %v1079 = vsel %vm1017, %v959, 0
  %v1082 = vsel %vm1017, %v960, 0
  %v1085 = vsel %vm1017, %v961, 0
  %v1088 = vsel %vm1017, %v962, 0
  %v1091 = vsel %vm1017, %v963, 0
  %v1094 = vsel %vm1017, %v964, 0
  %v1097 = vsel %vm1017, %v965, 0
  %v1100 = vsel %vm1017, %v966, 0
  %v1103 = vsel %vm1017, %v967, 0
  %v1106 = vsel %vm1017, %v968, 0
  %v1109 = vsel %vm1017, %v969, 0
  %v1112 = vsel %vm1017, %v970, 0
  %v1115 = vsel %vm1017, %v971, 0
  %v1118 = vsel %vm1017, %v972, 0
  %v1121 = vsel %vm1017, %v973, 0
  %v1124 = vsel %vm1017, %v974, 0
  %v1127 = vsel %vm1017, %v975, 0
  %v1130 = vsel %vm1017, %v976, 0
  %v1133 = vsel %vm1017, %v977, 0
  %v1136 = vsel %vm1017, %v978, 0
  %v1139 = vsel %vm1017, %v979, 0
  %v1142 = vsel %vm1017, %v980, 0
  %v1145 = vsel %vm1017, %v981, 0
  %v1148 = vsel %vm1017, %v982, 0
  %v1151 = vsel %vm1017, %v983, 0
  %v1154 = vsel %vm1017, %v984, 0
  %v1157 = vsel %vm1017, %v985, 0
  %v1160 = vsel %vm1017, %v986, 0
  %v1163 = vsel %vm1017, %v987, 0
  %v1166 = vsel %vm1017, %v988, 0
  %v1169 = vsel %vm1017, %v989, 0
  %v1172 = vsel %vm1017, %v990, 0
  %v1175 = vsel %vm1017, %v991, 0
  %v1178 = vsel %vm1017, %v992, 0
  %v1181 = vsel %vm1017, %v993, 0
  %v1184 = vsel %vm1017, %v994, 0
  %v1187 = vsel %vm1017, %v995, 0
  %v1190 = vsel %vm1017, %v996, 0
  %v1193 = vsel %vm1017, %v997, 0
  %v1196 = vsel %vm1017, %v998, 0
  %v1199 = vsel %vm1017, %v999, 0
  %v1202 = vsel %vm1017, %v1000, 0
  %v1205 = vsel %vm1017, %v1001, 0
  %v1208 = vsel %vm1017, %v1002, 0
  %vm1210 = vcmask 1041408
  %v1212 = vsel %vm1210, %v1009, 0
  %1214 = vmatprep.subr.mxu0 0.0
  %1215 = vmatpush1.msra.mxu0 0.0
  %1216 = vmatprep.subr.mxu0 0.0
  %1217 = vmatpush1.msra.mxu0 0.0
  %1218 = vmatprep.subr.mxu0 0.0
  %1219 = vmatpush1.msra.mxu0 0.0
  %1220 = vmatprep.subr.mxu0 0.0
  %1221 = vmatpush1.msra.mxu0 0.0
  %1222 = vmatprep.subr.mxu0 0.0
  %1223 = vmatpush1.msra.mxu0 0.0
  %1224 = vmatprep.subr.mxu0 0.0
  %1225 = vmatpush1.msra.mxu0 0.0
  %1226 = vmatprep.subr.mxu0 0.0
  %1227 = vmatpush1.msra.mxu0 0.0
  %1228 = vmatprep.subr.mxu0 0.0
  %1229 = vmatpush1.msra.mxu0 0.0
  %1230 = vmatprep.subr.mxu0 0.0
  %1231 = vmatpush1.msra.mxu0 0.0
  %1232 = vmatprep.subr.mxu0 0.0
  %1233 = vmatpush1.msra.mxu0 %v1212
  %1234 = vmatprep.subr.mxu0 0.0
  %1235 = vmatpush1.msra.mxu0 %v1008
  %1236 = vmatprep.subr.mxu0 0.0
  %1237 = vmatpush1.msra.mxu0 %v1007
  %1238 = vmatprep.subr.mxu0 0.0
  %1239 = vmatpush1.msra.mxu0 %v1006
  %1240 = vmatprep.subr.mxu0 0.0
  %1241 = vmatpush1.msra.mxu0 %v1005
  %1242 = vmatprep.subr.mxu0 0.0
  %1243 = vmatpush1.msra.mxu0 %v1004
  %1244 = vmatprep.subr.mxu0 0.0
  %1245 = vmatpush1.msra.mxu0 %v1003
  %1246 = vmatprep.subr.mxu0 0.0
  %1247 = vmatpush2.msra.mxu0 0.0
  %1248 = vmatprep.subr.mxu0 0.0
  %1249 = vmatpush2.msra.mxu0 0.0
  %1250 = vmatprep.subr.mxu0 0.0
  %1251 = vmatpush2.msra.mxu0 0.0
  %1252 = vmatprep.subr.mxu0 0.0
  %1253 = vmatpush2.msra.mxu0 0.0
  %1254 = vmatprep.subr.mxu0 0.0
  %1255 = vmatpush2.msra.mxu0 0.0
  %1256 = vmatprep.subr.mxu0 0.0
  %1257 = vmatpush2.msra.mxu0 0.0
  %1258 = vmatprep.subr.mxu0 0.0
  %1259 = vmatpush2.msra.mxu0 0.0
  %1260 = vmatprep.subr.mxu0 0.0
  %1261 = vmatpush2.msra.mxu0 0.0
  %1262 = vmatprep.subr.mxu0 0.0
  %1263 = vmatpush2.msra.mxu0 0.0
  %1264 = vmatprep.subr.mxu0 0.0
  %1265 = vmatpush2.msra.mxu0 0.0
  %1266 = vmatprep.subr.mxu0 0.0
  %1267 = vmatpush2.msra.mxu0 0.0
  %1268 = vmatprep.subr.mxu0 0.0
  %1269 = vmatpush2.msra.mxu0 0.0
  %1270 = vmatprep.subr.mxu0 0.0
  %1271 = vmatpush2.msra.mxu0 0.0
  %1272 = vmatprep.subr.mxu0 0.0
  %1273 = vmatpush2.msra.mxu0 0.0
  %1274 = vmatprep.subr.mxu0 0.0
  %1275 = vmatpush2.msra.mxu0 0.0
  %1276 = vmatprep.subr.mxu0 0.0
  %1277 = vmatpush2.msra.mxu0 0.0
  %1278 = vmatprep.mubr.f32.mxu0 0.0
  %1279 = vmatmul.mubr.f32.gmra.mxu0 %v1019
  %v1280 = vpop.f32.mrf.mxu0
  %v1281 = vadd.f32 %v1015, %v1280
  %v1282 = vpop.f32.mrf.mxu0
  %1283 = vmatprep.mubr.f32.mxu0 0.0
  %1284 = vmatmul.mubr.f32.gmra.mxu0 %v1022
  %v1285 = vpop.f32.mrf.mxu0
  %v1286 = vadd.f32 %v1015, %v1285
  %v1287 = vpop.f32.mrf.mxu0
  %1288 = vmatprep.mubr.f32.mxu0 0.0
  %1289 = vmatmul.mubr.f32.gmra.mxu0 %v1025
  %v1290 = vpop.f32.mrf.mxu0
  %v1291 = vadd.f32 %v1015, %v1290
  %v1292 = vpop.f32.mrf.mxu0
  %1293 = vmatprep.mubr.f32.mxu0 0.0
  %1294 = vmatmul.mubr.f32.gmra.mxu0 %v1028
  %v1295 = vpop.f32.mrf.mxu0
  %v1296 = vadd.f32 %v1015, %v1295
  %v1297 = vpop.f32.mrf.mxu0
  %1298 = vmatprep.mubr.f32.mxu0 0.0
  %1299 = vmatmul.mubr.f32.gmra.mxu0 %v1031
  %v1300 = vpop.f32.mrf.mxu0
  %v1301 = vadd.f32 %v1015, %v1300
  %v1302 = vpop.f32.mrf.mxu0
  %1303 = vmatprep.mubr.f32.mxu0 0.0
  %1304 = vmatmul.mubr.f32.gmra.mxu0 %v1034
  %v1305 = vpop.f32.mrf.mxu0
  %v1306 = vadd.f32 %v1015, %v1305
  %v1307 = vpop.f32.mrf.mxu0
  %1308 = vmatprep.mubr.f32.mxu0 0.0
  %1309 = vmatmul.mubr.f32.gmra.mxu0 %v1037
  %v1310 = vpop.f32.mrf.mxu0
  %v1311 = vadd.f32 %v1015, %v1310
  %v1312 = vpop.f32.mrf.mxu0
  %1313 = vmatprep.mubr.f32.mxu0 0.0
  %1314 = vmatmul.mubr.f32.gmra.mxu0 %v1040
  %v1315 = vpop.f32.mrf.mxu0
  %v1316 = vadd.f32 %v1015, %v1315
  %v1317 = vpop.f32.mrf.mxu0
  %1318 = vmatprep.mubr.f32.mxu0 0.0
  %1319 = vmatmul.mubr.f32.gmra.mxu0 %v1043
  %v1320 = vpop.f32.mrf.mxu0
  %v1321 = vadd.f32 %v1015, %v1320
  %v1322 = vpop.f32.mrf.mxu0
  %1323 = vmatprep.mubr.f32.mxu0 0.0
  %1324 = vmatmul.mubr.f32.gmra.mxu0 %v1046
  %v1325 = vpop.f32.mrf.mxu0
  %v1326 = vadd.f32 %v1015, %v1325
  %v1327 = vpop.f32.mrf.mxu0
  %1328 = vmatprep.mubr.f32.mxu0 0.0
  %1329 = vmatmul.mubr.f32.gmra.mxu0 %v1049
  %v1330 = vpop.f32.mrf.mxu0
  %v1331 = vadd.f32 %v1015, %v1330
  %v1332 = vpop.f32.mrf.mxu0
  %1333 = vmatprep.mubr.f32.mxu0 0.0
  %1334 = vmatmul.mubr.f32.gmra.mxu0 %v1052
  %v1335 = vpop.f32.mrf.mxu0
  %v1336 = vadd.f32 %v1015, %v1335
  %v1337 = vpop.f32.mrf.mxu0
  %1338 = vmatprep.mubr.f32.mxu0 0.0
  %1339 = vmatmul.mubr.f32.gmra.mxu0 %v1055
  %v1340 = vpop.f32.mrf.mxu0
  %v1341 = vadd.f32 %v1015, %v1340
  %v1342 = vpop.f32.mrf.mxu0
  %1343 = vmatprep.mubr.f32.mxu0 0.0
  %1344 = vmatmul.mubr.f32.gmra.mxu0 %v1058
  %v1345 = vpop.f32.mrf.mxu0
  %v1346 = vadd.f32 %v1015, %v1345
  %v1347 = vpop.f32.mrf.mxu0
  %1348 = vmatprep.mubr.f32.mxu0 0.0
  %1349 = vmatmul.mubr.f32.gmra.mxu0 %v1061
  %v1350 = vpop.f32.mrf.mxu0
  %v1351 = vadd.f32 %v1015, %v1350
  %v1352 = vpop.f32.mrf.mxu0
  %1353 = vmatprep.mubr.f32.mxu0 0.0
  %1354 = vmatmul.mubr.f32.gmra.mxu0 %v1064
  %v1355 = vpop.f32.mrf.mxu0
  %v1356 = vadd.f32 %v1015, %v1355
  %v1357 = vpop.f32.mrf.mxu0
  %1358 = vmatprep.mubr.f32.mxu0 0.0
  %1359 = vmatmul.mubr.f32.gmra.mxu0 %v1067
  %v1360 = vpop.f32.mrf.mxu0
  %v1361 = vadd.f32 %v1015, %v1360
  %v1362 = vpop.f32.mrf.mxu0
  %1363 = vmatprep.mubr.f32.mxu0 0.0
  %1364 = vmatmul.mubr.f32.gmra.mxu0 %v1070
  %v1365 = vpop.f32.mrf.mxu0
  %v1366 = vadd.f32 %v1015, %v1365
  %v1367 = vpop.f32.mrf.mxu0
  %1368 = vmatprep.mubr.f32.mxu0 0.0
  %1369 = vmatmul.mubr.f32.gmra.mxu0 %v1073
  %v1370 = vpop.f32.mrf.mxu0
  %v1371 = vadd.f32 %v1015, %v1370
  %v1372 = vpop.f32.mrf.mxu0
  %1373 = vmatprep.mubr.f32.mxu0 0.0
  %1374 = vmatmul.mubr.f32.gmra.mxu0 %v1076
  %v1375 = vpop.f32.mrf.mxu0
  %v1376 = vadd.f32 %v1015, %v1375
  %v1377 = vpop.f32.mrf.mxu0
  %1378 = vmatprep.mubr.f32.mxu0 0.0
  %1379 = vmatmul.mubr.f32.gmra.mxu0 %v1079
  %v1380 = vpop.f32.mrf.mxu0
  %v1381 = vadd.f32 %v1015, %v1380
  %v1382 = vpop.f32.mrf.mxu0
  %1383 = vmatprep.mubr.f32.mxu0 0.0
  %1384 = vmatmul.mubr.f32.gmra.mxu0 %v1082
  %v1385 = vpop.f32.mrf.mxu0
  %v1386 = vadd.f32 %v1015, %v1385
  %v1387 = vpop.f32.mrf.mxu0
  %1388 = vmatprep.mubr.f32.mxu0 0.0
  %1389 = vmatmul.mubr.f32.gmra.mxu0 %v1085
  %v1390 = vpop.f32.mrf.mxu0
  %v1391 = vadd.f32 %v1015, %v1390
  %v1392 = vpop.f32.mrf.mxu0
  %1393 = vmatprep.mubr.f32.mxu0 0.0
  %1394 = vmatmul.mubr.f32.gmra.mxu0 %v1088
  %v1395 = vpop.f32.mrf.mxu0
  %v1396 = vadd.f32 %v1015, %v1395
  %v1397 = vpop.f32.mrf.mxu0
  %1398 = vmatprep.mubr.f32.mxu0 0.0
  %1399 = vmatmul.mubr.f32.gmra.mxu0 %v1091
  %v1400 = vpop.f32.mrf.mxu0
  %v1401 = vadd.f32 %v1015, %v1400
  %v1402 = vpop.f32.mrf.mxu0
  %1403 = vmatprep.mubr.f32.mxu0 0.0
  %1404 = vmatmul.mubr.f32.gmra.mxu0 %v1094
  %v1405 = vpop.f32.mrf.mxu0
  %v1406 = vadd.f32 %v1015, %v1405
  %v1407 = vpop.f32.mrf.mxu0
  %1408 = vmatprep.mubr.f32.mxu0 0.0
  %1409 = vmatmul.mubr.f32.gmra.mxu0 %v1097
  %v1410 = vpop.f32.mrf.mxu0
  %v1411 = vadd.f32 %v1015, %v1410
  %v1412 = vpop.f32.mrf.mxu0
  %1413 = vmatprep.mubr.f32.mxu0 0.0
  %1414 = vmatmul.mubr.f32.gmra.mxu0 %v1100
  %v1415 = vpop.f32.mrf.mxu0
  %v1416 = vadd.f32 %v1015, %v1415
  %v1417 = vpop.f32.mrf.mxu0
  %1418 = vmatprep.mubr.f32.mxu0 0.0
  %1419 = vmatmul.mubr.f32.gmra.mxu0 %v1103
  %v1420 = vpop.f32.mrf.mxu0
  %v1421 = vadd.f32 %v1015, %v1420
  %v1422 = vpop.f32.mrf.mxu0
  %1423 = vmatprep.mubr.f32.mxu0 0.0
  %1424 = vmatmul.mubr.f32.gmra.mxu0 %v1106
  %v1425 = vpop.f32.mrf.mxu0
  %v1426 = vadd.f32 %v1015, %v1425
  %v1427 = vpop.f32.mrf.mxu0
  %1428 = vmatprep.mubr.f32.mxu0 0.0
  %1429 = vmatmul.mubr.f32.gmra.mxu0 %v1109
  %v1430 = vpop.f32.mrf.mxu0
  %v1431 = vadd.f32 %v1015, %v1430
  %v1432 = vpop.f32.mrf.mxu0
  %1433 = vmatprep.mubr.f32.mxu0 0.0
  %1434 = vmatmul.mubr.f32.gmra.mxu0 %v1112
  %v1435 = vpop.f32.mrf.mxu0
  %v1436 = vadd.f32 %v1015, %v1435
  %v1437 = vpop.f32.mrf.mxu0
  %1438 = vmatprep.mubr.f32.mxu0 0.0
  %1439 = vmatmul.mubr.f32.gmra.mxu0 %v1115
  %v1440 = vpop.f32.mrf.mxu0
  %v1441 = vadd.f32 %v1015, %v1440
  %v1442 = vpop.f32.mrf.mxu0
  %1443 = vmatprep.mubr.f32.mxu0 0.0
  %1444 = vmatmul.mubr.f32.gmra.mxu0 %v1118
  %v1445 = vpop.f32.mrf.mxu0
  %v1446 = vadd.f32 %v1015, %v1445
  %v1447 = vpop.f32.mrf.mxu0
  %1448 = vmatprep.mubr.f32.mxu0 0.0
  %1449 = vmatmul.mubr.f32.gmra.mxu0 %v1121
  %v1450 = vpop.f32.mrf.mxu0
  %v1451 = vadd.f32 %v1015, %v1450
  %v1452 = vpop.f32.mrf.mxu0
  %1453 = vmatprep.mubr.f32.mxu0 0.0
  %1454 = vmatmul.mubr.f32.gmra.mxu0 %v1124
  %v1455 = vpop.f32.mrf.mxu0
  %v1456 = vadd.f32 %v1015, %v1455
  %v1457 = vpop.f32.mrf.mxu0
  %1458 = vmatprep.mubr.f32.mxu0 0.0
  %1459 = vmatmul.mubr.f32.gmra.mxu0 %v1127
  %v1460 = vpop.f32.mrf.mxu0
  %v1461 = vadd.f32 %v1015, %v1460
  %v1462 = vpop.f32.mrf.mxu0
  %1463 = vmatprep.mubr.f32.mxu0 0.0
  %1464 = vmatmul.mubr.f32.gmra.mxu0 %v1130
  %v1465 = vpop.f32.mrf.mxu0
  %v1466 = vadd.f32 %v1015, %v1465
  %v1467 = vpop.f32.mrf.mxu0
  %1468 = vmatprep.mubr.f32.mxu0 0.0
  %1469 = vmatmul.mubr.f32.gmra.mxu0 %v1133
  %v1470 = vpop.f32.mrf.mxu0
  %v1471 = vadd.f32 %v1015, %v1470
  %v1472 = vpop.f32.mrf.mxu0
  %1473 = vmatprep.mubr.f32.mxu0 0.0
  %1474 = vmatmul.mubr.f32.gmra.mxu0 %v1136
  %v1475 = vpop.f32.mrf.mxu0
  %v1476 = vadd.f32 %v1015, %v1475
  %v1477 = vpop.f32.mrf.mxu0
  %1478 = vmatprep.mubr.f32.mxu0 0.0
  %1479 = vmatmul.mubr.f32.gmra.mxu0 %v1139
  %v1480 = vpop.f32.mrf.mxu0
  %v1481 = vadd.f32 %v1015, %v1480
  %v1482 = vpop.f32.mrf.mxu0
  %1483 = vmatprep.mubr.f32.mxu0 0.0
  %1484 = vmatmul.mubr.f32.gmra.mxu0 %v1142
  %v1485 = vpop.f32.mrf.mxu0
  %v1486 = vadd.f32 %v1015, %v1485
  %v1487 = vpop.f32.mrf.mxu0
  %1488 = vmatprep.mubr.f32.mxu0 0.0
  %1489 = vmatmul.mubr.f32.gmra.mxu0 %v1145
  %v1490 = vpop.f32.mrf.mxu0
  %v1491 = vadd.f32 %v1015, %v1490
  %v1492 = vpop.f32.mrf.mxu0
  %1493 = vmatprep.mubr.f32.mxu0 0.0
  %1494 = vmatmul.mubr.f32.gmra.mxu0 %v1148
  %v1495 = vpop.f32.mrf.mxu0
  %v1496 = vadd.f32 %v1015, %v1495
  %v1497 = vpop.f32.mrf.mxu0
  %1498 = vmatprep.mubr.f32.mxu0 0.0
  %1499 = vmatmul.mubr.f32.gmra.mxu0 %v1151
  %v1500 = vpop.f32.mrf.mxu0
  %v1501 = vadd.f32 %v1015, %v1500
  %v1502 = vpop.f32.mrf.mxu0
  %1503 = vmatprep.mubr.f32.mxu0 0.0
  %1504 = vmatmul.mubr.f32.gmra.mxu0 %v1154
  %v1505 = vpop.f32.mrf.mxu0
  %v1506 = vadd.f32 %v1015, %v1505
  %v1507 = vpop.f32.mrf.mxu0
  %1508 = vmatprep.mubr.f32.mxu0 0.0
  %1509 = vmatmul.mubr.f32.gmra.mxu0 %v1157
  %v1510 = vpop.f32.mrf.mxu0
  %v1511 = vadd.f32 %v1015, %v1510
  %v1512 = vpop.f32.mrf.mxu0
  %1513 = vmatprep.mubr.f32.mxu0 0.0
  %1514 = vmatmul.mubr.f32.gmra.mxu0 %v1160
  %v1515 = vpop.f32.mrf.mxu0
  %v1516 = vadd.f32 %v1015, %v1515
  %v1517 = vpop.f32.mrf.mxu0
  %1518 = vmatprep.mubr.f32.mxu0 0.0
  %1519 = vmatmul.mubr.f32.gmra.mxu0 %v1163
  %v1520 = vpop.f32.mrf.mxu0
  %v1521 = vadd.f32 %v1015, %v1520
  %v1522 = vpop.f32.mrf.mxu0
  %1523 = vmatprep.mubr.f32.mxu0 0.0
  %1524 = vmatmul.mubr.f32.gmra.mxu0 %v1166
  %v1525 = vpop.f32.mrf.mxu0
  %v1526 = vadd.f32 %v1015, %v1525
  %v1527 = vpop.f32.mrf.mxu0
  %1528 = vmatprep.mubr.f32.mxu0 0.0
  %1529 = vmatmul.mubr.f32.gmra.mxu0 %v1169
  %v1530 = vpop.f32.mrf.mxu0
  %v1531 = vadd.f32 %v1015, %v1530
  %v1532 = vpop.f32.mrf.mxu0
  %1533 = vmatprep.mubr.f32.mxu0 0.0
  %1534 = vmatmul.mubr.f32.gmra.mxu0 %v1172
  %v1535 = vpop.f32.mrf.mxu0
  %v1536 = vadd.f32 %v1015, %v1535
  %v1537 = vpop.f32.mrf.mxu0
  %1538 = vmatprep.mubr.f32.mxu0 0.0
  %1539 = vmatmul.mubr.f32.gmra.mxu0 %v1175
  %v1540 = vpop.f32.mrf.mxu0
  %v1541 = vadd.f32 %v1015, %v1540
  %v1542 = vpop.f32.mrf.mxu0
  %1543 = vmatprep.mubr.f32.mxu0 0.0
  %1544 = vmatmul.mubr.f32.gmra.mxu0 %v1178
  %v1545 = vpop.f32.mrf.mxu0
  %v1546 = vadd.f32 %v1015, %v1545
  %v1547 = vpop.f32.mrf.mxu0
  %1548 = vmatprep.mubr.f32.mxu0 0.0
  %1549 = vmatmul.mubr.f32.gmra.mxu0 %v1181
  %v1550 = vpop.f32.mrf.mxu0
  %v1551 = vadd.f32 %v1015, %v1550
  %v1552 = vpop.f32.mrf.mxu0
  %1553 = vmatprep.mubr.f32.mxu0 0.0
  %1554 = vmatmul.mubr.f32.gmra.mxu0 %v1184
  %v1555 = vpop.f32.mrf.mxu0
  %v1556 = vadd.f32 %v1015, %v1555
  %v1557 = vpop.f32.mrf.mxu0
  %1558 = vmatprep.mubr.f32.mxu0 0.0
  %1559 = vmatmul.mubr.f32.gmra.mxu0 %v1187
  %v1560 = vpop.f32.mrf.mxu0
  %v1561 = vadd.f32 %v1015, %v1560
  %v1562 = vpop.f32.mrf.mxu0
  %1563 = vmatprep.mubr.f32.mxu0 0.0
  %1564 = vmatmul.mubr.f32.gmra.mxu0 %v1190
  %v1565 = vpop.f32.mrf.mxu0
  %v1566 = vadd.f32 %v1015, %v1565
  %v1567 = vpop.f32.mrf.mxu0
  %1568 = vmatprep.mubr.f32.mxu0 0.0
  %1569 = vmatmul.mubr.f32.gmra.mxu0 %v1193
  %v1570 = vpop.f32.mrf.mxu0
  %v1571 = vadd.f32 %v1015, %v1570
  %v1572 = vpop.f32.mrf.mxu0
  %1573 = vmatprep.mubr.f32.mxu0 0.0
  %1574 = vmatmul.mubr.f32.gmra.mxu0 %v1196
  %v1575 = vpop.f32.mrf.mxu0
  %v1576 = vadd.f32 %v1015, %v1575
  %v1577 = vpop.f32.mrf.mxu0
  %1578 = vmatprep.mubr.f32.mxu0 0.0
  %1579 = vmatmul.mubr.f32.gmra.mxu0 %v1199
  %v1580 = vpop.f32.mrf.mxu0
  %v1581 = vadd.f32 %v1015, %v1580
  %v1582 = vpop.f32.mrf.mxu0
  %1583 = vmatprep.mubr.f32.mxu0 0.0
  %1584 = vmatmul.mubr.f32.gmra.mxu0 %v1202
  %v1585 = vpop.f32.mrf.mxu0
  %v1586 = vadd.f32 %v1015, %v1585
  %v1587 = vpop.f32.mrf.mxu0
  %1588 = vmatprep.mubr.f32.mxu0 0.0
  %1589 = vmatmul.mubr.f32.gmra.mxu0 %v1205
  %v1590 = vpop.f32.mrf.mxu0
  %v1591 = vadd.f32 %v1015, %v1590
  %v1592 = vpop.f32.mrf.mxu0
  %1593 = vmatprep.mubr.f32.mxu0 0.0
  %1594 = vmatmul.mubr.f32.gmra.mxu0 %v1208
  %v1595 = vpop.f32.mrf.mxu0
  %v1596 = vadd.f32 %v1015, %v1595
  %v1597 = vpop.f32.mrf.mxu0
  %1598 = vdwg.mxu0
  %v1599 = vtanh.pop %v1281
  %v1600 = vtanh.pop %v1286
  %v1601 = vtanh.pop %v1291
  %v1602 = vtanh.pop %v1296
  %v1603 = vtanh.pop %v1301
  %v1604 = vtanh.pop %v1306
  %v1605 = vtanh.pop %v1311
  %v1606 = vtanh.pop %v1316
  %v1607 = vtanh.pop %v1321
  %v1608 = vtanh.pop %v1326
  %v1609 = vtanh.pop %v1331
  %v1610 = vtanh.pop %v1336
  %v1611 = vtanh.pop %v1341
  %v1612 = vtanh.pop %v1346
  %v1613 = vtanh.pop %v1351
  %v1614 = vtanh.pop %v1356
  %v1615 = vtanh.pop %v1361
  %v1616 = vtanh.pop %v1366
  %v1617 = vtanh.pop %v1371
  %v1618 = vtanh.pop %v1376
  %v1619 = vtanh.pop %v1381
  %v1620 = vtanh.pop %v1386
  %v1621 = vtanh.pop %v1391
  %v1622 = vtanh.pop %v1396
  %v1623 = vtanh.pop %v1401
  %v1624 = vtanh.pop %v1406
  %v1625 = vtanh.pop %v1411
  %v1626 = vtanh.pop %v1416
  %v1627 = vtanh.pop %v1421
  %v1628 = vtanh.pop %v1426
  %v1629 = vtanh.pop %v1431
  %v1630 = vtanh.pop %v1436
  %v1631 = vtanh.pop %v1441
  %v1632 = vtanh.pop %v1446
  %v1633 = vtanh.pop %v1451
  %v1634 = vtanh.pop %v1456
  %v1635 = vtanh.pop %v1461
  %v1636 = vtanh.pop %v1466
  %v1637 = vtanh.pop %v1471
  %v1638 = vtanh.pop %v1476
  %v1639 = vtanh.pop %v1481
  %v1640 = vtanh.pop %v1486
  %v1641 = vtanh.pop %v1491
  %v1642 = vtanh.pop %v1496
  %v1643 = vtanh.pop %v1501
  %v1644 = vtanh.pop %v1506
  %v1645 = vtanh.pop %v1511
  %v1646 = vtanh.pop %v1516
  %v1647 = vtanh.pop %v1521
  %v1648 = vtanh.pop %v1526
  %v1649 = vtanh.pop %v1531
  %v1650 = vtanh.pop %v1536
  %v1651 = vtanh.pop %v1541
  %v1652 = vtanh.pop %v1546
  %v1653 = vtanh.pop %v1551
  %v1654 = vtanh.pop %v1556
  %v1655 = vtanh.pop %v1561
  %v1656 = vtanh.pop %v1566
  %v1657 = vtanh.pop %v1571
  %v1658 = vtanh.pop %v1576
  %v1659 = vtanh.pop %v1581
  %v1660 = vtanh.pop %v1586
  %v1661 = vtanh.pop %v1591
  %v1662 = vtanh.pop %v1596
  %s1663 = scalar_lea.vmem %s3, 56
  %v1664 = vld [vmem:[%s1663] sm:$0xff]
  %v1665 = vld [vmem:[%s1663 + $0x8] sm:$0xff]
  %v1666 = vld [vmem:[%s1663 + $0x10] sm:$0xff]
  %v1667 = vld [vmem:[%s1663 + $0x18] sm:$0xff]
  %v1668 = vld [vmem:[%s1663 + $0x20] sm:$0xff]
  %v1669 = vld [vmem:[%s1663 + $0x28] sm:$0xff]
  %v1670 = vld [vmem:[%s1663 + $0x30] sm:$0x3]
  %s1671 = scalar_lea.vmem %s4, 1
  %v1672 = vld [vmem:[%s1671] sm:$0x1]
  %v1674 = vlaneseq
  %v1675 = vshrl.u32 %v1674, 7
  %v1676 = vsub.s32 0, %v1675
  %v1677 = vrot.slane %v1672, %v1676
  %v1680 = vsel %vm1017, %v1599, 0
  %v1683 = vsel %vm1017, %v1600, 0
  %v1686 = vsel %vm1017, %v1601, 0
  %v1689 = vsel %vm1017, %v1602, 0
  %v1692 = vsel %vm1017, %v1603, 0
  %v1695 = vsel %vm1017, %v1604, 0
  %v1698 = vsel %vm1017, %v1605, 0
  %v1701 = vsel %vm1017, %v1606, 0
  %v1704 = vsel %vm1017, %v1607, 0
  %v1707 = vsel %vm1017, %v1608, 0
  %v1710 = vsel %vm1017, %v1609, 0
  %v1713 = vsel %vm1017, %v1610, 0
  %v1716 = vsel %vm1017, %v1611, 0
  %v1719 = vsel %vm1017, %v1612, 0
  %v1722 = vsel %vm1017, %v1613, 0
  %v1725 = vsel %vm1017, %v1614, 0
  %v1728 = vsel %vm1017, %v1615, 0
  %v1731 = vsel %vm1017, %v1616, 0
  %v1734 = vsel %vm1017, %v1617, 0
  %v1737 = vsel %vm1017, %v1618, 0
  %v1740 = vsel %vm1017, %v1619, 0
  %v1743 = vsel %vm1017, %v1620, 0
  %v1746 = vsel %vm1017, %v1621, 0
  %v1749 = vsel %vm1017, %v1622, 0
  %v1752 = vsel %vm1017, %v1623, 0
  %v1755 = vsel %vm1017, %v1624, 0
  %v1758 = vsel %vm1017, %v1625, 0
  %v1761 = vsel %vm1017, %v1626, 0
  %v1764 = vsel %vm1017, %v1627, 0
  %v1767 = vsel %vm1017, %v1628, 0
  %v1770 = vsel %vm1017, %v1629, 0
  %v1773 = vsel %vm1017, %v1630, 0
  %v1776 = vsel %vm1017, %v1631, 0
  %v1779 = vsel %vm1017, %v1632, 0
  %v1782 = vsel %vm1017, %v1633, 0
  %v1785 = vsel %vm1017, %v1634, 0
  %v1788 = vsel %vm1017, %v1635, 0
  %v1791 = vsel %vm1017, %v1636, 0
  %v1794 = vsel %vm1017, %v1637, 0
  %v1797 = vsel %vm1017, %v1638, 0
  %v1800 = vsel %vm1017, %v1639, 0
  %v1803 = vsel %vm1017, %v1640, 0
  %v1806 = vsel %vm1017, %v1641, 0
  %v1809 = vsel %vm1017, %v1642, 0
  %v1812 = vsel %vm1017, %v1643, 0
  %v1815 = vsel %vm1017, %v1644, 0
  %v1818 = vsel %vm1017, %v1645, 0
  %v1821 = vsel %vm1017, %v1646, 0
  %v1824 = vsel %vm1017, %v1647, 0
  %v1827 = vsel %vm1017, %v1648, 0
  %v1830 = vsel %vm1017, %v1649, 0
  %v1833 = vsel %vm1017, %v1650, 0
  %v1836 = vsel %vm1017, %v1651, 0
  %v1839 = vsel %vm1017, %v1652, 0
  %v1842 = vsel %vm1017, %v1653, 0
  %v1845 = vsel %vm1017, %v1654, 0
  %v1848 = vsel %vm1017, %v1655, 0
  %v1851 = vsel %vm1017, %v1656, 0
  %v1854 = vsel %vm1017, %v1657, 0
  %v1857 = vsel %vm1017, %v1658, 0
  %v1860 = vsel %vm1017, %v1659, 0
  %v1863 = vsel %vm1017, %v1660, 0
  %v1866 = vsel %vm1017, %v1661, 0
  %v1869 = vsel %vm1017, %v1662, 0
  %v1872 = vsel %vm1210, %v1670, 0
  %1874 = vmatprep.subr.mxu0 0.0
  %1875 = vmatpush1.msra.mxu0 0.0
  %1876 = vmatprep.subr.mxu0 0.0
  %1877 = vmatpush1.msra.mxu0 0.0
  %1878 = vmatprep.subr.mxu0 0.0
  %1879 = vmatpush1.msra.mxu0 0.0
  %1880 = vmatprep.subr.mxu0 0.0
  %1881 = vmatpush1.msra.mxu0 0.0
  %1882 = vmatprep.subr.mxu0 0.0
  %1883 = vmatpush1.msra.mxu0 0.0
  %1884 = vmatprep.subr.mxu0 0.0
  %1885 = vmatpush1.msra.mxu0 0.0
  %1886 = vmatprep.subr.mxu0 0.0
  %1887 = vmatpush1.msra.mxu0 0.0
  %1888 = vmatprep.subr.mxu0 0.0
  %1889 = vmatpush1.msra.mxu0 0.0
  %1890 = vmatprep.subr.mxu0 0.0
  %1891 = vmatpush1.msra.mxu0 0.0
  %1892 = vmatprep.subr.mxu0 0.0
  %1893 = vmatpush1.msra.mxu0 %v1872
  %1894 = vmatprep.subr.mxu0 0.0
  %1895 = vmatpush1.msra.mxu0 %v1669
  %1896 = vmatprep.subr.mxu0 0.0
  %1897 = vmatpush1.msra.mxu0 %v1668
  %1898 = vmatprep.subr.mxu0 0.0
  %1899 = vmatpush1.msra.mxu0 %v1667
  %1900 = vmatprep.subr.mxu0 0.0
  %1901 = vmatpush1.msra.mxu0 %v1666
  %1902 = vmatprep.subr.mxu0 0.0
  %1903 = vmatpush1.msra.mxu0 %v1665
  %1904 = vmatprep.subr.mxu0 0.0
  %1905 = vmatpush1.msra.mxu0 %v1664
  %1906 = vmatprep.subr.mxu0 0.0
  %1907 = vmatpush2.msra.mxu0 0.0
  %1908 = vmatprep.subr.mxu0 0.0
  %1909 = vmatpush2.msra.mxu0 0.0
  %1910 = vmatprep.subr.mxu0 0.0
  %1911 = vmatpush2.msra.mxu0 0.0
  %1912 = vmatprep.subr.mxu0 0.0
  %1913 = vmatpush2.msra.mxu0 0.0
  %1914 = vmatprep.subr.mxu0 0.0
  %1915 = vmatpush2.msra.mxu0 0.0
  %1916 = vmatprep.subr.mxu0 0.0
  %1917 = vmatpush2.msra.mxu0 0.0
  %1918 = vmatprep.subr.mxu0 0.0
  %1919 = vmatpush2.msra.mxu0 0.0
  %1920 = vmatprep.subr.mxu0 0.0
  %1921 = vmatpush2.msra.mxu0 0.0
  %1922 = vmatprep.subr.mxu0 0.0
  %1923 = vmatpush2.msra.mxu0 0.0
  %1924 = vmatprep.subr.mxu0 0.0
  %1925 = vmatpush2.msra.mxu0 0.0
  %1926 = vmatprep.subr.mxu0 0.0
  %1927 = vmatpush2.msra.mxu0 0.0
  %1928 = vmatprep.subr.mxu0 0.0
  %1929 = vmatpush2.msra.mxu0 0.0
  %1930 = vmatprep.subr.mxu0 0.0
  %1931 = vmatpush2.msra.mxu0 0.0
  %1932 = vmatprep.subr.mxu0 0.0
  %1933 = vmatpush2.msra.mxu0 0.0
  %1934 = vmatprep.subr.mxu0 0.0
  %1935 = vmatpush2.msra.mxu0 0.0
  %1936 = vmatprep.subr.mxu0 0.0
  %1937 = vmatpush2.msra.mxu0 0.0
  %1938 = vmatprep.mubr.f32.mxu0 0.0
  %1939 = vmatmul.mubr.f32.gmra.mxu0 %v1680
  %v1940 = vpop.f32.mrf.mxu0
  %v1941 = vadd.f32 %v1677, %v1940
  %v1942 = vpop.f32.mrf.mxu0
  %1943 = vmatprep.mubr.f32.mxu0 0.0
  %1944 = vmatmul.mubr.f32.gmra.mxu0 %v1683
  %v1945 = vpop.f32.mrf.mxu0
  %v1946 = vadd.f32 %v1677, %v1945
  %v1947 = vpop.f32.mrf.mxu0
  %1948 = vmatprep.mubr.f32.mxu0 0.0
  %1949 = vmatmul.mubr.f32.gmra.mxu0 %v1686
  %v1950 = vpop.f32.mrf.mxu0
  %v1951 = vadd.f32 %v1677, %v1950
  %v1952 = vpop.f32.mrf.mxu0
  %1953 = vmatprep.mubr.f32.mxu0 0.0
  %1954 = vmatmul.mubr.f32.gmra.mxu0 %v1689
  %v1955 = vpop.f32.mrf.mxu0
  %v1956 = vadd.f32 %v1677, %v1955
  %v1957 = vpop.f32.mrf.mxu0
  %1958 = vmatprep.mubr.f32.mxu0 0.0
  %1959 = vmatmul.mubr.f32.gmra.mxu0 %v1692
  %v1960 = vpop.f32.mrf.mxu0
  %v1961 = vadd.f32 %v1677, %v1960
  %v1962 = vpop.f32.mrf.mxu0
  %1963 = vmatprep.mubr.f32.mxu0 0.0
  %1964 = vmatmul.mubr.f32.gmra.mxu0 %v1695
  %v1965 = vpop.f32.mrf.mxu0
  %v1966 = vadd.f32 %v1677, %v1965
  %v1967 = vpop.f32.mrf.mxu0
  %1968 = vmatprep.mubr.f32.mxu0 0.0
  %1969 = vmatmul.mubr.f32.gmra.mxu0 %v1698
  %v1970 = vpop.f32.mrf.mxu0
  %v1971 = vadd.f32 %v1677, %v1970
  %v1972 = vpop.f32.mrf.mxu0
  %1973 = vmatprep.mubr.f32.mxu0 0.0
  %1974 = vmatmul.mubr.f32.gmra.mxu0 %v1701
  %v1975 = vpop.f32.mrf.mxu0
  %v1976 = vadd.f32 %v1677, %v1975
  %v1977 = vpop.f32.mrf.mxu0
  %1978 = vmatprep.mubr.f32.mxu0 0.0
  %1979 = vmatmul.mubr.f32.gmra.mxu0 %v1704
  %v1980 = vpop.f32.mrf.mxu0
  %v1981 = vadd.f32 %v1677, %v1980
  %v1982 = vpop.f32.mrf.mxu0
  %1983 = vmatprep.mubr.f32.mxu0 0.0
  %1984 = vmatmul.mubr.f32.gmra.mxu0 %v1707
  %v1985 = vpop.f32.mrf.mxu0
  %v1986 = vadd.f32 %v1677, %v1985
  %v1987 = vpop.f32.mrf.mxu0
  %1988 = vmatprep.mubr.f32.mxu0 0.0
  %1989 = vmatmul.mubr.f32.gmra.mxu0 %v1710
  %v1990 = vpop.f32.mrf.mxu0
  %v1991 = vadd.f32 %v1677, %v1990
  %v1992 = vpop.f32.mrf.mxu0
  %1993 = vmatprep.mubr.f32.mxu0 0.0
  %1994 = vmatmul.mubr.f32.gmra.mxu0 %v1713
  %v1995 = vpop.f32.mrf.mxu0
  %v1996 = vadd.f32 %v1677, %v1995
  %v1997 = vpop.f32.mrf.mxu0
  %1998 = vmatprep.mubr.f32.mxu0 0.0
  %1999 = vmatmul.mubr.f32.gmra.mxu0 %v1716
  %v2000 = vpop.f32.mrf.mxu0
  %v2001 = vadd.f32 %v1677, %v2000
  %v2002 = vpop.f32.mrf.mxu0
  %2003 = vmatprep.mubr.f32.mxu0 0.0
  %2004 = vmatmul.mubr.f32.gmra.mxu0 %v1719
  %v2005 = vpop.f32.mrf.mxu0
  %v2006 = vadd.f32 %v1677, %v2005
  %v2007 = vpop.f32.mrf.mxu0
  %2008 = vmatprep.mubr.f32.mxu0 0.0
  %2009 = vmatmul.mubr.f32.gmra.mxu0 %v1722
  %v2010 = vpop.f32.mrf.mxu0
  %v2011 = vadd.f32 %v1677, %v2010
  %v2012 = vpop.f32.mrf.mxu0
  %2013 = vmatprep.mubr.f32.mxu0 0.0
  %2014 = vmatmul.mubr.f32.gmra.mxu0 %v1725
  %v2015 = vpop.f32.mrf.mxu0
  %v2016 = vadd.f32 %v1677, %v2015
  %v2017 = vpop.f32.mrf.mxu0
  %2018 = vmatprep.mubr.f32.mxu0 0.0
  %2019 = vmatmul.mubr.f32.gmra.mxu0 %v1728
  %v2020 = vpop.f32.mrf.mxu0
  %v2021 = vadd.f32 %v1677, %v2020
  %v2022 = vpop.f32.mrf.mxu0
  %2023 = vmatprep.mubr.f32.mxu0 0.0
  %2024 = vmatmul.mubr.f32.gmra.mxu0 %v1731
  %v2025 = vpop.f32.mrf.mxu0
  %v2026 = vadd.f32 %v1677, %v2025
  %v2027 = vpop.f32.mrf.mxu0
  %2028 = vmatprep.mubr.f32.mxu0 0.0
  %2029 = vmatmul.mubr.f32.gmra.mxu0 %v1734
  %v2030 = vpop.f32.mrf.mxu0
  %v2031 = vadd.f32 %v1677, %v2030
  %v2032 = vpop.f32.mrf.mxu0
  %2033 = vmatprep.mubr.f32.mxu0 0.0
  %2034 = vmatmul.mubr.f32.gmra.mxu0 %v1737
  %v2035 = vpop.f32.mrf.mxu0
  %v2036 = vadd.f32 %v1677, %v2035
  %v2037 = vpop.f32.mrf.mxu0
  %2038 = vmatprep.mubr.f32.mxu0 0.0
  %2039 = vmatmul.mubr.f32.gmra.mxu0 %v1740
  %v2040 = vpop.f32.mrf.mxu0
  %v2041 = vadd.f32 %v1677, %v2040
  %v2042 = vpop.f32.mrf.mxu0
  %2043 = vmatprep.mubr.f32.mxu0 0.0
  %2044 = vmatmul.mubr.f32.gmra.mxu0 %v1743
  %v2045 = vpop.f32.mrf.mxu0
  %v2046 = vadd.f32 %v1677, %v2045
  %v2047 = vpop.f32.mrf.mxu0
  %2048 = vmatprep.mubr.f32.mxu0 0.0
  %2049 = vmatmul.mubr.f32.gmra.mxu0 %v1746
  %v2050 = vpop.f32.mrf.mxu0
  %v2051 = vadd.f32 %v1677, %v2050
  %v2052 = vpop.f32.mrf.mxu0
  %2053 = vmatprep.mubr.f32.mxu0 0.0
  %2054 = vmatmul.mubr.f32.gmra.mxu0 %v1749
  %v2055 = vpop.f32.mrf.mxu0
  %v2056 = vadd.f32 %v1677, %v2055
  %v2057 = vpop.f32.mrf.mxu0
  %2058 = vmatprep.mubr.f32.mxu0 0.0
  %2059 = vmatmul.mubr.f32.gmra.mxu0 %v1752
  %v2060 = vpop.f32.mrf.mxu0
  %v2061 = vadd.f32 %v1677, %v2060
  %v2062 = vpop.f32.mrf.mxu0
  %2063 = vmatprep.mubr.f32.mxu0 0.0
  %2064 = vmatmul.mubr.f32.gmra.mxu0 %v1755
  %v2065 = vpop.f32.mrf.mxu0
  %v2066 = vadd.f32 %v1677, %v2065
  %v2067 = vpop.f32.mrf.mxu0
  %2068 = vmatprep.mubr.f32.mxu0 0.0
  %2069 = vmatmul.mubr.f32.gmra.mxu0 %v1758
  %v2070 = vpop.f32.mrf.mxu0
  %v2071 = vadd.f32 %v1677, %v2070
  %v2072 = vpop.f32.mrf.mxu0
  %2073 = vmatprep.mubr.f32.mxu0 0.0
  %2074 = vmatmul.mubr.f32.gmra.mxu0 %v1761
  %v2075 = vpop.f32.mrf.mxu0
  %v2076 = vadd.f32 %v1677, %v2075
  %v2077 = vpop.f32.mrf.mxu0
  %2078 = vmatprep.mubr.f32.mxu0 0.0
  %2079 = vmatmul.mubr.f32.gmra.mxu0 %v1764
  %v2080 = vpop.f32.mrf.mxu0
  %v2081 = vadd.f32 %v1677, %v2080
  %v2082 = vpop.f32.mrf.mxu0
  %2083 = vmatprep.mubr.f32.mxu0 0.0
  %2084 = vmatmul.mubr.f32.gmra.mxu0 %v1767
  %v2085 = vpop.f32.mrf.mxu0
  %v2086 = vadd.f32 %v1677, %v2085
  %v2087 = vpop.f32.mrf.mxu0
  %2088 = vmatprep.mubr.f32.mxu0 0.0
  %2089 = vmatmul.mubr.f32.gmra.mxu0 %v1770
  %v2090 = vpop.f32.mrf.mxu0
  %v2091 = vadd.f32 %v1677, %v2090
  %v2092 = vpop.f32.mrf.mxu0
  %2093 = vmatprep.mubr.f32.mxu0 0.0
  %2094 = vmatmul.mubr.f32.gmra.mxu0 %v1773
  %v2095 = vpop.f32.mrf.mxu0
  %v2096 = vadd.f32 %v1677, %v2095
  %v2097 = vpop.f32.mrf.mxu0
  %2098 = vmatprep.mubr.f32.mxu0 0.0
  %2099 = vmatmul.mubr.f32.gmra.mxu0 %v1776
  %v2100 = vpop.f32.mrf.mxu0
  %v2101 = vadd.f32 %v1677, %v2100
  %v2102 = vpop.f32.mrf.mxu0
  %2103 = vmatprep.mubr.f32.mxu0 0.0
  %2104 = vmatmul.mubr.f32.gmra.mxu0 %v1779
  %v2105 = vpop.f32.mrf.mxu0
  %v2106 = vadd.f32 %v1677, %v2105
  %v2107 = vpop.f32.mrf.mxu0
  %2108 = vmatprep.mubr.f32.mxu0 0.0
  %2109 = vmatmul.mubr.f32.gmra.mxu0 %v1782
  %v2110 = vpop.f32.mrf.mxu0
  %v2111 = vadd.f32 %v1677, %v2110
  %v2112 = vpop.f32.mrf.mxu0
  %2113 = vmatprep.mubr.f32.mxu0 0.0
  %2114 = vmatmul.mubr.f32.gmra.mxu0 %v1785
  %v2115 = vpop.f32.mrf.mxu0
  %v2116 = vadd.f32 %v1677, %v2115
  %v2117 = vpop.f32.mrf.mxu0
  %2118 = vmatprep.mubr.f32.mxu0 0.0
  %2119 = vmatmul.mubr.f32.gmra.mxu0 %v1788
  %v2120 = vpop.f32.mrf.mxu0
  %v2121 = vadd.f32 %v1677, %v2120
  %v2122 = vpop.f32.mrf.mxu0
  %2123 = vmatprep.mubr.f32.mxu0 0.0
  %2124 = vmatmul.mubr.f32.gmra.mxu0 %v1791
  %v2125 = vpop.f32.mrf.mxu0
  %v2126 = vadd.f32 %v1677, %v2125
  %v2127 = vpop.f32.mrf.mxu0
  %2128 = vmatprep.mubr.f32.mxu0 0.0
  %2129 = vmatmul.mubr.f32.gmra.mxu0 %v1794
  %v2130 = vpop.f32.mrf.mxu0
  %v2131 = vadd.f32 %v1677, %v2130
  %v2132 = vpop.f32.mrf.mxu0
  %2133 = vmatprep.mubr.f32.mxu0 0.0
  %2134 = vmatmul.mubr.f32.gmra.mxu0 %v1797
  %v2135 = vpop.f32.mrf.mxu0
  %v2136 = vadd.f32 %v1677, %v2135
  %v2137 = vpop.f32.mrf.mxu0
  %2138 = vmatprep.mubr.f32.mxu0 0.0
  %2139 = vmatmul.mubr.f32.gmra.mxu0 %v1800
  %v2140 = vpop.f32.mrf.mxu0
  %v2141 = vadd.f32 %v1677, %v2140
  %v2142 = vpop.f32.mrf.mxu0
  %2143 = vmatprep.mubr.f32.mxu0 0.0
  %2144 = vmatmul.mubr.f32.gmra.mxu0 %v1803
  %v2145 = vpop.f32.mrf.mxu0
  %v2146 = vadd.f32 %v1677, %v2145
  %v2147 = vpop.f32.mrf.mxu0
  %2148 = vmatprep.mubr.f32.mxu0 0.0
  %2149 = vmatmul.mubr.f32.gmra.mxu0 %v1806
  %v2150 = vpop.f32.mrf.mxu0
  %v2151 = vadd.f32 %v1677, %v2150
  %v2152 = vpop.f32.mrf.mxu0
  %2153 = vmatprep.mubr.f32.mxu0 0.0
  %2154 = vmatmul.mubr.f32.gmra.mxu0 %v1809
  %v2155 = vpop.f32.mrf.mxu0
  %v2156 = vadd.f32 %v1677, %v2155
  %v2157 = vpop.f32.mrf.mxu0
  %2158 = vmatprep.mubr.f32.mxu0 0.0
  %2159 = vmatmul.mubr.f32.gmra.mxu0 %v1812
  %v2160 = vpop.f32.mrf.mxu0
  %v2161 = vadd.f32 %v1677, %v2160
  %v2162 = vpop.f32.mrf.mxu0
  %2163 = vmatprep.mubr.f32.mxu0 0.0
  %2164 = vmatmul.mubr.f32.gmra.mxu0 %v1815
  %v2165 = vpop.f32.mrf.mxu0
  %v2166 = vadd.f32 %v1677, %v2165
  %v2167 = vpop.f32.mrf.mxu0
  %2168 = vmatprep.mubr.f32.mxu0 0.0
  %2169 = vmatmul.mubr.f32.gmra.mxu0 %v1818
  %v2170 = vpop.f32.mrf.mxu0
  %v2171 = vadd.f32 %v1677, %v2170
  %v2172 = vpop.f32.mrf.mxu0
  %2173 = vmatprep.mubr.f32.mxu0 0.0
  %2174 = vmatmul.mubr.f32.gmra.mxu0 %v1821
  %v2175 = vpop.f32.mrf.mxu0
  %v2176 = vadd.f32 %v1677, %v2175
  %v2177 = vpop.f32.mrf.mxu0
  %2178 = vmatprep.mubr.f32.mxu0 0.0
  %2179 = vmatmul.mubr.f32.gmra.mxu0 %v1824
  %v2180 = vpop.f32.mrf.mxu0
  %v2181 = vadd.f32 %v1677, %v2180
  %v2182 = vpop.f32.mrf.mxu0
  %2183 = vmatprep.mubr.f32.mxu0 0.0
  %2184 = vmatmul.mubr.f32.gmra.mxu0 %v1827
  %v2185 = vpop.f32.mrf.mxu0
  %v2186 = vadd.f32 %v1677, %v2185
  %v2187 = vpop.f32.mrf.mxu0
  %2188 = vmatprep.mubr.f32.mxu0 0.0
  %2189 = vmatmul.mubr.f32.gmra.mxu0 %v1830
  %v2190 = vpop.f32.mrf.mxu0
  %v2191 = vadd.f32 %v1677, %v2190
  %v2192 = vpop.f32.mrf.mxu0
  %2193 = vmatprep.mubr.f32.mxu0 0.0
  %2194 = vmatmul.mubr.f32.gmra.mxu0 %v1833
  %v2195 = vpop.f32.mrf.mxu0
  %v2196 = vadd.f32 %v1677, %v2195
  %v2197 = vpop.f32.mrf.mxu0
  %2198 = vmatprep.mubr.f32.mxu0 0.0
  %2199 = vmatmul.mubr.f32.gmra.mxu0 %v1836
  %v2200 = vpop.f32.mrf.mxu0
  %v2201 = vadd.f32 %v1677, %v2200
  %v2202 = vpop.f32.mrf.mxu0
  %2203 = vmatprep.mubr.f32.mxu0 0.0
  %2204 = vmatmul.mubr.f32.gmra.mxu0 %v1839
  %v2205 = vpop.f32.mrf.mxu0
  %v2206 = vadd.f32 %v1677, %v2205
  %v2207 = vpop.f32.mrf.mxu0
  %2208 = vmatprep.mubr.f32.mxu0 0.0
  %2209 = vmatmul.mubr.f32.gmra.mxu0 %v1842
  %v2210 = vpop.f32.mrf.mxu0
  %v2211 = vadd.f32 %v1677, %v2210
  %v2212 = vpop.f32.mrf.mxu0
  %2213 = vmatprep.mubr.f32.mxu0 0.0
  %2214 = vmatmul.mubr.f32.gmra.mxu0 %v1845
  %v2215 = vpop.f32.mrf.mxu0
  %v2216 = vadd.f32 %v1677, %v2215
  %v2217 = vpop.f32.mrf.mxu0
  %2218 = vmatprep.mubr.f32.mxu0 0.0
  %2219 = vmatmul.mubr.f32.gmra.mxu0 %v1848
  %v2220 = vpop.f32.mrf.mxu0
  %v2221 = vadd.f32 %v1677, %v2220
  %v2222 = vpop.f32.mrf.mxu0
  %2223 = vmatprep.mubr.f32.mxu0 0.0
  %2224 = vmatmul.mubr.f32.gmra.mxu0 %v1851
  %v2225 = vpop.f32.mrf.mxu0
  %v2226 = vadd.f32 %v1677, %v2225
  %v2227 = vpop.f32.mrf.mxu0
  %2228 = vmatprep.mubr.f32.mxu0 0.0
  %2229 = vmatmul.mubr.f32.gmra.mxu0 %v1854
  %v2230 = vpop.f32.mrf.mxu0
  %v2231 = vadd.f32 %v1677, %v2230
  %v2232 = vpop.f32.mrf.mxu0
  %2233 = vmatprep.mubr.f32.mxu0 0.0
  %2234 = vmatmul.mubr.f32.gmra.mxu0 %v1857
  %v2235 = vpop.f32.mrf.mxu0
  %v2236 = vadd.f32 %v1677, %v2235
  %v2237 = vpop.f32.mrf.mxu0
  %2238 = vmatprep.mubr.f32.mxu0 0.0
  %2239 = vmatmul.mubr.f32.gmra.mxu0 %v1860
  %v2240 = vpop.f32.mrf.mxu0
  %v2241 = vadd.f32 %v1677, %v2240
  %v2242 = vpop.f32.mrf.mxu0
  %2243 = vmatprep.mubr.f32.mxu0 0.0
  %2244 = vmatmul.mubr.f32.gmra.mxu0 %v1863
  %v2245 = vpop.f32.mrf.mxu0
  %v2246 = vadd.f32 %v1677, %v2245
  %v2247 = vpop.f32.mrf.mxu0
  %2248 = vmatprep.mubr.f32.mxu0 0.0
  %2249 = vmatmul.mubr.f32.gmra.mxu0 %v1866
  %v2250 = vpop.f32.mrf.mxu0
  %v2251 = vadd.f32 %v1677, %v2250
  %v2252 = vpop.f32.mrf.mxu0
  %2253 = vmatprep.mubr.f32.mxu0 0.0
  %2254 = vmatmul.mubr.f32.gmra.mxu0 %v1869
  %v2255 = vpop.f32.mrf.mxu0
  %v2256 = vadd.f32 %v1677, %v2255
  %v2257 = vpop.f32.mrf.mxu0
  %2258 = vdwg.mxu0
  %v2259 = vtanh.pop %v1941
  %v2260 = vtanh.pop %v1946
  %v2261 = vtanh.pop %v1951
  %v2262 = vtanh.pop %v1956
  %v2263 = vtanh.pop %v1961
  %v2264 = vtanh.pop %v1966
  %v2265 = vtanh.pop %v1971
  %v2266 = vtanh.pop %v1976
  %v2267 = vtanh.pop %v1981
  %v2268 = vtanh.pop %v1986
  %v2269 = vtanh.pop %v1991
  %v2270 = vtanh.pop %v1996
  %v2271 = vtanh.pop %v2001
  %v2272 = vtanh.pop %v2006
  %v2273 = vtanh.pop %v2011
  %v2274 = vtanh.pop %v2016
  %v2275 = vtanh.pop %v2021
  %v2276 = vtanh.pop %v2026
  %v2277 = vtanh.pop %v2031
  %v2278 = vtanh.pop %v2036
  %v2279 = vtanh.pop %v2041
  %v2280 = vtanh.pop %v2046
  %v2281 = vtanh.pop %v2051
  %v2282 = vtanh.pop %v2056
  %v2283 = vtanh.pop %v2061
  %v2284 = vtanh.pop %v2066
  %v2285 = vtanh.pop %v2071
  %v2286 = vtanh.pop %v2076
  %v2287 = vtanh.pop %v2081
  %v2288 = vtanh.pop %v2086
  %v2289 = vtanh.pop %v2091
  %v2290 = vtanh.pop %v2096
  %v2291 = vtanh.pop %v2101
  %v2292 = vtanh.pop %v2106
  %v2293 = vtanh.pop %v2111
  %v2294 = vtanh.pop %v2116
  %v2295 = vtanh.pop %v2121
  %v2296 = vtanh.pop %v2126
  %v2297 = vtanh.pop %v2131
  %v2298 = vtanh.pop %v2136
  %v2299 = vtanh.pop %v2141
  %v2300 = vtanh.pop %v2146
  %v2301 = vtanh.pop %v2151
  %v2302 = vtanh.pop %v2156
  %v2303 = vtanh.pop %v2161
  %v2304 = vtanh.pop %v2166
  %v2305 = vtanh.pop %v2171
  %v2306 = vtanh.pop %v2176
  %v2307 = vtanh.pop %v2181
  %v2308 = vtanh.pop %v2186
  %v2309 = vtanh.pop %v2191
  %v2310 = vtanh.pop %v2196
  %v2311 = vtanh.pop %v2201
  %v2312 = vtanh.pop %v2206
  %v2313 = vtanh.pop %v2211
  %v2314 = vtanh.pop %v2216
  %v2315 = vtanh.pop %v2221
  %v2316 = vtanh.pop %v2226
  %v2317 = vtanh.pop %v2231
  %v2318 = vtanh.pop %v2236
  %v2319 = vtanh.pop %v2241
  %v2320 = vtanh.pop %v2246
  %v2321 = vtanh.pop %v2251
  %v2322 = vtanh.pop %v2256
  %s2323 = scalar_lea.vmem %s3, 112
  %v2324 = vld [vmem:[%s2323] sm:$0xff]
  %v2325 = vld [vmem:[%s2323 + $0x8] sm:$0xff]
  %v2326 = vld [vmem:[%s2323 + $0x10] sm:$0xff]
  %v2327 = vld [vmem:[%s2323 + $0x18] sm:$0xff]
  %v2328 = vld [vmem:[%s2323 + $0x20] sm:$0xff]
  %v2329 = vld [vmem:[%s2323 + $0x28] sm:$0xff]
  %v2330 = vld [vmem:[%s2323 + $0x30] sm:$0x3]
  %s2331 = scalar_lea.vmem %s4, 2
  %v2332 = vld [vmem:[%s2331] sm:$0x1]
  %v2334 = vlaneseq
  %v2335 = vshrl.u32 %v2334, 7
  %v2336 = vsub.s32 0, %v2335
  %v2337 = vrot.slane %v2332, %v2336
  %v2340 = vsel %vm1017, %v2259, 0
  %v2343 = vsel %vm1017, %v2260, 0
  %v2346 = vsel %vm1017, %v2261, 0
  %v2349 = vsel %vm1017, %v2262, 0
  %v2352 = vsel %vm1017, %v2263, 0
  %v2355 = vsel %vm1017, %v2264, 0
  %v2358 = vsel %vm1017, %v2265, 0
  %v2361 = vsel %vm1017, %v2266, 0
  %v2364 = vsel %vm1017, %v2267, 0
  %v2367 = vsel %vm1017, %v2268, 0
  %v2370 = vsel %vm1017, %v2269, 0
  %v2373 = vsel %vm1017, %v2270, 0
  %v2376 = vsel %vm1017, %v2271, 0
  %v2379 = vsel %vm1017, %v2272, 0
  %v2382 = vsel %vm1017, %v2273, 0
  %v2385 = vsel %vm1017, %v2274, 0
  %v2388 = vsel %vm1017, %v2275, 0
  %v2391 = vsel %vm1017, %v2276, 0
  %v2394 = vsel %vm1017, %v2277, 0
  %v2397 = vsel %vm1017, %v2278, 0
  %v2400 = vsel %vm1017, %v2279, 0
  %v2403 = vsel %vm1017, %v2280, 0
  %v2406 = vsel %vm1017, %v2281, 0
  %v2409 = vsel %vm1017, %v2282, 0
  %v2412 = vsel %vm1017, %v2283, 0
  %v2415 = vsel %vm1017, %v2284, 0
  %v2418 = vsel %vm1017, %v2285, 0
  %v2421 = vsel %vm1017, %v2286, 0
  %v2424 = vsel %vm1017, %v2287, 0
  %v2427 = vsel %vm1017, %v2288, 0
  %v2430 = vsel %vm1017, %v2289, 0
  %v2433 = vsel %vm1017, %v2290, 0
  %v2436 = vsel %vm1017, %v2291, 0
  %v2439 = vsel %vm1017, %v2292, 0
  %v2442 = vsel %vm1017, %v2293, 0
  %v2445 = vsel %vm1017, %v2294, 0
  %v2448 = vsel %vm1017, %v2295, 0
  %v2451 = vsel %vm1017, %v2296, 0
  %v2454 = vsel %vm1017, %v2297, 0
  %v2457 = vsel %vm1017, %v2298, 0
  %v2460 = vsel %vm1017, %v2299, 0
  %v2463 = vsel %vm1017, %v2300, 0
  %v2466 = vsel %vm1017, %v2301, 0
  %v2469 = vsel %vm1017, %v2302, 0
  %v2472 = vsel %vm1017, %v2303, 0
  %v2475 = vsel %vm1017, %v2304, 0
  %v2478 = vsel %vm1017, %v2305, 0
  %v2481 = vsel %vm1017, %v2306, 0
  %v2484 = vsel %vm1017, %v2307, 0
  %v2487 = vsel %vm1017, %v2308, 0
  %v2490 = vsel %vm1017, %v2309, 0
  %v2493 = vsel %vm1017, %v2310, 0
  %v2496 = vsel %vm1017, %v2311, 0
  %v2499 = vsel %vm1017, %v2312, 0
  %v2502 = vsel %vm1017, %v2313, 0
  %v2505 = vsel %vm1017, %v2314, 0
  %v2508 = vsel %vm1017, %v2315, 0
  %v2511 = vsel %vm1017, %v2316, 0
  %v2514 = vsel %vm1017, %v2317, 0
  %v2517 = vsel %vm1017, %v2318, 0
  %v2520 = vsel %vm1017, %v2319, 0
  %v2523 = vsel %vm1017, %v2320, 0
  %v2526 = vsel %vm1017, %v2321, 0
  %v2529 = vsel %vm1017, %v2322, 0
  %v2532 = vsel %vm1210, %v2330, 0
  %2534 = vmatprep.subr.mxu0 0.0
  %2535 = vmatpush1.msra.mxu0 0.0
  %2536 = vmatprep.subr.mxu0 0.0
  %2537 = vmatpush1.msra.mxu0 0.0
  %2538 = vmatprep.subr.mxu0 0.0
  %2539 = vmatpush1.msra.mxu0 0.0
  %2540 = vmatprep.subr.mxu0 0.0
  %2541 = vmatpush1.msra.mxu0 0.0
  %2542 = vmatprep.subr.mxu0 0.0
  %2543 = vmatpush1.msra.mxu0 0.0
  %2544 = vmatprep.subr.mxu0 0.0
  %2545 = vmatpush1.msra.mxu0 0.0
  %2546 = vmatprep.subr.mxu0 0.0
  %2547 = vmatpush1.msra.mxu0 0.0
  %2548 = vmatprep.subr.mxu0 0.0
  %2549 = vmatpush1.msra.mxu0 0.0
  %2550 = vmatprep.subr.mxu0 0.0
  %2551 = vmatpush1.msra.mxu0 0.0
  %2552 = vmatprep.subr.mxu0 0.0
  %2553 = vmatpush1.msra.mxu0 %v2532
  %2554 = vmatprep.subr.mxu0 0.0
  %2555 = vmatpush1.msra.mxu0 %v2329
  %2556 = vmatprep.subr.mxu0 0.0
  %2557 = vmatpush1.msra.mxu0 %v2328
  %2558 = vmatprep.subr.mxu0 0.0
  %2559 = vmatpush1.msra.mxu0 %v2327
  %2560 = vmatprep.subr.mxu0 0.0
  %2561 = vmatpush1.msra.mxu0 %v2326
  %2562 = vmatprep.subr.mxu0 0.0
  %2563 = vmatpush1.msra.mxu0 %v2325
  %2564 = vmatprep.subr.mxu0 0.0
  %2565 = vmatpush1.msra.mxu0 %v2324
  %2566 = vmatprep.subr.mxu0 0.0
  %2567 = vmatpush2.msra.mxu0 0.0
  %2568 = vmatprep.subr.mxu0 0.0
  %2569 = vmatpush2.msra.mxu0 0.0
  %2570 = vmatprep.subr.mxu0 0.0
  %2571 = vmatpush2.msra.mxu0 0.0
  %2572 = vmatprep.subr.mxu0 0.0
  %2573 = vmatpush2.msra.mxu0 0.0
  %2574 = vmatprep.subr.mxu0 0.0
  %2575 = vmatpush2.msra.mxu0 0.0
  %2576 = vmatprep.subr.mxu0 0.0
  %2577 = vmatpush2.msra.mxu0 0.0
  %2578 = vmatprep.subr.mxu0 0.0
  %2579 = vmatpush2.msra.mxu0 0.0
  %2580 = vmatprep.subr.mxu0 0.0
  %2581 = vmatpush2.msra.mxu0 0.0
  %2582 = vmatprep.subr.mxu0 0.0
  %2583 = vmatpush2.msra.mxu0 0.0
  %2584 = vmatprep.subr.mxu0 0.0
  %2585 = vmatpush2.msra.mxu0 0.0
  %2586 = vmatprep.subr.mxu0 0.0
  %2587 = vmatpush2.msra.mxu0 0.0
  %2588 = vmatprep.subr.mxu0 0.0
  %2589 = vmatpush2.msra.mxu0 0.0
  %2590 = vmatprep.subr.mxu0 0.0
  %2591 = vmatpush2.msra.mxu0 0.0
  %2592 = vmatprep.subr.mxu0 0.0
  %2593 = vmatpush2.msra.mxu0 0.0
  %2594 = vmatprep.subr.mxu0 0.0
  %2595 = vmatpush2.msra.mxu0 0.0
  %2596 = vmatprep.subr.mxu0 0.0
  %2597 = vmatpush2.msra.mxu0 0.0
  %2598 = vmatprep.mubr.f32.mxu0 0.0
  %2599 = vmatmul.mubr.f32.gmra.mxu0 %v2340
  %v2600 = vpop.f32.mrf.mxu0
  %v2601 = vadd.f32 %v2337, %v2600
  %v2602 = vpop.f32.mrf.mxu0
  %2603 = vmatprep.mubr.f32.mxu0 0.0
  %2604 = vmatmul.mubr.f32.gmra.mxu0 %v2343
  %v2605 = vpop.f32.mrf.mxu0
  %v2606 = vadd.f32 %v2337, %v2605
  %v2607 = vpop.f32.mrf.mxu0
  %2608 = vmatprep.mubr.f32.mxu0 0.0
  %2609 = vmatmul.mubr.f32.gmra.mxu0 %v2346
  %v2610 = vpop.f32.mrf.mxu0
  %v2611 = vadd.f32 %v2337, %v2610
  %v2612 = vpop.f32.mrf.mxu0
  %2613 = vmatprep.mubr.f32.mxu0 0.0
  %2614 = vmatmul.mubr.f32.gmra.mxu0 %v2349
  %v2615 = vpop.f32.mrf.mxu0
  %v2616 = vadd.f32 %v2337, %v2615
  %v2617 = vpop.f32.mrf.mxu0
  %2618 = vmatprep.mubr.f32.mxu0 0.0
  %2619 = vmatmul.mubr.f32.gmra.mxu0 %v2352
  %v2620 = vpop.f32.mrf.mxu0
  %v2621 = vadd.f32 %v2337, %v2620
  %v2622 = vpop.f32.mrf.mxu0
  %2623 = vmatprep.mubr.f32.mxu0 0.0
  %2624 = vmatmul.mubr.f32.gmra.mxu0 %v2355
  %v2625 = vpop.f32.mrf.mxu0
  %v2626 = vadd.f32 %v2337, %v2625
  %v2627 = vpop.f32.mrf.mxu0
  %2628 = vmatprep.mubr.f32.mxu0 0.0
  %2629 = vmatmul.mubr.f32.gmra.mxu0 %v2358
  %v2630 = vpop.f32.mrf.mxu0
  %v2631 = vadd.f32 %v2337, %v2630
  %v2632 = vpop.f32.mrf.mxu0
  %2633 = vmatprep.mubr.f32.mxu0 0.0
  %2634 = vmatmul.mubr.f32.gmra.mxu0 %v2361
  %v2635 = vpop.f32.mrf.mxu0
  %v2636 = vadd.f32 %v2337, %v2635
  %v2637 = vpop.f32.mrf.mxu0
  %2638 = vmatprep.mubr.f32.mxu0 0.0
  %2639 = vmatmul.mubr.f32.gmra.mxu0 %v2364
  %v2640 = vpop.f32.mrf.mxu0
  %v2641 = vadd.f32 %v2337, %v2640
  %v2642 = vpop.f32.mrf.mxu0
  %2643 = vmatprep.mubr.f32.mxu0 0.0
  %2644 = vmatmul.mubr.f32.gmra.mxu0 %v2367
  %v2645 = vpop.f32.mrf.mxu0
  %v2646 = vadd.f32 %v2337, %v2645
  %v2647 = vpop.f32.mrf.mxu0
  %2648 = vmatprep.mubr.f32.mxu0 0.0
  %2649 = vmatmul.mubr.f32.gmra.mxu0 %v2370
  %v2650 = vpop.f32.mrf.mxu0
  %v2651 = vadd.f32 %v2337, %v2650
  %v2652 = vpop.f32.mrf.mxu0
  %2653 = vmatprep.mubr.f32.mxu0 0.0
  %2654 = vmatmul.mubr.f32.gmra.mxu0 %v2373
  %v2655 = vpop.f32.mrf.mxu0
  %v2656 = vadd.f32 %v2337, %v2655
  %v2657 = vpop.f32.mrf.mxu0
  %2658 = vmatprep.mubr.f32.mxu0 0.0
  %2659 = vmatmul.mubr.f32.gmra.mxu0 %v2376
  %v2660 = vpop.f32.mrf.mxu0
  %v2661 = vadd.f32 %v2337, %v2660
  %v2662 = vpop.f32.mrf.mxu0
  %2663 = vmatprep.mubr.f32.mxu0 0.0
  %2664 = vmatmul.mubr.f32.gmra.mxu0 %v2379
  %v2665 = vpop.f32.mrf.mxu0
  %v2666 = vadd.f32 %v2337, %v2665
  %v2667 = vpop.f32.mrf.mxu0
  %2668 = vmatprep.mubr.f32.mxu0 0.0
  %2669 = vmatmul.mubr.f32.gmra.mxu0 %v2382
  %v2670 = vpop.f32.mrf.mxu0
  %v2671 = vadd.f32 %v2337, %v2670
  %v2672 = vpop.f32.mrf.mxu0
  %2673 = vmatprep.mubr.f32.mxu0 0.0
  %2674 = vmatmul.mubr.f32.gmra.mxu0 %v2385
  %v2675 = vpop.f32.mrf.mxu0
  %v2676 = vadd.f32 %v2337, %v2675
  %v2677 = vpop.f32.mrf.mxu0
  %2678 = vmatprep.mubr.f32.mxu0 0.0
  %2679 = vmatmul.mubr.f32.gmra.mxu0 %v2388
  %v2680 = vpop.f32.mrf.mxu0
  %v2681 = vadd.f32 %v2337, %v2680
  %v2682 = vpop.f32.mrf.mxu0
  %2683 = vmatprep.mubr.f32.mxu0 0.0
  %2684 = vmatmul.mubr.f32.gmra.mxu0 %v2391
  %v2685 = vpop.f32.mrf.mxu0
  %v2686 = vadd.f32 %v2337, %v2685
  %v2687 = vpop.f32.mrf.mxu0
  %2688 = vmatprep.mubr.f32.mxu0 0.0
  %2689 = vmatmul.mubr.f32.gmra.mxu0 %v2394
  %v2690 = vpop.f32.mrf.mxu0
  %v2691 = vadd.f32 %v2337, %v2690
  %v2692 = vpop.f32.mrf.mxu0
  %2693 = vmatprep.mubr.f32.mxu0 0.0
  %2694 = vmatmul.mubr.f32.gmra.mxu0 %v2397
  %v2695 = vpop.f32.mrf.mxu0
  %v2696 = vadd.f32 %v2337, %v2695
  %v2697 = vpop.f32.mrf.mxu0
  %2698 = vmatprep.mubr.f32.mxu0 0.0
  %2699 = vmatmul.mubr.f32.gmra.mxu0 %v2400
  %v2700 = vpop.f32.mrf.mxu0
  %v2701 = vadd.f32 %v2337, %v2700
  %v2702 = vpop.f32.mrf.mxu0
  %2703 = vmatprep.mubr.f32.mxu0 0.0
  %2704 = vmatmul.mubr.f32.gmra.mxu0 %v2403
  %v2705 = vpop.f32.mrf.mxu0
  %v2706 = vadd.f32 %v2337, %v2705
  %v2707 = vpop.f32.mrf.mxu0
  %2708 = vmatprep.mubr.f32.mxu0 0.0
  %2709 = vmatmul.mubr.f32.gmra.mxu0 %v2406
  %v2710 = vpop.f32.mrf.mxu0
  %v2711 = vadd.f32 %v2337, %v2710
  %v2712 = vpop.f32.mrf.mxu0
  %2713 = vmatprep.mubr.f32.mxu0 0.0
  %2714 = vmatmul.mubr.f32.gmra.mxu0 %v2409
  %v2715 = vpop.f32.mrf.mxu0
  %v2716 = vadd.f32 %v2337, %v2715
  %v2717 = vpop.f32.mrf.mxu0
  %2718 = vmatprep.mubr.f32.mxu0 0.0
  %2719 = vmatmul.mubr.f32.gmra.mxu0 %v2412
  %v2720 = vpop.f32.mrf.mxu0
  %v2721 = vadd.f32 %v2337, %v2720
  %v2722 = vpop.f32.mrf.mxu0
  %2723 = vmatprep.mubr.f32.mxu0 0.0
  %2724 = vmatmul.mubr.f32.gmra.mxu0 %v2415
  %v2725 = vpop.f32.mrf.mxu0
  %v2726 = vadd.f32 %v2337, %v2725
  %v2727 = vpop.f32.mrf.mxu0
  %2728 = vmatprep.mubr.f32.mxu0 0.0
  %2729 = vmatmul.mubr.f32.gmra.mxu0 %v2418
  %v2730 = vpop.f32.mrf.mxu0
  %v2731 = vadd.f32 %v2337, %v2730
  %v2732 = vpop.f32.mrf.mxu0
  %2733 = vmatprep.mubr.f32.mxu0 0.0
  %2734 = vmatmul.mubr.f32.gmra.mxu0 %v2421
  %v2735 = vpop.f32.mrf.mxu0
  %v2736 = vadd.f32 %v2337, %v2735
  %v2737 = vpop.f32.mrf.mxu0
  %2738 = vmatprep.mubr.f32.mxu0 0.0
  %2739 = vmatmul.mubr.f32.gmra.mxu0 %v2424
  %v2740 = vpop.f32.mrf.mxu0
  %v2741 = vadd.f32 %v2337, %v2740
  %v2742 = vpop.f32.mrf.mxu0
  %2743 = vmatprep.mubr.f32.mxu0 0.0
  %2744 = vmatmul.mubr.f32.gmra.mxu0 %v2427
  %v2745 = vpop.f32.mrf.mxu0
  %v2746 = vadd.f32 %v2337, %v2745
  %v2747 = vpop.f32.mrf.mxu0
  %2748 = vmatprep.mubr.f32.mxu0 0.0
  %2749 = vmatmul.mubr.f32.gmra.mxu0 %v2430
  %v2750 = vpop.f32.mrf.mxu0
  %v2751 = vadd.f32 %v2337, %v2750
  %v2752 = vpop.f32.mrf.mxu0
  %2753 = vmatprep.mubr.f32.mxu0 0.0
  %2754 = vmatmul.mubr.f32.gmra.mxu0 %v2433
  %v2755 = vpop.f32.mrf.mxu0
  %v2756 = vadd.f32 %v2337, %v2755
  %v2757 = vpop.f32.mrf.mxu0
  %2758 = vmatprep.mubr.f32.mxu0 0.0
  %2759 = vmatmul.mubr.f32.gmra.mxu0 %v2436
  %v2760 = vpop.f32.mrf.mxu0
  %v2761 = vadd.f32 %v2337, %v2760
  %v2762 = vpop.f32.mrf.mxu0
  %2763 = vmatprep.mubr.f32.mxu0 0.0
  %2764 = vmatmul.mubr.f32.gmra.mxu0 %v2439
  %v2765 = vpop.f32.mrf.mxu0
  %v2766 = vadd.f32 %v2337, %v2765
  %v2767 = vpop.f32.mrf.mxu0
  %2768 = vmatprep.mubr.f32.mxu0 0.0
  %2769 = vmatmul.mubr.f32.gmra.mxu0 %v2442
  %v2770 = vpop.f32.mrf.mxu0
  %v2771 = vadd.f32 %v2337, %v2770
  %v2772 = vpop.f32.mrf.mxu0
  %2773 = vmatprep.mubr.f32.mxu0 0.0
  %2774 = vmatmul.mubr.f32.gmra.mxu0 %v2445
  %v2775 = vpop.f32.mrf.mxu0
  %v2776 = vadd.f32 %v2337, %v2775
  %v2777 = vpop.f32.mrf.mxu0
  %2778 = vmatprep.mubr.f32.mxu0 0.0
  %2779 = vmatmul.mubr.f32.gmra.mxu0 %v2448
  %v2780 = vpop.f32.mrf.mxu0
  %v2781 = vadd.f32 %v2337, %v2780
  %v2782 = vpop.f32.mrf.mxu0
  %2783 = vmatprep.mubr.f32.mxu0 0.0
  %2784 = vmatmul.mubr.f32.gmra.mxu0 %v2451
  %v2785 = vpop.f32.mrf.mxu0
  %v2786 = vadd.f32 %v2337, %v2785
  %v2787 = vpop.f32.mrf.mxu0
  %2788 = vmatprep.mubr.f32.mxu0 0.0
  %2789 = vmatmul.mubr.f32.gmra.mxu0 %v2454
  %v2790 = vpop.f32.mrf.mxu0
  %v2791 = vadd.f32 %v2337, %v2790
  %v2792 = vpop.f32.mrf.mxu0
  %2793 = vmatprep.mubr.f32.mxu0 0.0
  %2794 = vmatmul.mubr.f32.gmra.mxu0 %v2457
  %v2795 = vpop.f32.mrf.mxu0
  %v2796 = vadd.f32 %v2337, %v2795
  %v2797 = vpop.f32.mrf.mxu0
  %2798 = vmatprep.mubr.f32.mxu0 0.0
  %2799 = vmatmul.mubr.f32.gmra.mxu0 %v2460
  %v2800 = vpop.f32.mrf.mxu0
  %v2801 = vadd.f32 %v2337, %v2800
  %v2802 = vpop.f32.mrf.mxu0
  %2803 = vmatprep.mubr.f32.mxu0 0.0
  %2804 = vmatmul.mubr.f32.gmra.mxu0 %v2463
  %v2805 = vpop.f32.mrf.mxu0
  %v2806 = vadd.f32 %v2337, %v2805
  %v2807 = vpop.f32.mrf.mxu0
  %2808 = vmatprep.mubr.f32.mxu0 0.0
  %2809 = vmatmul.mubr.f32.gmra.mxu0 %v2466
  %v2810 = vpop.f32.mrf.mxu0
  %v2811 = vadd.f32 %v2337, %v2810
  %v2812 = vpop.f32.mrf.mxu0
  %2813 = vmatprep.mubr.f32.mxu0 0.0
  %2814 = vmatmul.mubr.f32.gmra.mxu0 %v2469
  %v2815 = vpop.f32.mrf.mxu0
  %v2816 = vadd.f32 %v2337, %v2815
  %v2817 = vpop.f32.mrf.mxu0
  %2818 = vmatprep.mubr.f32.mxu0 0.0
  %2819 = vmatmul.mubr.f32.gmra.mxu0 %v2472
  %v2820 = vpop.f32.mrf.mxu0
  %v2821 = vadd.f32 %v2337, %v2820
  %v2822 = vpop.f32.mrf.mxu0
  %2823 = vmatprep.mubr.f32.mxu0 0.0
  %2824 = vmatmul.mubr.f32.gmra.mxu0 %v2475
  %v2825 = vpop.f32.mrf.mxu0
  %v2826 = vadd.f32 %v2337, %v2825
  %v2827 = vpop.f32.mrf.mxu0
  %2828 = vmatprep.mubr.f32.mxu0 0.0
  %2829 = vmatmul.mubr.f32.gmra.mxu0 %v2478
  %v2830 = vpop.f32.mrf.mxu0
  %v2831 = vadd.f32 %v2337, %v2830
  %v2832 = vpop.f32.mrf.mxu0
  %2833 = vmatprep.mubr.f32.mxu0 0.0
  %2834 = vmatmul.mubr.f32.gmra.mxu0 %v2481
  %v2835 = vpop.f32.mrf.mxu0
  %v2836 = vadd.f32 %v2337, %v2835
  %v2837 = vpop.f32.mrf.mxu0
  %2838 = vmatprep.mubr.f32.mxu0 0.0
  %2839 = vmatmul.mubr.f32.gmra.mxu0 %v2484
  %v2840 = vpop.f32.mrf.mxu0
  %v2841 = vadd.f32 %v2337, %v2840
  %v2842 = vpop.f32.mrf.mxu0
  %2843 = vmatprep.mubr.f32.mxu0 0.0
  %2844 = vmatmul.mubr.f32.gmra.mxu0 %v2487
  %v2845 = vpop.f32.mrf.mxu0
  %v2846 = vadd.f32 %v2337, %v2845
  %v2847 = vpop.f32.mrf.mxu0
  %2848 = vmatprep.mubr.f32.mxu0 0.0
  %2849 = vmatmul.mubr.f32.gmra.mxu0 %v2490
  %v2850 = vpop.f32.mrf.mxu0
  %v2851 = vadd.f32 %v2337, %v2850
  %v2852 = vpop.f32.mrf.mxu0
  %2853 = vmatprep.mubr.f32.mxu0 0.0
  %2854 = vmatmul.mubr.f32.gmra.mxu0 %v2493
  %v2855 = vpop.f32.mrf.mxu0
  %v2856 = vadd.f32 %v2337, %v2855
  %v2857 = vpop.f32.mrf.mxu0
  %2858 = vmatprep.mubr.f32.mxu0 0.0
  %2859 = vmatmul.mubr.f32.gmra.mxu0 %v2496
  %v2860 = vpop.f32.mrf.mxu0
  %v2861 = vadd.f32 %v2337, %v2860
  %v2862 = vpop.f32.mrf.mxu0
  %2863 = vmatprep.mubr.f32.mxu0 0.0
  %2864 = vmatmul.mubr.f32.gmra.mxu0 %v2499
  %v2865 = vpop.f32.mrf.mxu0
  %v2866 = vadd.f32 %v2337, %v2865
  %v2867 = vpop.f32.mrf.mxu0
  %2868 = vmatprep.mubr.f32.mxu0 0.0
  %2869 = vmatmul.mubr.f32.gmra.mxu0 %v2502
  %v2870 = vpop.f32.mrf.mxu0
  %v2871 = vadd.f32 %v2337, %v2870
  %v2872 = vpop.f32.mrf.mxu0
  %2873 = vmatprep.mubr.f32.mxu0 0.0
  %2874 = vmatmul.mubr.f32.gmra.mxu0 %v2505
  %v2875 = vpop.f32.mrf.mxu0
  %v2876 = vadd.f32 %v2337, %v2875
  %v2877 = vpop.f32.mrf.mxu0
  %2878 = vmatprep.mubr.f32.mxu0 0.0
  %2879 = vmatmul.mubr.f32.gmra.mxu0 %v2508
  %v2880 = vpop.f32.mrf.mxu0
  %v2881 = vadd.f32 %v2337, %v2880
  %v2882 = vpop.f32.mrf.mxu0
  %2883 = vmatprep.mubr.f32.mxu0 0.0
  %2884 = vmatmul.mubr.f32.gmra.mxu0 %v2511
  %v2885 = vpop.f32.mrf.mxu0
  %v2886 = vadd.f32 %v2337, %v2885
  %v2887 = vpop.f32.mrf.mxu0
  %2888 = vmatprep.mubr.f32.mxu0 0.0
  %2889 = vmatmul.mubr.f32.gmra.mxu0 %v2514
  %v2890 = vpop.f32.mrf.mxu0
  %v2891 = vadd.f32 %v2337, %v2890
  %v2892 = vpop.f32.mrf.mxu0
  %2893 = vmatprep.mubr.f32.mxu0 0.0
  %2894 = vmatmul.mubr.f32.gmra.mxu0 %v2517
  %v2895 = vpop.f32.mrf.mxu0
  %v2896 = vadd.f32 %v2337, %v2895
  %v2897 = vpop.f32.mrf.mxu0
  %2898 = vmatprep.mubr.f32.mxu0 0.0
  %2899 = vmatmul.mubr.f32.gmra.mxu0 %v2520
  %v2900 = vpop.f32.mrf.mxu0
  %v2901 = vadd.f32 %v2337, %v2900
  %v2902 = vpop.f32.mrf.mxu0
  %2903 = vmatprep.mubr.f32.mxu0 0.0
  %2904 = vmatmul.mubr.f32.gmra.mxu0 %v2523
  %v2905 = vpop.f32.mrf.mxu0
  %v2906 = vadd.f32 %v2337, %v2905
  %v2907 = vpop.f32.mrf.mxu0
  %2908 = vmatprep.mubr.f32.mxu0 0.0
  %2909 = vmatmul.mubr.f32.gmra.mxu0 %v2526
  %v2910 = vpop.f32.mrf.mxu0
  %v2911 = vadd.f32 %v2337, %v2910
  %v2912 = vpop.f32.mrf.mxu0
  %2913 = vmatprep.mubr.f32.mxu0 0.0
  %2914 = vmatmul.mubr.f32.gmra.mxu0 %v2529
  %v2915 = vpop.f32.mrf.mxu0
  %v2916 = vadd.f32 %v2337, %v2915
  %v2917 = vpop.f32.mrf.mxu0
  %2918 = vdwg.mxu0
  %v2919 = vtanh.pop %v2601
  %v2920 = vtanh.pop %v2606
  %v2921 = vtanh.pop %v2611
  %v2922 = vtanh.pop %v2616
  %v2923 = vtanh.pop %v2621
  %v2924 = vtanh.pop %v2626
  %v2925 = vtanh.pop %v2631
  %v2926 = vtanh.pop %v2636
  %v2927 = vtanh.pop %v2641
  %v2928 = vtanh.pop %v2646
  %v2929 = vtanh.pop %v2651
  %v2930 = vtanh.pop %v2656
  %v2931 = vtanh.pop %v2661
  %v2932 = vtanh.pop %v2666
  %v2933 = vtanh.pop %v2671
  %v2934 = vtanh.pop %v2676
  %v2935 = vtanh.pop %v2681
  %v2936 = vtanh.pop %v2686
  %v2937 = vtanh.pop %v2691
  %v2938 = vtanh.pop %v2696
  %v2939 = vtanh.pop %v2701
  %v2940 = vtanh.pop %v2706
  %v2941 = vtanh.pop %v2711
  %v2942 = vtanh.pop %v2716
  %v2943 = vtanh.pop %v2721
  %v2944 = vtanh.pop %v2726
  %v2945 = vtanh.pop %v2731
  %v2946 = vtanh.pop %v2736
  %v2947 = vtanh.pop %v2741
  %v2948 = vtanh.pop %v2746
  %v2949 = vtanh.pop %v2751
  %v2950 = vtanh.pop %v2756
  %v2951 = vtanh.pop %v2761
  %v2952 = vtanh.pop %v2766
  %v2953 = vtanh.pop %v2771
  %v2954 = vtanh.pop %v2776
  %v2955 = vtanh.pop %v2781
  %v2956 = vtanh.pop %v2786
  %v2957 = vtanh.pop %v2791
  %v2958 = vtanh.pop %v2796
  %v2959 = vtanh.pop %v2801
  %v2960 = vtanh.pop %v2806
  %v2961 = vtanh.pop %v2811
  %v2962 = vtanh.pop %v2816
  %v2963 = vtanh.pop %v2821
  %v2964 = vtanh.pop %v2826
  %v2965 = vtanh.pop %v2831
  %v2966 = vtanh.pop %v2836
  %v2967 = vtanh.pop %v2841
  %v2968 = vtanh.pop %v2846
  %v2969 = vtanh.pop %v2851
  %v2970 = vtanh.pop %v2856
  %v2971 = vtanh.pop %v2861
  %v2972 = vtanh.pop %v2866
  %v2973 = vtanh.pop %v2871
  %v2974 = vtanh.pop %v2876
  %v2975 = vtanh.pop %v2881
  %v2976 = vtanh.pop %v2886
  %v2977 = vtanh.pop %v2891
  %v2978 = vtanh.pop %v2896
  %v2979 = vtanh.pop %v2901
  %v2980 = vtanh.pop %v2906
  %v2981 = vtanh.pop %v2911
  %v2982 = vtanh.pop %v2916
  %s2983 = scalar_lea.vmem %s3, 168
  %v2984 = vld [vmem:[%s2983] sm:$0xff]
  %v2985 = vld [vmem:[%s2983 + $0x8] sm:$0xff]
  %v2986 = vld [vmem:[%s2983 + $0x10] sm:$0xff]
  %v2987 = vld [vmem:[%s2983 + $0x18] sm:$0xff]
  %v2988 = vld [vmem:[%s2983 + $0x20] sm:$0xff]
  %v2989 = vld [vmem:[%s2983 + $0x28] sm:$0xff]
  %v2990 = vld [vmem:[%s2983 + $0x30] sm:$0x3]
  %s2991 = scalar_lea.vmem %s4, 3
  %v2992 = vld [vmem:[%s2991] sm:$0x1]
  %v2994 = vlaneseq
  %v2995 = vshrl.u32 %v2994, 7
  %v2996 = vsub.s32 0, %v2995
  %v2997 = vrot.slane %v2992, %v2996
  %v3000 = vsel %vm1017, %v2919, 0
  %v3003 = vsel %vm1017, %v2920, 0
  %v3006 = vsel %vm1017, %v2921, 0
  %v3009 = vsel %vm1017, %v2922, 0
  %v3012 = vsel %vm1017, %v2923, 0
  %v3015 = vsel %vm1017, %v2924, 0
  %v3018 = vsel %vm1017, %v2925, 0
  %v3021 = vsel %vm1017, %v2926, 0
  %v3024 = vsel %vm1017, %v2927, 0
  %v3027 = vsel %vm1017, %v2928, 0
  %v3030 = vsel %vm1017, %v2929, 0
  %v3033 = vsel %vm1017, %v2930, 0
  %v3036 = vsel %vm1017, %v2931, 0
  %v3039 = vsel %vm1017, %v2932, 0
  %v3042 = vsel %vm1017, %v2933, 0
  %v3045 = vsel %vm1017, %v2934, 0
  %v3048 = vsel %vm1017, %v2935, 0
  %v3051 = vsel %vm1017, %v2936, 0
  %v3054 = vsel %vm1017, %v2937, 0
  %v3057 = vsel %vm1017, %v2938, 0
  %v3060 = vsel %vm1017, %v2939, 0
  %v3063 = vsel %vm1017, %v2940, 0
  %v3066 = vsel %vm1017, %v2941, 0
  %v3069 = vsel %vm1017, %v2942, 0
  %v3072 = vsel %vm1017, %v2943, 0
  %v3075 = vsel %vm1017, %v2944, 0
  %v3078 = vsel %vm1017, %v2945, 0
  %v3081 = vsel %vm1017, %v2946, 0
  %v3084 = vsel %vm1017, %v2947, 0
  %v3087 = vsel %vm1017, %v2948, 0
  %v3090 = vsel %vm1017, %v2949, 0
  %v3093 = vsel %vm1017, %v2950, 0
  %v3096 = vsel %vm1017, %v2951, 0
  %v3099 = vsel %vm1017, %v2952, 0
  %v3102 = vsel %vm1017, %v2953, 0
  %v3105 = vsel %vm1017, %v2954, 0
  %v3108 = vsel %vm1017, %v2955, 0
  %v3111 = vsel %vm1017, %v2956, 0
  %v3114 = vsel %vm1017, %v2957, 0
  %v3117 = vsel %vm1017, %v2958, 0
  %v3120 = vsel %vm1017, %v2959, 0
  %v3123 = vsel %vm1017, %v2960, 0
  %v3126 = vsel %vm1017, %v2961, 0
  %v3129 = vsel %vm1017, %v2962, 0
  %v3132 = vsel %vm1017, %v2963, 0
  %v3135 = vsel %vm1017, %v2964, 0
  %v3138 = vsel %vm1017, %v2965, 0
  %v3141 = vsel %vm1017, %v2966, 0
  %v3144 = vsel %vm1017, %v2967, 0
  %v3147 = vsel %vm1017, %v2968, 0
  %v3150 = vsel %vm1017, %v2969, 0
  %v3153 = vsel %vm1017, %v2970, 0
  %v3156 = vsel %vm1017, %v2971, 0
  %v3159 = vsel %vm1017, %v2972, 0
  %v3162 = vsel %vm1017, %v2973, 0
  %v3165 = vsel %vm1017, %v2974, 0
  %v3168 = vsel %vm1017, %v2975, 0
  %v3171 = vsel %vm1017, %v2976, 0
  %v3174 = vsel %vm1017, %v2977, 0
  %v3177 = vsel %vm1017, %v2978, 0
  %v3180 = vsel %vm1017, %v2979, 0
  %v3183 = vsel %vm1017, %v2980, 0
  %v3186 = vsel %vm1017, %v2981, 0
  %v3189 = vsel %vm1017, %v2982, 0
  %v3192 = vsel %vm1210, %v2990, 0
  %3194 = vmatprep.subr.mxu0 0.0
  %3195 = vmatpush1.msra.mxu0 0.0
  %3196 = vmatprep.subr.mxu0 0.0
  %3197 = vmatpush1.msra.mxu0 0.0
  %3198 = vmatprep.subr.mxu0 0.0
  %3199 = vmatpush1.msra.mxu0 0.0
  %3200 = vmatprep.subr.mxu0 0.0
  %3201 = vmatpush1.msra.mxu0 0.0
  %3202 = vmatprep.subr.mxu0 0.0
  %3203 = vmatpush1.msra.mxu0 0.0
  %3204 = vmatprep.subr.mxu0 0.0
  %3205 = vmatpush1.msra.mxu0 0.0
  %3206 = vmatprep.subr.mxu0 0.0
  %3207 = vmatpush1.msra.mxu0 0.0
  %3208 = vmatprep.subr.mxu0 0.0
  %3209 = vmatpush1.msra.mxu0 0.0
  %3210 = vmatprep.subr.mxu0 0.0
  %3211 = vmatpush1.msra.mxu0 0.0
  %3212 = vmatprep.subr.mxu0 0.0
  %3213 = vmatpush1.msra.mxu0 %v3192
  %3214 = vmatprep.subr.mxu0 0.0
  %3215 = vmatpush1.msra.mxu0 %v2989
  %3216 = vmatprep.subr.mxu0 0.0
  %3217 = vmatpush1.msra.mxu0 %v2988
  %3218 = vmatprep.subr.mxu0 0.0
  %3219 = vmatpush1.msra.mxu0 %v2987
  %3220 = vmatprep.subr.mxu0 0.0
  %3221 = vmatpush1.msra.mxu0 %v2986
  %3222 = vmatprep.subr.mxu0 0.0
  %3223 = vmatpush1.msra.mxu0 %v2985
  %3224 = vmatprep.subr.mxu0 0.0
  %3225 = vmatpush1.msra.mxu0 %v2984
  %3226 = vmatprep.subr.mxu0 0.0
  %3227 = vmatpush2.msra.mxu0 0.0
  %3228 = vmatprep.subr.mxu0 0.0
  %3229 = vmatpush2.msra.mxu0 0.0
  %3230 = vmatprep.subr.mxu0 0.0
  %3231 = vmatpush2.msra.mxu0 0.0
  %3232 = vmatprep.subr.mxu0 0.0
  %3233 = vmatpush2.msra.mxu0 0.0
  %3234 = vmatprep.subr.mxu0 0.0
  %3235 = vmatpush2.msra.mxu0 0.0
  %3236 = vmatprep.subr.mxu0 0.0
  %3237 = vmatpush2.msra.mxu0 0.0
  %3238 = vmatprep.subr.mxu0 0.0
  %3239 = vmatpush2.msra.mxu0 0.0
  %3240 = vmatprep.subr.mxu0 0.0
  %3241 = vmatpush2.msra.mxu0 0.0
  %3242 = vmatprep.subr.mxu0 0.0
  %3243 = vmatpush2.msra.mxu0 0.0
  %3244 = vmatprep.subr.mxu0 0.0
  %3245 = vmatpush2.msra.mxu0 0.0
  %3246 = vmatprep.subr.mxu0 0.0
  %3247 = vmatpush2.msra.mxu0 0.0
  %3248 = vmatprep.subr.mxu0 0.0
  %3249 = vmatpush2.msra.mxu0 0.0
  %3250 = vmatprep.subr.mxu0 0.0
  %3251 = vmatpush2.msra.mxu0 0.0
  %3252 = vmatprep.subr.mxu0 0.0
  %3253 = vmatpush2.msra.mxu0 0.0
  %3254 = vmatprep.subr.mxu0 0.0
  %3255 = vmatpush2.msra.mxu0 0.0
  %3256 = vmatprep.subr.mxu0 0.0
  %3257 = vmatpush2.msra.mxu0 0.0
  %3258 = vmatprep.mubr.f32.mxu0 0.0
  %3259 = vmatmul.mubr.f32.gmra.mxu0 %v3000
  %v3260 = vpop.f32.mrf.mxu0
  %v3261 = vadd.f32 %v2997, %v3260
  %v3262 = vpop.f32.mrf.mxu0
  %3263 = vmatprep.mubr.f32.mxu0 0.0
  %3264 = vmatmul.mubr.f32.gmra.mxu0 %v3003
  %v3265 = vpop.f32.mrf.mxu0
  %v3266 = vadd.f32 %v2997, %v3265
  %v3267 = vpop.f32.mrf.mxu0
  %3268 = vmatprep.mubr.f32.mxu0 0.0
  %3269 = vmatmul.mubr.f32.gmra.mxu0 %v3006
  %v3270 = vpop.f32.mrf.mxu0
  %v3271 = vadd.f32 %v2997, %v3270
  %v3272 = vpop.f32.mrf.mxu0
  %3273 = vmatprep.mubr.f32.mxu0 0.0
  %3274 = vmatmul.mubr.f32.gmra.mxu0 %v3009
  %v3275 = vpop.f32.mrf.mxu0
  %v3276 = vadd.f32 %v2997, %v3275
  %v3277 = vpop.f32.mrf.mxu0
  %3278 = vmatprep.mubr.f32.mxu0 0.0
  %3279 = vmatmul.mubr.f32.gmra.mxu0 %v3012
  %v3280 = vpop.f32.mrf.mxu0
  %v3281 = vadd.f32 %v2997, %v3280
  %v3282 = vpop.f32.mrf.mxu0
  %3283 = vmatprep.mubr.f32.mxu0 0.0
  %3284 = vmatmul.mubr.f32.gmra.mxu0 %v3015
  %v3285 = vpop.f32.mrf.mxu0
  %v3286 = vadd.f32 %v2997, %v3285
  %v3287 = vpop.f32.mrf.mxu0
  %3288 = vmatprep.mubr.f32.mxu0 0.0
  %3289 = vmatmul.mubr.f32.gmra.mxu0 %v3018
  %v3290 = vpop.f32.mrf.mxu0
  %v3291 = vadd.f32 %v2997, %v3290
  %v3292 = vpop.f32.mrf.mxu0
  %3293 = vmatprep.mubr.f32.mxu0 0.0
  %3294 = vmatmul.mubr.f32.gmra.mxu0 %v3021
  %v3295 = vpop.f32.mrf.mxu0
  %v3296 = vadd.f32 %v2997, %v3295
  %v3297 = vpop.f32.mrf.mxu0
  %3298 = vmatprep.mubr.f32.mxu0 0.0
  %3299 = vmatmul.mubr.f32.gmra.mxu0 %v3024
  %v3300 = vpop.f32.mrf.mxu0
  %v3301 = vadd.f32 %v2997, %v3300
  %v3302 = vpop.f32.mrf.mxu0
  %3303 = vmatprep.mubr.f32.mxu0 0.0
  %3304 = vmatmul.mubr.f32.gmra.mxu0 %v3027
  %v3305 = vpop.f32.mrf.mxu0
  %v3306 = vadd.f32 %v2997, %v3305
  %v3307 = vpop.f32.mrf.mxu0
  %3308 = vmatprep.mubr.f32.mxu0 0.0
  %3309 = vmatmul.mubr.f32.gmra.mxu0 %v3030
  %v3310 = vpop.f32.mrf.mxu0
  %v3311 = vadd.f32 %v2997, %v3310
  %v3312 = vpop.f32.mrf.mxu0
  %3313 = vmatprep.mubr.f32.mxu0 0.0
  %3314 = vmatmul.mubr.f32.gmra.mxu0 %v3033
  %v3315 = vpop.f32.mrf.mxu0
  %v3316 = vadd.f32 %v2997, %v3315
  %v3317 = vpop.f32.mrf.mxu0
  %3318 = vmatprep.mubr.f32.mxu0 0.0
  %3319 = vmatmul.mubr.f32.gmra.mxu0 %v3036
  %v3320 = vpop.f32.mrf.mxu0
  %v3321 = vadd.f32 %v2997, %v3320
  %v3322 = vpop.f32.mrf.mxu0
  %3323 = vmatprep.mubr.f32.mxu0 0.0
  %3324 = vmatmul.mubr.f32.gmra.mxu0 %v3039
  %v3325 = vpop.f32.mrf.mxu0
  %v3326 = vadd.f32 %v2997, %v3325
  %v3327 = vpop.f32.mrf.mxu0
  %3328 = vmatprep.mubr.f32.mxu0 0.0
  %3329 = vmatmul.mubr.f32.gmra.mxu0 %v3042
  %v3330 = vpop.f32.mrf.mxu0
  %v3331 = vadd.f32 %v2997, %v3330
  %v3332 = vpop.f32.mrf.mxu0
  %3333 = vmatprep.mubr.f32.mxu0 0.0
  %3334 = vmatmul.mubr.f32.gmra.mxu0 %v3045
  %v3335 = vpop.f32.mrf.mxu0
  %v3336 = vadd.f32 %v2997, %v3335
  %v3337 = vpop.f32.mrf.mxu0
  %3338 = vmatprep.mubr.f32.mxu0 0.0
  %3339 = vmatmul.mubr.f32.gmra.mxu0 %v3048
  %v3340 = vpop.f32.mrf.mxu0
  %v3341 = vadd.f32 %v2997, %v3340
  %v3342 = vpop.f32.mrf.mxu0
  %3343 = vmatprep.mubr.f32.mxu0 0.0
  %3344 = vmatmul.mubr.f32.gmra.mxu0 %v3051
  %v3345 = vpop.f32.mrf.mxu0
  %v3346 = vadd.f32 %v2997, %v3345
  %v3347 = vpop.f32.mrf.mxu0
  %3348 = vmatprep.mubr.f32.mxu0 0.0
  %3349 = vmatmul.mubr.f32.gmra.mxu0 %v3054
  %v3350 = vpop.f32.mrf.mxu0
  %v3351 = vadd.f32 %v2997, %v3350
  %v3352 = vpop.f32.mrf.mxu0
  %3353 = vmatprep.mubr.f32.mxu0 0.0
  %3354 = vmatmul.mubr.f32.gmra.mxu0 %v3057
  %v3355 = vpop.f32.mrf.mxu0
  %v3356 = vadd.f32 %v2997, %v3355
  %v3357 = vpop.f32.mrf.mxu0
  %3358 = vmatprep.mubr.f32.mxu0 0.0
  %3359 = vmatmul.mubr.f32.gmra.mxu0 %v3060
  %v3360 = vpop.f32.mrf.mxu0
  %v3361 = vadd.f32 %v2997, %v3360
  %v3362 = vpop.f32.mrf.mxu0
  %3363 = vmatprep.mubr.f32.mxu0 0.0
  %3364 = vmatmul.mubr.f32.gmra.mxu0 %v3063
  %v3365 = vpop.f32.mrf.mxu0
  %v3366 = vadd.f32 %v2997, %v3365
  %v3367 = vpop.f32.mrf.mxu0
  %3368 = vmatprep.mubr.f32.mxu0 0.0
  %3369 = vmatmul.mubr.f32.gmra.mxu0 %v3066
  %v3370 = vpop.f32.mrf.mxu0
  %v3371 = vadd.f32 %v2997, %v3370
  %v3372 = vpop.f32.mrf.mxu0
  %3373 = vmatprep.mubr.f32.mxu0 0.0
  %3374 = vmatmul.mubr.f32.gmra.mxu0 %v3069
  %v3375 = vpop.f32.mrf.mxu0
  %v3376 = vadd.f32 %v2997, %v3375
  %v3377 = vpop.f32.mrf.mxu0
  %3378 = vmatprep.mubr.f32.mxu0 0.0
  %3379 = vmatmul.mubr.f32.gmra.mxu0 %v3072
  %v3380 = vpop.f32.mrf.mxu0
  %v3381 = vadd.f32 %v2997, %v3380
  %v3382 = vpop.f32.mrf.mxu0
  %3383 = vmatprep.mubr.f32.mxu0 0.0
  %3384 = vmatmul.mubr.f32.gmra.mxu0 %v3075
  %v3385 = vpop.f32.mrf.mxu0
  %v3386 = vadd.f32 %v2997, %v3385
  %v3387 = vpop.f32.mrf.mxu0
  %3388 = vmatprep.mubr.f32.mxu0 0.0
  %3389 = vmatmul.mubr.f32.gmra.mxu0 %v3078
  %v3390 = vpop.f32.mrf.mxu0
  %v3391 = vadd.f32 %v2997, %v3390
  %v3392 = vpop.f32.mrf.mxu0
  %3393 = vmatprep.mubr.f32.mxu0 0.0
  %3394 = vmatmul.mubr.f32.gmra.mxu0 %v3081
  %v3395 = vpop.f32.mrf.mxu0
  %v3396 = vadd.f32 %v2997, %v3395
  %v3397 = vpop.f32.mrf.mxu0
  %3398 = vmatprep.mubr.f32.mxu0 0.0
  %3399 = vmatmul.mubr.f32.gmra.mxu0 %v3084
  %v3400 = vpop.f32.mrf.mxu0
  %v3401 = vadd.f32 %v2997, %v3400
  %v3402 = vpop.f32.mrf.mxu0
  %3403 = vmatprep.mubr.f32.mxu0 0.0
  %3404 = vmatmul.mubr.f32.gmra.mxu0 %v3087
  %v3405 = vpop.f32.mrf.mxu0
  %v3406 = vadd.f32 %v2997, %v3405
  %v3407 = vpop.f32.mrf.mxu0
  %3408 = vmatprep.mubr.f32.mxu0 0.0
  %3409 = vmatmul.mubr.f32.gmra.mxu0 %v3090
  %v3410 = vpop.f32.mrf.mxu0
  %v3411 = vadd.f32 %v2997, %v3410
  %v3412 = vpop.f32.mrf.mxu0
  %3413 = vmatprep.mubr.f32.mxu0 0.0
  %3414 = vmatmul.mubr.f32.gmra.mxu0 %v3093
  %v3415 = vpop.f32.mrf.mxu0
  %v3416 = vadd.f32 %v2997, %v3415
  %v3417 = vpop.f32.mrf.mxu0
  %3418 = vmatprep.mubr.f32.mxu0 0.0
  %3419 = vmatmul.mubr.f32.gmra.mxu0 %v3096
  %v3420 = vpop.f32.mrf.mxu0
  %v3421 = vadd.f32 %v2997, %v3420
  %v3422 = vpop.f32.mrf.mxu0
  %3423 = vmatprep.mubr.f32.mxu0 0.0
  %3424 = vmatmul.mubr.f32.gmra.mxu0 %v3099
  %v3425 = vpop.f32.mrf.mxu0
  %v3426 = vadd.f32 %v2997, %v3425
  %v3427 = vpop.f32.mrf.mxu0
  %3428 = vmatprep.mubr.f32.mxu0 0.0
  %3429 = vmatmul.mubr.f32.gmra.mxu0 %v3102
  %v3430 = vpop.f32.mrf.mxu0
  %v3431 = vadd.f32 %v2997, %v3430
  %v3432 = vpop.f32.mrf.mxu0
  %3433 = vmatprep.mubr.f32.mxu0 0.0
  %3434 = vmatmul.mubr.f32.gmra.mxu0 %v3105
  %v3435 = vpop.f32.mrf.mxu0
  %v3436 = vadd.f32 %v2997, %v3435
  %v3437 = vpop.f32.mrf.mxu0
  %3438 = vmatprep.mubr.f32.mxu0 0.0
  %3439 = vmatmul.mubr.f32.gmra.mxu0 %v3108
  %v3440 = vpop.f32.mrf.mxu0
  %v3441 = vadd.f32 %v2997, %v3440
  %v3442 = vpop.f32.mrf.mxu0
  %3443 = vmatprep.mubr.f32.mxu0 0.0
  %3444 = vmatmul.mubr.f32.gmra.mxu0 %v3111
  %v3445 = vpop.f32.mrf.mxu0
  %v3446 = vadd.f32 %v2997, %v3445
  %v3447 = vpop.f32.mrf.mxu0
  %3448 = vmatprep.mubr.f32.mxu0 0.0
  %3449 = vmatmul.mubr.f32.gmra.mxu0 %v3114
  %v3450 = vpop.f32.mrf.mxu0
  %v3451 = vadd.f32 %v2997, %v3450
  %v3452 = vpop.f32.mrf.mxu0
  %3453 = vmatprep.mubr.f32.mxu0 0.0
  %3454 = vmatmul.mubr.f32.gmra.mxu0 %v3117
  %v3455 = vpop.f32.mrf.mxu0
  %v3456 = vadd.f32 %v2997, %v3455
  %v3457 = vpop.f32.mrf.mxu0
  %3458 = vmatprep.mubr.f32.mxu0 0.0
  %3459 = vmatmul.mubr.f32.gmra.mxu0 %v3120
  %v3460 = vpop.f32.mrf.mxu0
  %v3461 = vadd.f32 %v2997, %v3460
  %v3462 = vpop.f32.mrf.mxu0
  %3463 = vmatprep.mubr.f32.mxu0 0.0
  %3464 = vmatmul.mubr.f32.gmra.mxu0 %v3123
  %v3465 = vpop.f32.mrf.mxu0
  %v3466 = vadd.f32 %v2997, %v3465
  %v3467 = vpop.f32.mrf.mxu0
  %3468 = vmatprep.mubr.f32.mxu0 0.0
  %3469 = vmatmul.mubr.f32.gmra.mxu0 %v3126
  %v3470 = vpop.f32.mrf.mxu0
  %v3471 = vadd.f32 %v2997, %v3470
  %v3472 = vpop.f32.mrf.mxu0
  %3473 = vmatprep.mubr.f32.mxu0 0.0
  %3474 = vmatmul.mubr.f32.gmra.mxu0 %v3129
  %v3475 = vpop.f32.mrf.mxu0
  %v3476 = vadd.f32 %v2997, %v3475
  %v3477 = vpop.f32.mrf.mxu0
  %3478 = vmatprep.mubr.f32.mxu0 0.0
  %3479 = vmatmul.mubr.f32.gmra.mxu0 %v3132
  %v3480 = vpop.f32.mrf.mxu0
  %v3481 = vadd.f32 %v2997, %v3480
  %v3482 = vpop.f32.mrf.mxu0
  %3483 = vmatprep.mubr.f32.mxu0 0.0
  %3484 = vmatmul.mubr.f32.gmra.mxu0 %v3135
  %v3485 = vpop.f32.mrf.mxu0
  %v3486 = vadd.f32 %v2997, %v3485
  %v3487 = vpop.f32.mrf.mxu0
  %3488 = vmatprep.mubr.f32.mxu0 0.0
  %3489 = vmatmul.mubr.f32.gmra.mxu0 %v3138
  %v3490 = vpop.f32.mrf.mxu0
  %v3491 = vadd.f32 %v2997, %v3490
  %v3492 = vpop.f32.mrf.mxu0
  %3493 = vmatprep.mubr.f32.mxu0 0.0
  %3494 = vmatmul.mubr.f32.gmra.mxu0 %v3141
  %v3495 = vpop.f32.mrf.mxu0
  %v3496 = vadd.f32 %v2997, %v3495
  %v3497 = vpop.f32.mrf.mxu0
  %3498 = vmatprep.mubr.f32.mxu0 0.0
  %3499 = vmatmul.mubr.f32.gmra.mxu0 %v3144
  %v3500 = vpop.f32.mrf.mxu0
  %v3501 = vadd.f32 %v2997, %v3500
  %v3502 = vpop.f32.mrf.mxu0
  %3503 = vmatprep.mubr.f32.mxu0 0.0
  %3504 = vmatmul.mubr.f32.gmra.mxu0 %v3147
  %v3505 = vpop.f32.mrf.mxu0
  %v3506 = vadd.f32 %v2997, %v3505
  %v3507 = vpop.f32.mrf.mxu0
  %3508 = vmatprep.mubr.f32.mxu0 0.0
  %3509 = vmatmul.mubr.f32.gmra.mxu0 %v3150
  %v3510 = vpop.f32.mrf.mxu0
  %v3511 = vadd.f32 %v2997, %v3510
  %v3512 = vpop.f32.mrf.mxu0
  %3513 = vmatprep.mubr.f32.mxu0 0.0
  %3514 = vmatmul.mubr.f32.gmra.mxu0 %v3153
  %v3515 = vpop.f32.mrf.mxu0
  %v3516 = vadd.f32 %v2997, %v3515
  %v3517 = vpop.f32.mrf.mxu0
  %3518 = vmatprep.mubr.f32.mxu0 0.0
  %3519 = vmatmul.mubr.f32.gmra.mxu0 %v3156
  %v3520 = vpop.f32.mrf.mxu0
  %v3521 = vadd.f32 %v2997, %v3520
  %v3522 = vpop.f32.mrf.mxu0
  %3523 = vmatprep.mubr.f32.mxu0 0.0
  %3524 = vmatmul.mubr.f32.gmra.mxu0 %v3159
  %v3525 = vpop.f32.mrf.mxu0
  %v3526 = vadd.f32 %v2997, %v3525
  %v3527 = vpop.f32.mrf.mxu0
  %3528 = vmatprep.mubr.f32.mxu0 0.0
  %3529 = vmatmul.mubr.f32.gmra.mxu0 %v3162
  %v3530 = vpop.f32.mrf.mxu0
  %v3531 = vadd.f32 %v2997, %v3530
  %v3532 = vpop.f32.mrf.mxu0
  %3533 = vmatprep.mubr.f32.mxu0 0.0
  %3534 = vmatmul.mubr.f32.gmra.mxu0 %v3165
  %v3535 = vpop.f32.mrf.mxu0
  %v3536 = vadd.f32 %v2997, %v3535
  %v3537 = vpop.f32.mrf.mxu0
  %3538 = vmatprep.mubr.f32.mxu0 0.0
  %3539 = vmatmul.mubr.f32.gmra.mxu0 %v3168
  %v3540 = vpop.f32.mrf.mxu0
  %v3541 = vadd.f32 %v2997, %v3540
  %v3542 = vpop.f32.mrf.mxu0
  %3543 = vmatprep.mubr.f32.mxu0 0.0
  %3544 = vmatmul.mubr.f32.gmra.mxu0 %v3171
  %v3545 = vpop.f32.mrf.mxu0
  %v3546 = vadd.f32 %v2997, %v3545
  %v3547 = vpop.f32.mrf.mxu0
  %3548 = vmatprep.mubr.f32.mxu0 0.0
  %3549 = vmatmul.mubr.f32.gmra.mxu0 %v3174
  %v3550 = vpop.f32.mrf.mxu0
  %v3551 = vadd.f32 %v2997, %v3550
  %v3552 = vpop.f32.mrf.mxu0
  %3553 = vmatprep.mubr.f32.mxu0 0.0
  %3554 = vmatmul.mubr.f32.gmra.mxu0 %v3177
  %v3555 = vpop.f32.mrf.mxu0
  %v3556 = vadd.f32 %v2997, %v3555
  %v3557 = vpop.f32.mrf.mxu0
  %3558 = vmatprep.mubr.f32.mxu0 0.0
  %3559 = vmatmul.mubr.f32.gmra.mxu0 %v3180
  %v3560 = vpop.f32.mrf.mxu0
  %v3561 = vadd.f32 %v2997, %v3560
  %v3562 = vpop.f32.mrf.mxu0
  %3563 = vmatprep.mubr.f32.mxu0 0.0
  %3564 = vmatmul.mubr.f32.gmra.mxu0 %v3183
  %v3565 = vpop.f32.mrf.mxu0
  %v3566 = vadd.f32 %v2997, %v3565
  %v3567 = vpop.f32.mrf.mxu0
  %3568 = vmatprep.mubr.f32.mxu0 0.0
  %3569 = vmatmul.mubr.f32.gmra.mxu0 %v3186
  %v3570 = vpop.f32.mrf.mxu0
  %v3571 = vadd.f32 %v2997, %v3570
  %v3572 = vpop.f32.mrf.mxu0
  %3573 = vmatprep.mubr.f32.mxu0 0.0
  %3574 = vmatmul.mubr.f32.gmra.mxu0 %v3189
  %v3575 = vpop.f32.mrf.mxu0
  %v3576 = vadd.f32 %v2997, %v3575
  %v3577 = vpop.f32.mrf.mxu0
  %3578 = vdwg.mxu0
  %v3579 = vtanh.pop %v3261
  %v3580 = vtanh.pop %v3266
  %v3581 = vtanh.pop %v3271
  %v3582 = vtanh.pop %v3276
  %v3583 = vtanh.pop %v3281
  %v3584 = vtanh.pop %v3286
  %v3585 = vtanh.pop %v3291
  %v3586 = vtanh.pop %v3296
  %v3587 = vtanh.pop %v3301
  %v3588 = vtanh.pop %v3306
  %v3589 = vtanh.pop %v3311
  %v3590 = vtanh.pop %v3316
  %v3591 = vtanh.pop %v3321
  %v3592 = vtanh.pop %v3326
  %v3593 = vtanh.pop %v3331
  %v3594 = vtanh.pop %v3336
  %v3595 = vtanh.pop %v3341
  %v3596 = vtanh.pop %v3346
  %v3597 = vtanh.pop %v3351
  %v3598 = vtanh.pop %v3356
  %v3599 = vtanh.pop %v3361
  %v3600 = vtanh.pop %v3366
  %v3601 = vtanh.pop %v3371
  %v3602 = vtanh.pop %v3376
  %v3603 = vtanh.pop %v3381
  %v3604 = vtanh.pop %v3386
  %v3605 = vtanh.pop %v3391
  %v3606 = vtanh.pop %v3396
  %v3607 = vtanh.pop %v3401
  %v3608 = vtanh.pop %v3406
  %v3609 = vtanh.pop %v3411
  %v3610 = vtanh.pop %v3416
  %v3611 = vtanh.pop %v3421
  %v3612 = vtanh.pop %v3426
  %v3613 = vtanh.pop %v3431
  %v3614 = vtanh.pop %v3436
  %v3615 = vtanh.pop %v3441
  %v3616 = vtanh.pop %v3446
  %v3617 = vtanh.pop %v3451
  %v3618 = vtanh.pop %v3456
  %v3619 = vtanh.pop %v3461
  %v3620 = vtanh.pop %v3466
  %v3621 = vtanh.pop %v3471
  %v3622 = vtanh.pop %v3476
  %v3623 = vtanh.pop %v3481
  %v3624 = vtanh.pop %v3486
  %v3625 = vtanh.pop %v3491
  %v3626 = vtanh.pop %v3496
  %v3627 = vtanh.pop %v3501
  %v3628 = vtanh.pop %v3506
  %v3629 = vtanh.pop %v3511
  %v3630 = vtanh.pop %v3516
  %v3631 = vtanh.pop %v3521
  %v3632 = vtanh.pop %v3526
  %v3633 = vtanh.pop %v3531
  %v3634 = vtanh.pop %v3536
  %v3635 = vtanh.pop %v3541
  %v3636 = vtanh.pop %v3546
  %v3637 = vtanh.pop %v3551
  %v3638 = vtanh.pop %v3556
  %v3639 = vtanh.pop %v3561
  %v3640 = vtanh.pop %v3566
  %v3641 = vtanh.pop %v3571
  %v3642 = vtanh.pop %v3576
  %s3643 = scalar_lea.vmem %s3, 224
  %v3644 = vld [vmem:[%s3643] sm:$0xff]
  %v3645 = vld [vmem:[%s3643 + $0x8] sm:$0xff]
  %v3646 = vld [vmem:[%s3643 + $0x10] sm:$0xff]
  %v3647 = vld [vmem:[%s3643 + $0x18] sm:$0xff]
  %v3648 = vld [vmem:[%s3643 + $0x20] sm:$0xff]
  %v3649 = vld [vmem:[%s3643 + $0x28] sm:$0xff]
  %v3650 = vld [vmem:[%s3643 + $0x30] sm:$0x3]
  %s3651 = scalar_lea.vmem %s4, 4
  %v3652 = vld [vmem:[%s3651] sm:$0x1]
  %v3654 = vlaneseq
  %v3655 = vshrl.u32 %v3654, 7
  %v3656 = vsub.s32 0, %v3655
  %v3657 = vrot.slane %v3652, %v3656
  %v3660 = vsel %vm1017, %v3579, 0
  %v3663 = vsel %vm1017, %v3580, 0
  %v3666 = vsel %vm1017, %v3581, 0
  %v3669 = vsel %vm1017, %v3582, 0
  %v3672 = vsel %vm1017, %v3583, 0
  %v3675 = vsel %vm1017, %v3584, 0
  %v3678 = vsel %vm1017, %v3585, 0
  %v3681 = vsel %vm1017, %v3586, 0
  %v3684 = vsel %vm1017, %v3587, 0
  %v3687 = vsel %vm1017, %v3588, 0
  %v3690 = vsel %vm1017, %v3589, 0
  %v3693 = vsel %vm1017, %v3590, 0
  %v3696 = vsel %vm1017, %v3591, 0
  %v3699 = vsel %vm1017, %v3592, 0
  %v3702 = vsel %vm1017, %v3593, 0
  %v3705 = vsel %vm1017, %v3594, 0
  %v3708 = vsel %vm1017, %v3595, 0
  %v3711 = vsel %vm1017, %v3596, 0
  %v3714 = vsel %vm1017, %v3597, 0
  %v3717 = vsel %vm1017, %v3598, 0
  %v3720 = vsel %vm1017, %v3599, 0
  %v3723 = vsel %vm1017, %v3600, 0
  %v3726 = vsel %vm1017, %v3601, 0
  %v3729 = vsel %vm1017, %v3602, 0
  %v3732 = vsel %vm1017, %v3603, 0
  %v3735 = vsel %vm1017, %v3604, 0
  %v3738 = vsel %vm1017, %v3605, 0
  %v3741 = vsel %vm1017, %v3606, 0
  %v3744 = vsel %vm1017, %v3607, 0
  %v3747 = vsel %vm1017, %v3608, 0
  %v3750 = vsel %vm1017, %v3609, 0
  %v3753 = vsel %vm1017, %v3610, 0
  %v3756 = vsel %vm1017, %v3611, 0
  %v3759 = vsel %vm1017, %v3612, 0
  %v3762 = vsel %vm1017, %v3613, 0
  %v3765 = vsel %vm1017, %v3614, 0
  %v3768 = vsel %vm1017, %v3615, 0
  %v3771 = vsel %vm1017, %v3616, 0
  %v3774 = vsel %vm1017, %v3617, 0
  %v3777 = vsel %vm1017, %v3618, 0
  %v3780 = vsel %vm1017, %v3619, 0
  %v3783 = vsel %vm1017, %v3620, 0
  %v3786 = vsel %vm1017, %v3621, 0
  %v3789 = vsel %vm1017, %v3622, 0
  %v3792 = vsel %vm1017, %v3623, 0
  %v3795 = vsel %vm1017, %v3624, 0
  %v3798 = vsel %vm1017, %v3625, 0
  %v3801 = vsel %vm1017, %v3626, 0
  %v3804 = vsel %vm1017, %v3627, 0
  %v3807 = vsel %vm1017, %v3628, 0
  %v3810 = vsel %vm1017, %v3629, 0
  %v3813 = vsel %vm1017, %v3630, 0
  %v3816 = vsel %vm1017, %v3631, 0
  %v3819 = vsel %vm1017, %v3632, 0
  %v3822 = vsel %vm1017, %v3633, 0
  %v3825 = vsel %vm1017, %v3634, 0
  %v3828 = vsel %vm1017, %v3635, 0
  %v3831 = vsel %vm1017, %v3636, 0
  %v3834 = vsel %vm1017, %v3637, 0
  %v3837 = vsel %vm1017, %v3638, 0
  %v3840 = vsel %vm1017, %v3639, 0
  %v3843 = vsel %vm1017, %v3640, 0
  %v3846 = vsel %vm1017, %v3641, 0
  %v3849 = vsel %vm1017, %v3642, 0
  %v3852 = vsel %vm1210, %v3650, 0
  %3854 = vmatprep.subr.mxu0 0.0
  %3855 = vmatpush1.msra.mxu0 0.0
  %3856 = vmatprep.subr.mxu0 0.0
  %3857 = vmatpush1.msra.mxu0 0.0
  %3858 = vmatprep.subr.mxu0 0.0
  %3859 = vmatpush1.msra.mxu0 0.0
  %3860 = vmatprep.subr.mxu0 0.0
  %3861 = vmatpush1.msra.mxu0 0.0
  %3862 = vmatprep.subr.mxu0 0.0
  %3863 = vmatpush1.msra.mxu0 0.0
  %3864 = vmatprep.subr.mxu0 0.0
  %3865 = vmatpush1.msra.mxu0 0.0
  %3866 = vmatprep.subr.mxu0 0.0
  %3867 = vmatpush1.msra.mxu0 0.0
  %3868 = vmatprep.subr.mxu0 0.0
  %3869 = vmatpush1.msra.mxu0 0.0
  %3870 = vmatprep.subr.mxu0 0.0
  %3871 = vmatpush1.msra.mxu0 0.0
  %3872 = vmatprep.subr.mxu0 0.0
  %3873 = vmatpush1.msra.mxu0 %v3852
  %3874 = vmatprep.subr.mxu0 0.0
  %3875 = vmatpush1.msra.mxu0 %v3649
  %3876 = vmatprep.subr.mxu0 0.0
  %3877 = vmatpush1.msra.mxu0 %v3648
  %3878 = vmatprep.subr.mxu0 0.0
  %3879 = vmatpush1.msra.mxu0 %v3647
  %3880 = vmatprep.subr.mxu0 0.0
  %3881 = vmatpush1.msra.mxu0 %v3646
  %3882 = vmatprep.subr.mxu0 0.0
  %3883 = vmatpush1.msra.mxu0 %v3645
  %3884 = vmatprep.subr.mxu0 0.0
  %3885 = vmatpush1.msra.mxu0 %v3644
  %3886 = vmatprep.subr.mxu0 0.0
  %3887 = vmatpush2.msra.mxu0 0.0
  %3888 = vmatprep.subr.mxu0 0.0
  %3889 = vmatpush2.msra.mxu0 0.0
  %3890 = vmatprep.subr.mxu0 0.0
  %3891 = vmatpush2.msra.mxu0 0.0
  %3892 = vmatprep.subr.mxu0 0.0
  %3893 = vmatpush2.msra.mxu0 0.0
  %3894 = vmatprep.subr.mxu0 0.0
  %3895 = vmatpush2.msra.mxu0 0.0
  %3896 = vmatprep.subr.mxu0 0.0
  %3897 = vmatpush2.msra.mxu0 0.0
  %3898 = vmatprep.subr.mxu0 0.0
  %3899 = vmatpush2.msra.mxu0 0.0
  %3900 = vmatprep.subr.mxu0 0.0
  %3901 = vmatpush2.msra.mxu0 0.0
  %3902 = vmatprep.subr.mxu0 0.0
  %3903 = vmatpush2.msra.mxu0 0.0
  %3904 = vmatprep.subr.mxu0 0.0
  %3905 = vmatpush2.msra.mxu0 0.0
  %3906 = vmatprep.subr.mxu0 0.0
  %3907 = vmatpush2.msra.mxu0 0.0
  %3908 = vmatprep.subr.mxu0 0.0
  %3909 = vmatpush2.msra.mxu0 0.0
  %3910 = vmatprep.subr.mxu0 0.0
  %3911 = vmatpush2.msra.mxu0 0.0
  %3912 = vmatprep.subr.mxu0 0.0
  %3913 = vmatpush2.msra.mxu0 0.0
  %3914 = vmatprep.subr.mxu0 0.0
  %3915 = vmatpush2.msra.mxu0 0.0
  %3916 = vmatprep.subr.mxu0 0.0
  %3917 = vmatpush2.msra.mxu0 0.0
  %3918 = vmatprep.mubr.f32.mxu0 0.0
  %3919 = vmatmul.mubr.f32.gmra.mxu0 %v3660
  %v3920 = vpop.f32.mrf.mxu0
  %v3921 = vadd.f32 %v3657, %v3920
  %v3922 = vpop.f32.mrf.mxu0
  %3923 = vmatprep.mubr.f32.mxu0 0.0
  %3924 = vmatmul.mubr.f32.gmra.mxu0 %v3663
  %v3925 = vpop.f32.mrf.mxu0
  %v3926 = vadd.f32 %v3657, %v3925
  %v3927 = vpop.f32.mrf.mxu0
  %3928 = vmatprep.mubr.f32.mxu0 0.0
  %3929 = vmatmul.mubr.f32.gmra.mxu0 %v3666
  %v3930 = vpop.f32.mrf.mxu0
  %v3931 = vadd.f32 %v3657, %v3930
  %v3932 = vpop.f32.mrf.mxu0
  %3933 = vmatprep.mubr.f32.mxu0 0.0
  %3934 = vmatmul.mubr.f32.gmra.mxu0 %v3669
  %v3935 = vpop.f32.mrf.mxu0
  %v3936 = vadd.f32 %v3657, %v3935
  %v3937 = vpop.f32.mrf.mxu0
  %3938 = vmatprep.mubr.f32.mxu0 0.0
  %3939 = vmatmul.mubr.f32.gmra.mxu0 %v3672
  %v3940 = vpop.f32.mrf.mxu0
  %v3941 = vadd.f32 %v3657, %v3940
  %v3942 = vpop.f32.mrf.mxu0
  %3943 = vmatprep.mubr.f32.mxu0 0.0
  %3944 = vmatmul.mubr.f32.gmra.mxu0 %v3675
  %v3945 = vpop.f32.mrf.mxu0
  %v3946 = vadd.f32 %v3657, %v3945
  %v3947 = vpop.f32.mrf.mxu0
  %3948 = vmatprep.mubr.f32.mxu0 0.0
  %3949 = vmatmul.mubr.f32.gmra.mxu0 %v3678
  %v3950 = vpop.f32.mrf.mxu0
  %v3951 = vadd.f32 %v3657, %v3950
  %v3952 = vpop.f32.mrf.mxu0
  %3953 = vmatprep.mubr.f32.mxu0 0.0
  %3954 = vmatmul.mubr.f32.gmra.mxu0 %v3681
  %v3955 = vpop.f32.mrf.mxu0
  %v3956 = vadd.f32 %v3657, %v3955
  %v3957 = vpop.f32.mrf.mxu0
  %3958 = vmatprep.mubr.f32.mxu0 0.0
  %3959 = vmatmul.mubr.f32.gmra.mxu0 %v3684
  %v3960 = vpop.f32.mrf.mxu0
  %v3961 = vadd.f32 %v3657, %v3960
  %v3962 = vpop.f32.mrf.mxu0
  %3963 = vmatprep.mubr.f32.mxu0 0.0
  %3964 = vmatmul.mubr.f32.gmra.mxu0 %v3687
  %v3965 = vpop.f32.mrf.mxu0
  %v3966 = vadd.f32 %v3657, %v3965
  %v3967 = vpop.f32.mrf.mxu0
  %3968 = vmatprep.mubr.f32.mxu0 0.0
  %3969 = vmatmul.mubr.f32.gmra.mxu0 %v3690
  %v3970 = vpop.f32.mrf.mxu0
  %v3971 = vadd.f32 %v3657, %v3970
  %v3972 = vpop.f32.mrf.mxu0
  %3973 = vmatprep.mubr.f32.mxu0 0.0
  %3974 = vmatmul.mubr.f32.gmra.mxu0 %v3693
  %v3975 = vpop.f32.mrf.mxu0
  %v3976 = vadd.f32 %v3657, %v3975
  %v3977 = vpop.f32.mrf.mxu0
  %3978 = vmatprep.mubr.f32.mxu0 0.0
  %3979 = vmatmul.mubr.f32.gmra.mxu0 %v3696
  %v3980 = vpop.f32.mrf.mxu0
  %v3981 = vadd.f32 %v3657, %v3980
  %v3982 = vpop.f32.mrf.mxu0
  %3983 = vmatprep.mubr.f32.mxu0 0.0
  %3984 = vmatmul.mubr.f32.gmra.mxu0 %v3699
  %v3985 = vpop.f32.mrf.mxu0
  %v3986 = vadd.f32 %v3657, %v3985
  %v3987 = vpop.f32.mrf.mxu0
  %3988 = vmatprep.mubr.f32.mxu0 0.0
  %3989 = vmatmul.mubr.f32.gmra.mxu0 %v3702
  %v3990 = vpop.f32.mrf.mxu0
  %v3991 = vadd.f32 %v3657, %v3990
  %v3992 = vpop.f32.mrf.mxu0
  %3993 = vmatprep.mubr.f32.mxu0 0.0
  %3994 = vmatmul.mubr.f32.gmra.mxu0 %v3705
  %v3995 = vpop.f32.mrf.mxu0
  %v3996 = vadd.f32 %v3657, %v3995
  %v3997 = vpop.f32.mrf.mxu0
  %3998 = vmatprep.mubr.f32.mxu0 0.0
  %3999 = vmatmul.mubr.f32.gmra.mxu0 %v3708
  %v4000 = vpop.f32.mrf.mxu0
  %v4001 = vadd.f32 %v3657, %v4000
  %v4002 = vpop.f32.mrf.mxu0
  %4003 = vmatprep.mubr.f32.mxu0 0.0
  %4004 = vmatmul.mubr.f32.gmra.mxu0 %v3711
  %v4005 = vpop.f32.mrf.mxu0
  %v4006 = vadd.f32 %v3657, %v4005
  %v4007 = vpop.f32.mrf.mxu0
  %4008 = vmatprep.mubr.f32.mxu0 0.0
  %4009 = vmatmul.mubr.f32.gmra.mxu0 %v3714
  %v4010 = vpop.f32.mrf.mxu0
  %v4011 = vadd.f32 %v3657, %v4010
  %v4012 = vpop.f32.mrf.mxu0
  %4013 = vmatprep.mubr.f32.mxu0 0.0
  %4014 = vmatmul.mubr.f32.gmra.mxu0 %v3717
  %v4015 = vpop.f32.mrf.mxu0
  %v4016 = vadd.f32 %v3657, %v4015
  %v4017 = vpop.f32.mrf.mxu0
  %4018 = vmatprep.mubr.f32.mxu0 0.0
  %4019 = vmatmul.mubr.f32.gmra.mxu0 %v3720
  %v4020 = vpop.f32.mrf.mxu0
  %v4021 = vadd.f32 %v3657, %v4020
  %v4022 = vpop.f32.mrf.mxu0
  %4023 = vmatprep.mubr.f32.mxu0 0.0
  %4024 = vmatmul.mubr.f32.gmra.mxu0 %v3723
  %v4025 = vpop.f32.mrf.mxu0
  %v4026 = vadd.f32 %v3657, %v4025
  %v4027 = vpop.f32.mrf.mxu0
  %4028 = vmatprep.mubr.f32.mxu0 0.0
  %4029 = vmatmul.mubr.f32.gmra.mxu0 %v3726
  %v4030 = vpop.f32.mrf.mxu0
  %v4031 = vadd.f32 %v3657, %v4030
  %v4032 = vpop.f32.mrf.mxu0
  %4033 = vmatprep.mubr.f32.mxu0 0.0
  %4034 = vmatmul.mubr.f32.gmra.mxu0 %v3729
  %v4035 = vpop.f32.mrf.mxu0
  %v4036 = vadd.f32 %v3657, %v4035
  %v4037 = vpop.f32.mrf.mxu0
  %4038 = vmatprep.mubr.f32.mxu0 0.0
  %4039 = vmatmul.mubr.f32.gmra.mxu0 %v3732
  %v4040 = vpop.f32.mrf.mxu0
  %v4041 = vadd.f32 %v3657, %v4040
  %v4042 = vpop.f32.mrf.mxu0
  %4043 = vmatprep.mubr.f32.mxu0 0.0
  %4044 = vmatmul.mubr.f32.gmra.mxu0 %v3735
  %v4045 = vpop.f32.mrf.mxu0
  %v4046 = vadd.f32 %v3657, %v4045
  %v4047 = vpop.f32.mrf.mxu0
  %4048 = vmatprep.mubr.f32.mxu0 0.0
  %4049 = vmatmul.mubr.f32.gmra.mxu0 %v3738
  %v4050 = vpop.f32.mrf.mxu0
  %v4051 = vadd.f32 %v3657, %v4050
  %v4052 = vpop.f32.mrf.mxu0
  %4053 = vmatprep.mubr.f32.mxu0 0.0
  %4054 = vmatmul.mubr.f32.gmra.mxu0 %v3741
  %v4055 = vpop.f32.mrf.mxu0
  %v4056 = vadd.f32 %v3657, %v4055
  %v4057 = vpop.f32.mrf.mxu0
  %4058 = vmatprep.mubr.f32.mxu0 0.0
  %4059 = vmatmul.mubr.f32.gmra.mxu0 %v3744
  %v4060 = vpop.f32.mrf.mxu0
  %v4061 = vadd.f32 %v3657, %v4060
  %v4062 = vpop.f32.mrf.mxu0
  %4063 = vmatprep.mubr.f32.mxu0 0.0
  %4064 = vmatmul.mubr.f32.gmra.mxu0 %v3747
  %v4065 = vpop.f32.mrf.mxu0
  %v4066 = vadd.f32 %v3657, %v4065
  %v4067 = vpop.f32.mrf.mxu0
  %4068 = vmatprep.mubr.f32.mxu0 0.0
  %4069 = vmatmul.mubr.f32.gmra.mxu0 %v3750
  %v4070 = vpop.f32.mrf.mxu0
  %v4071 = vadd.f32 %v3657, %v4070
  %v4072 = vpop.f32.mrf.mxu0
  %4073 = vmatprep.mubr.f32.mxu0 0.0
  %4074 = vmatmul.mubr.f32.gmra.mxu0 %v3753
  %v4075 = vpop.f32.mrf.mxu0
  %v4076 = vadd.f32 %v3657, %v4075
  %v4077 = vpop.f32.mrf.mxu0
  %4078 = vmatprep.mubr.f32.mxu0 0.0
  %4079 = vmatmul.mubr.f32.gmra.mxu0 %v3756
  %v4080 = vpop.f32.mrf.mxu0
  %v4081 = vadd.f32 %v3657, %v4080
  %v4082 = vpop.f32.mrf.mxu0
  %4083 = vmatprep.mubr.f32.mxu0 0.0
  %4084 = vmatmul.mubr.f32.gmra.mxu0 %v3759
  %v4085 = vpop.f32.mrf.mxu0
  %v4086 = vadd.f32 %v3657, %v4085
  %v4087 = vpop.f32.mrf.mxu0
  %4088 = vmatprep.mubr.f32.mxu0 0.0
  %4089 = vmatmul.mubr.f32.gmra.mxu0 %v3762
  %v4090 = vpop.f32.mrf.mxu0
  %v4091 = vadd.f32 %v3657, %v4090
  %v4092 = vpop.f32.mrf.mxu0
  %4093 = vmatprep.mubr.f32.mxu0 0.0
  %4094 = vmatmul.mubr.f32.gmra.mxu0 %v3765
  %v4095 = vpop.f32.mrf.mxu0
  %v4096 = vadd.f32 %v3657, %v4095
  %v4097 = vpop.f32.mrf.mxu0
  %4098 = vmatprep.mubr.f32.mxu0 0.0
  %4099 = vmatmul.mubr.f32.gmra.mxu0 %v3768
  %v4100 = vpop.f32.mrf.mxu0
  %v4101 = vadd.f32 %v3657, %v4100
  %v4102 = vpop.f32.mrf.mxu0
  %4103 = vmatprep.mubr.f32.mxu0 0.0
  %4104 = vmatmul.mubr.f32.gmra.mxu0 %v3771
  %v4105 = vpop.f32.mrf.mxu0
  %v4106 = vadd.f32 %v3657, %v4105
  %v4107 = vpop.f32.mrf.mxu0
  %4108 = vmatprep.mubr.f32.mxu0 0.0
  %4109 = vmatmul.mubr.f32.gmra.mxu0 %v3774
  %v4110 = vpop.f32.mrf.mxu0
  %v4111 = vadd.f32 %v3657, %v4110
  %v4112 = vpop.f32.mrf.mxu0
  %4113 = vmatprep.mubr.f32.mxu0 0.0
  %4114 = vmatmul.mubr.f32.gmra.mxu0 %v3777
  %v4115 = vpop.f32.mrf.mxu0
  %v4116 = vadd.f32 %v3657, %v4115
  %v4117 = vpop.f32.mrf.mxu0
  %4118 = vmatprep.mubr.f32.mxu0 0.0
  %4119 = vmatmul.mubr.f32.gmra.mxu0 %v3780
  %v4120 = vpop.f32.mrf.mxu0
  %v4121 = vadd.f32 %v3657, %v4120
  %v4122 = vpop.f32.mrf.mxu0
  %4123 = vmatprep.mubr.f32.mxu0 0.0
  %4124 = vmatmul.mubr.f32.gmra.mxu0 %v3783
  %v4125 = vpop.f32.mrf.mxu0
  %v4126 = vadd.f32 %v3657, %v4125
  %v4127 = vpop.f32.mrf.mxu0
  %4128 = vmatprep.mubr.f32.mxu0 0.0
  %4129 = vmatmul.mubr.f32.gmra.mxu0 %v3786
  %v4130 = vpop.f32.mrf.mxu0
  %v4131 = vadd.f32 %v3657, %v4130
  %v4132 = vpop.f32.mrf.mxu0
  %4133 = vmatprep.mubr.f32.mxu0 0.0
  %4134 = vmatmul.mubr.f32.gmra.mxu0 %v3789
  %v4135 = vpop.f32.mrf.mxu0
  %v4136 = vadd.f32 %v3657, %v4135
  %v4137 = vpop.f32.mrf.mxu0
  %4138 = vmatprep.mubr.f32.mxu0 0.0
  %4139 = vmatmul.mubr.f32.gmra.mxu0 %v3792
  %v4140 = vpop.f32.mrf.mxu0
  %v4141 = vadd.f32 %v3657, %v4140
  %v4142 = vpop.f32.mrf.mxu0
  %4143 = vmatprep.mubr.f32.mxu0 0.0
  %4144 = vmatmul.mubr.f32.gmra.mxu0 %v3795
  %v4145 = vpop.f32.mrf.mxu0
  %v4146 = vadd.f32 %v3657, %v4145
  %v4147 = vpop.f32.mrf.mxu0
  %4148 = vmatprep.mubr.f32.mxu0 0.0
  %4149 = vmatmul.mubr.f32.gmra.mxu0 %v3798
  %v4150 = vpop.f32.mrf.mxu0
  %v4151 = vadd.f32 %v3657, %v4150
  %v4152 = vpop.f32.mrf.mxu0
  %4153 = vmatprep.mubr.f32.mxu0 0.0
  %4154 = vmatmul.mubr.f32.gmra.mxu0 %v3801
  %v4155 = vpop.f32.mrf.mxu0
  %v4156 = vadd.f32 %v3657, %v4155
  %v4157 = vpop.f32.mrf.mxu0
  %4158 = vmatprep.mubr.f32.mxu0 0.0
  %4159 = vmatmul.mubr.f32.gmra.mxu0 %v3804
  %v4160 = vpop.f32.mrf.mxu0
  %v4161 = vadd.f32 %v3657, %v4160
  %v4162 = vpop.f32.mrf.mxu0
  %4163 = vmatprep.mubr.f32.mxu0 0.0
  %4164 = vmatmul.mubr.f32.gmra.mxu0 %v3807
  %v4165 = vpop.f32.mrf.mxu0
  %v4166 = vadd.f32 %v3657, %v4165
  %v4167 = vpop.f32.mrf.mxu0
  %4168 = vmatprep.mubr.f32.mxu0 0.0
  %4169 = vmatmul.mubr.f32.gmra.mxu0 %v3810
  %v4170 = vpop.f32.mrf.mxu0
  %v4171 = vadd.f32 %v3657, %v4170
  %v4172 = vpop.f32.mrf.mxu0
  %4173 = vmatprep.mubr.f32.mxu0 0.0
  %4174 = vmatmul.mubr.f32.gmra.mxu0 %v3813
  %v4175 = vpop.f32.mrf.mxu0
  %v4176 = vadd.f32 %v3657, %v4175
  %v4177 = vpop.f32.mrf.mxu0
  %4178 = vmatprep.mubr.f32.mxu0 0.0
  %4179 = vmatmul.mubr.f32.gmra.mxu0 %v3816
  %v4180 = vpop.f32.mrf.mxu0
  %v4181 = vadd.f32 %v3657, %v4180
  %v4182 = vpop.f32.mrf.mxu0
  %4183 = vmatprep.mubr.f32.mxu0 0.0
  %4184 = vmatmul.mubr.f32.gmra.mxu0 %v3819
  %v4185 = vpop.f32.mrf.mxu0
  %v4186 = vadd.f32 %v3657, %v4185
  %v4187 = vpop.f32.mrf.mxu0
  %4188 = vmatprep.mubr.f32.mxu0 0.0
  %4189 = vmatmul.mubr.f32.gmra.mxu0 %v3822
  %v4190 = vpop.f32.mrf.mxu0
  %v4191 = vadd.f32 %v3657, %v4190
  %v4192 = vpop.f32.mrf.mxu0
  %4193 = vmatprep.mubr.f32.mxu0 0.0
  %4194 = vmatmul.mubr.f32.gmra.mxu0 %v3825
  %v4195 = vpop.f32.mrf.mxu0
  %v4196 = vadd.f32 %v3657, %v4195
  %v4197 = vpop.f32.mrf.mxu0
  %4198 = vmatprep.mubr.f32.mxu0 0.0
  %4199 = vmatmul.mubr.f32.gmra.mxu0 %v3828
  %v4200 = vpop.f32.mrf.mxu0
  %v4201 = vadd.f32 %v3657, %v4200
  %v4202 = vpop.f32.mrf.mxu0
  %4203 = vmatprep.mubr.f32.mxu0 0.0
  %4204 = vmatmul.mubr.f32.gmra.mxu0 %v3831
  %v4205 = vpop.f32.mrf.mxu0
  %v4206 = vadd.f32 %v3657, %v4205
  %v4207 = vpop.f32.mrf.mxu0
  %4208 = vmatprep.mubr.f32.mxu0 0.0
  %4209 = vmatmul.mubr.f32.gmra.mxu0 %v3834
  %v4210 = vpop.f32.mrf.mxu0
  %v4211 = vadd.f32 %v3657, %v4210
  %v4212 = vpop.f32.mrf.mxu0
  %4213 = vmatprep.mubr.f32.mxu0 0.0
  %4214 = vmatmul.mubr.f32.gmra.mxu0 %v3837
  %v4215 = vpop.f32.mrf.mxu0
  %v4216 = vadd.f32 %v3657, %v4215
  %v4217 = vpop.f32.mrf.mxu0
  %4218 = vmatprep.mubr.f32.mxu0 0.0
  %4219 = vmatmul.mubr.f32.gmra.mxu0 %v3840
  %v4220 = vpop.f32.mrf.mxu0
  %v4221 = vadd.f32 %v3657, %v4220
  %v4222 = vpop.f32.mrf.mxu0
  %4223 = vmatprep.mubr.f32.mxu0 0.0
  %4224 = vmatmul.mubr.f32.gmra.mxu0 %v3843
  %v4225 = vpop.f32.mrf.mxu0
  %v4226 = vadd.f32 %v3657, %v4225
  %v4227 = vpop.f32.mrf.mxu0
  %4228 = vmatprep.mubr.f32.mxu0 0.0
  %4229 = vmatmul.mubr.f32.gmra.mxu0 %v3846
  %v4230 = vpop.f32.mrf.mxu0
  %v4231 = vadd.f32 %v3657, %v4230
  %v4232 = vpop.f32.mrf.mxu0
  %4233 = vmatprep.mubr.f32.mxu0 0.0
  %4234 = vmatmul.mubr.f32.gmra.mxu0 %v3849
  %v4235 = vpop.f32.mrf.mxu0
  %v4236 = vadd.f32 %v3657, %v4235
  %v4237 = vpop.f32.mrf.mxu0
  %4238 = vdwg.mxu0
  %v4239 = vtanh.pop %v3921
  %v4240 = vtanh.pop %v3926
  %v4241 = vtanh.pop %v3931
  %v4242 = vtanh.pop %v3936
  %v4243 = vtanh.pop %v3941
  %v4244 = vtanh.pop %v3946
  %v4245 = vtanh.pop %v3951
  %v4246 = vtanh.pop %v3956
  %v4247 = vtanh.pop %v3961
  %v4248 = vtanh.pop %v3966
  %v4249 = vtanh.pop %v3971
  %v4250 = vtanh.pop %v3976
  %v4251 = vtanh.pop %v3981
  %v4252 = vtanh.pop %v3986
  %v4253 = vtanh.pop %v3991
  %v4254 = vtanh.pop %v3996
  %v4255 = vtanh.pop %v4001
  %v4256 = vtanh.pop %v4006
  %v4257 = vtanh.pop %v4011
  %v4258 = vtanh.pop %v4016
  %v4259 = vtanh.pop %v4021
  %v4260 = vtanh.pop %v4026
  %v4261 = vtanh.pop %v4031
  %v4262 = vtanh.pop %v4036
  %v4263 = vtanh.pop %v4041
  %v4264 = vtanh.pop %v4046
  %v4265 = vtanh.pop %v4051
  %v4266 = vtanh.pop %v4056
  %v4267 = vtanh.pop %v4061
  %v4268 = vtanh.pop %v4066
  %v4269 = vtanh.pop %v4071
  %v4270 = vtanh.pop %v4076
  %v4271 = vtanh.pop %v4081
  %v4272 = vtanh.pop %v4086
  %v4273 = vtanh.pop %v4091
  %v4274 = vtanh.pop %v4096
  %v4275 = vtanh.pop %v4101
  %v4276 = vtanh.pop %v4106
  %v4277 = vtanh.pop %v4111
  %v4278 = vtanh.pop %v4116
  %v4279 = vtanh.pop %v4121
  %v4280 = vtanh.pop %v4126
  %v4281 = vtanh.pop %v4131
  %v4282 = vtanh.pop %v4136
  %v4283 = vtanh.pop %v4141
  %v4284 = vtanh.pop %v4146
  %v4285 = vtanh.pop %v4151
  %v4286 = vtanh.pop %v4156
  %v4287 = vtanh.pop %v4161
  %v4288 = vtanh.pop %v4166
  %v4289 = vtanh.pop %v4171
  %v4290 = vtanh.pop %v4176
  %v4291 = vtanh.pop %v4181
  %v4292 = vtanh.pop %v4186
  %v4293 = vtanh.pop %v4191
  %v4294 = vtanh.pop %v4196
  %v4295 = vtanh.pop %v4201
  %v4296 = vtanh.pop %v4206
  %v4297 = vtanh.pop %v4211
  %v4298 = vtanh.pop %v4216
  %v4299 = vtanh.pop %v4221
  %v4300 = vtanh.pop %v4226
  %v4301 = vtanh.pop %v4231
  %v4302 = vtanh.pop %v4236
  %v4303 = vld [vmem:[%s5] sm:$0xff]
  %v4304 = vld [vmem:[%s5 + $0x8] sm:$0xff]
  %v4305 = vld [vmem:[%s5 + $0x10] sm:$0xff]
  %v4306 = vld [vmem:[%s5 + $0x18] sm:$0xff]
  %v4307 = vld [vmem:[%s5 + $0x20] sm:$0xff]
  %v4308 = vld [vmem:[%s5 + $0x28] sm:$0xff]
  %v4309 = vld [vmem:[%s5 + $0x30] sm:$0x3]
  %v4310 = vld [vmem:[%s6] sm:$0x1]
  %v4312 = vlaneseq
  %v4313 = vshrl.u32 %v4312, 7
  %v4314 = vsub.s32 0, %v4313
  %v4315 = vrot.slane %v4310, %v4314
  %v4318 = vsel %vm1017, %v4239, 0
  %v4321 = vsel %vm1017, %v4240, 0
  %v4324 = vsel %vm1017, %v4241, 0
  %v4327 = vsel %vm1017, %v4242, 0
  %v4330 = vsel %vm1017, %v4243, 0
  %v4333 = vsel %vm1017, %v4244, 0
  %v4336 = vsel %vm1017, %v4245, 0
  %v4339 = vsel %vm1017, %v4246, 0
  %v4342 = vsel %vm1017, %v4247, 0
  %v4345 = vsel %vm1017, %v4248, 0
  %v4348 = vsel %vm1017, %v4249, 0
  %v4351 = vsel %vm1017, %v4250, 0
  %v4354 = vsel %vm1017, %v4251, 0
  %v4357 = vsel %vm1017, %v4252, 0
  %v4360 = vsel %vm1017, %v4253, 0
  %v4363 = vsel %vm1017, %v4254, 0
  %v4366 = vsel %vm1017, %v4255, 0
  %v4369 = vsel %vm1017, %v4256, 0
  %v4372 = vsel %vm1017, %v4257, 0
  %v4375 = vsel %vm1017, %v4258, 0
  %v4378 = vsel %vm1017, %v4259, 0
  %v4381 = vsel %vm1017, %v4260, 0
  %v4384 = vsel %vm1017, %v4261, 0
  %v4387 = vsel %vm1017, %v4262, 0
  %v4390 = vsel %vm1017, %v4263, 0
  %v4393 = vsel %vm1017, %v4264, 0
  %v4396 = vsel %vm1017, %v4265, 0
  %v4399 = vsel %vm1017, %v4266, 0
  %v4402 = vsel %vm1017, %v4267, 0
  %v4405 = vsel %vm1017, %v4268, 0
  %v4408 = vsel %vm1017, %v4269, 0
  %v4411 = vsel %vm1017, %v4270, 0
  %v4414 = vsel %vm1017, %v4271, 0
  %v4417 = vsel %vm1017, %v4272, 0
  %v4420 = vsel %vm1017, %v4273, 0
  %v4423 = vsel %vm1017, %v4274, 0
  %v4426 = vsel %vm1017, %v4275, 0
  %v4429 = vsel %vm1017, %v4276, 0
  %v4432 = vsel %vm1017, %v4277, 0
  %v4435 = vsel %vm1017, %v4278, 0
  %v4438 = vsel %vm1017, %v4279, 0
  %v4441 = vsel %vm1017, %v4280, 0
  %v4444 = vsel %vm1017, %v4281, 0
  %v4447 = vsel %vm1017, %v4282, 0
  %v4450 = vsel %vm1017, %v4283, 0
  %v4453 = vsel %vm1017, %v4284, 0
  %v4456 = vsel %vm1017, %v4285, 0
  %v4459 = vsel %vm1017, %v4286, 0
  %v4462 = vsel %vm1017, %v4287, 0
  %v4465 = vsel %vm1017, %v4288, 0
  %v4468 = vsel %vm1017, %v4289, 0
  %v4471 = vsel %vm1017, %v4290, 0
  %v4474 = vsel %vm1017, %v4291, 0
  %v4477 = vsel %vm1017, %v4292, 0
  %v4480 = vsel %vm1017, %v4293, 0
  %v4483 = vsel %vm1017, %v4294, 0
  %v4486 = vsel %vm1017, %v4295, 0
  %v4489 = vsel %vm1017, %v4296, 0
  %v4492 = vsel %vm1017, %v4297, 0
  %v4495 = vsel %vm1017, %v4298, 0
  %v4498 = vsel %vm1017, %v4299, 0
  %v4501 = vsel %vm1017, %v4300, 0
  %v4504 = vsel %vm1017, %v4301, 0
  %v4507 = vsel %vm1017, %v4302, 0
  %v4510 = vsel %vm1210, %v4309, 0
  %4512 = vmatprep.subr.mxu0 0.0
  %4513 = vmatpush1.msra.mxu0 0.0
  %4514 = vmatprep.subr.mxu0 0.0
  %4515 = vmatpush1.msra.mxu0 0.0
  %4516 = vmatprep.subr.mxu0 0.0
  %4517 = vmatpush1.msra.mxu0 0.0
  %4518 = vmatprep.subr.mxu0 0.0
  %4519 = vmatpush1.msra.mxu0 0.0
  %4520 = vmatprep.subr.mxu0 0.0
  %4521 = vmatpush1.msra.mxu0 0.0
  %4522 = vmatprep.subr.mxu0 0.0
  %4523 = vmatpush1.msra.mxu0 0.0
  %4524 = vmatprep.subr.mxu0 0.0
  %4525 = vmatpush1.msra.mxu0 0.0
  %4526 = vmatprep.subr.mxu0 0.0
  %4527 = vmatpush1.msra.mxu0 0.0
  %4528 = vmatprep.subr.mxu0 0.0
  %4529 = vmatpush1.msra.mxu0 0.0
  %4530 = vmatprep.subr.mxu0 0.0
  %4531 = vmatpush1.msra.mxu0 %v4510
  %4532 = vmatprep.subr.mxu0 0.0
  %4533 = vmatpush1.msra.mxu0 %v4308
  %4534 = vmatprep.subr.mxu0 0.0
  %4535 = vmatpush1.msra.mxu0 %v4307
  %4536 = vmatprep.subr.mxu0 0.0
  %4537 = vmatpush1.msra.mxu0 %v4306
  %4538 = vmatprep.subr.mxu0 0.0
  %4539 = vmatpush1.msra.mxu0 %v4305
  %4540 = vmatprep.subr.mxu0 0.0
  %4541 = vmatpush1.msra.mxu0 %v4304
  %4542 = vmatprep.subr.mxu0 0.0
  %4543 = vmatpush1.msra.mxu0 %v4303
  %4544 = vmatprep.subr.mxu0 0.0
  %4545 = vmatpush2.msra.mxu0 0.0
  %4546 = vmatprep.subr.mxu0 0.0
  %4547 = vmatpush2.msra.mxu0 0.0
  %4548 = vmatprep.subr.mxu0 0.0
  %4549 = vmatpush2.msra.mxu0 0.0
  %4550 = vmatprep.subr.mxu0 0.0
  %4551 = vmatpush2.msra.mxu0 0.0
  %4552 = vmatprep.subr.mxu0 0.0
  %4553 = vmatpush2.msra.mxu0 0.0
  %4554 = vmatprep.subr.mxu0 0.0
  %4555 = vmatpush2.msra.mxu0 0.0
  %4556 = vmatprep.subr.mxu0 0.0
  %4557 = vmatpush2.msra.mxu0 0.0
  %4558 = vmatprep.subr.mxu0 0.0
  %4559 = vmatpush2.msra.mxu0 0.0
  %4560 = vmatprep.subr.mxu0 0.0
  %4561 = vmatpush2.msra.mxu0 0.0
  %4562 = vmatprep.subr.mxu0 0.0
  %4563 = vmatpush2.msra.mxu0 0.0
  %4564 = vmatprep.subr.mxu0 0.0
  %4565 = vmatpush2.msra.mxu0 0.0
  %4566 = vmatprep.subr.mxu0 0.0
  %4567 = vmatpush2.msra.mxu0 0.0
  %4568 = vmatprep.subr.mxu0 0.0
  %4569 = vmatpush2.msra.mxu0 0.0
  %4570 = vmatprep.subr.mxu0 0.0
  %4571 = vmatpush2.msra.mxu0 0.0
  %4572 = vmatprep.subr.mxu0 0.0
  %4573 = vmatpush2.msra.mxu0 0.0
  %4574 = vmatprep.subr.mxu0 0.0
  %4575 = vmatpush2.msra.mxu0 0.0
  %4576 = vmatprep.mubr.f32.mxu0 0.0
  %4577 = vmatmul.mubr.f32.gmra.mxu0 %v4318
  %v4578 = vpop.f32.mrf.mxu0
  %v4579 = vadd.f32 %v4315, %v4578
  %v4580 = vpop.f32.mrf.mxu0
  %4581 = vmatprep.mubr.f32.mxu0 0.0
  %4582 = vmatmul.mubr.f32.gmra.mxu0 %v4321
  %v4583 = vpop.f32.mrf.mxu0
  %v4584 = vadd.f32 %v4315, %v4583
  %v4585 = vpop.f32.mrf.mxu0
  %4586 = vmatprep.mubr.f32.mxu0 0.0
  %4587 = vmatmul.mubr.f32.gmra.mxu0 %v4324
  %v4588 = vpop.f32.mrf.mxu0
  %v4589 = vadd.f32 %v4315, %v4588
  %v4590 = vpop.f32.mrf.mxu0
  %4591 = vmatprep.mubr.f32.mxu0 0.0
  %4592 = vmatmul.mubr.f32.gmra.mxu0 %v4327
  %v4593 = vpop.f32.mrf.mxu0
  %v4594 = vadd.f32 %v4315, %v4593
  %v4595 = vpop.f32.mrf.mxu0
  %4596 = vmatprep.mubr.f32.mxu0 0.0
  %4597 = vmatmul.mubr.f32.gmra.mxu0 %v4330
  %v4598 = vpop.f32.mrf.mxu0
  %v4599 = vadd.f32 %v4315, %v4598
  %v4600 = vpop.f32.mrf.mxu0
  %4601 = vmatprep.mubr.f32.mxu0 0.0
  %4602 = vmatmul.mubr.f32.gmra.mxu0 %v4333
  %v4603 = vpop.f32.mrf.mxu0
  %v4604 = vadd.f32 %v4315, %v4603
  %v4605 = vpop.f32.mrf.mxu0
  %4606 = vmatprep.mubr.f32.mxu0 0.0
  %4607 = vmatmul.mubr.f32.gmra.mxu0 %v4336
  %v4608 = vpop.f32.mrf.mxu0
  %v4609 = vadd.f32 %v4315, %v4608
  %v4610 = vpop.f32.mrf.mxu0
  %4611 = vmatprep.mubr.f32.mxu0 0.0
  %4612 = vmatmul.mubr.f32.gmra.mxu0 %v4339
  %v4613 = vpop.f32.mrf.mxu0
  %v4614 = vadd.f32 %v4315, %v4613
  %v4615 = vpop.f32.mrf.mxu0
  %4616 = vmatprep.mubr.f32.mxu0 0.0
  %4617 = vmatmul.mubr.f32.gmra.mxu0 %v4342
  %v4618 = vpop.f32.mrf.mxu0
  %v4619 = vadd.f32 %v4315, %v4618
  %v4620 = vpop.f32.mrf.mxu0
  %4621 = vmatprep.mubr.f32.mxu0 0.0
  %4622 = vmatmul.mubr.f32.gmra.mxu0 %v4345
  %v4623 = vpop.f32.mrf.mxu0
  %v4624 = vadd.f32 %v4315, %v4623
  %v4625 = vpop.f32.mrf.mxu0
  %4626 = vmatprep.mubr.f32.mxu0 0.0
  %4627 = vmatmul.mubr.f32.gmra.mxu0 %v4348
  %v4628 = vpop.f32.mrf.mxu0
  %v4629 = vadd.f32 %v4315, %v4628
  %v4630 = vpop.f32.mrf.mxu0
  %4631 = vmatprep.mubr.f32.mxu0 0.0
  %4632 = vmatmul.mubr.f32.gmra.mxu0 %v4351
  %v4633 = vpop.f32.mrf.mxu0
  %v4634 = vadd.f32 %v4315, %v4633
  %v4635 = vpop.f32.mrf.mxu0
  %4636 = vmatprep.mubr.f32.mxu0 0.0
  %4637 = vmatmul.mubr.f32.gmra.mxu0 %v4354
  %v4638 = vpop.f32.mrf.mxu0
  %v4639 = vadd.f32 %v4315, %v4638
  %v4640 = vpop.f32.mrf.mxu0
  %4641 = vmatprep.mubr.f32.mxu0 0.0
  %4642 = vmatmul.mubr.f32.gmra.mxu0 %v4357
  %v4643 = vpop.f32.mrf.mxu0
  %v4644 = vadd.f32 %v4315, %v4643
  %v4645 = vpop.f32.mrf.mxu0
  %4646 = vmatprep.mubr.f32.mxu0 0.0
  %4647 = vmatmul.mubr.f32.gmra.mxu0 %v4360
  %v4648 = vpop.f32.mrf.mxu0
  %v4649 = vadd.f32 %v4315, %v4648
  %v4650 = vpop.f32.mrf.mxu0
  %4651 = vmatprep.mubr.f32.mxu0 0.0
  %4652 = vmatmul.mubr.f32.gmra.mxu0 %v4363
  %v4653 = vpop.f32.mrf.mxu0
  %v4654 = vadd.f32 %v4315, %v4653
  %v4655 = vpop.f32.mrf.mxu0
  %4656 = vmatprep.mubr.f32.mxu0 0.0
  %4657 = vmatmul.mubr.f32.gmra.mxu0 %v4366
  %v4658 = vpop.f32.mrf.mxu0
  %v4659 = vadd.f32 %v4315, %v4658
  %v4660 = vpop.f32.mrf.mxu0
  %4661 = vmatprep.mubr.f32.mxu0 0.0
  %4662 = vmatmul.mubr.f32.gmra.mxu0 %v4369
  %v4663 = vpop.f32.mrf.mxu0
  %v4664 = vadd.f32 %v4315, %v4663
  %v4665 = vpop.f32.mrf.mxu0
  %4666 = vmatprep.mubr.f32.mxu0 0.0
  %4667 = vmatmul.mubr.f32.gmra.mxu0 %v4372
  %v4668 = vpop.f32.mrf.mxu0
  %v4669 = vadd.f32 %v4315, %v4668
  %v4670 = vpop.f32.mrf.mxu0
  %4671 = vmatprep.mubr.f32.mxu0 0.0
  %4672 = vmatmul.mubr.f32.gmra.mxu0 %v4375
  %v4673 = vpop.f32.mrf.mxu0
  %v4674 = vadd.f32 %v4315, %v4673
  %v4675 = vpop.f32.mrf.mxu0
  %4676 = vmatprep.mubr.f32.mxu0 0.0
  %4677 = vmatmul.mubr.f32.gmra.mxu0 %v4378
  %v4678 = vpop.f32.mrf.mxu0
  %v4679 = vadd.f32 %v4315, %v4678
  %v4680 = vpop.f32.mrf.mxu0
  %4681 = vmatprep.mubr.f32.mxu0 0.0
  %4682 = vmatmul.mubr.f32.gmra.mxu0 %v4381
  %v4683 = vpop.f32.mrf.mxu0
  %v4684 = vadd.f32 %v4315, %v4683
  %v4685 = vpop.f32.mrf.mxu0
  %4686 = vmatprep.mubr.f32.mxu0 0.0
  %4687 = vmatmul.mubr.f32.gmra.mxu0 %v4384
  %v4688 = vpop.f32.mrf.mxu0
  %v4689 = vadd.f32 %v4315, %v4688
  %v4690 = vpop.f32.mrf.mxu0
  %4691 = vmatprep.mubr.f32.mxu0 0.0
  %4692 = vmatmul.mubr.f32.gmra.mxu0 %v4387
  %v4693 = vpop.f32.mrf.mxu0
  %v4694 = vadd.f32 %v4315, %v4693
  %v4695 = vpop.f32.mrf.mxu0
  %4696 = vmatprep.mubr.f32.mxu0 0.0
  %4697 = vmatmul.mubr.f32.gmra.mxu0 %v4390
  %v4698 = vpop.f32.mrf.mxu0
  %v4699 = vadd.f32 %v4315, %v4698
  %v4700 = vpop.f32.mrf.mxu0
  %4701 = vmatprep.mubr.f32.mxu0 0.0
  %4702 = vmatmul.mubr.f32.gmra.mxu0 %v4393
  %v4703 = vpop.f32.mrf.mxu0
  %v4704 = vadd.f32 %v4315, %v4703
  %v4705 = vpop.f32.mrf.mxu0
  %4706 = vmatprep.mubr.f32.mxu0 0.0
  %4707 = vmatmul.mubr.f32.gmra.mxu0 %v4396
  %v4708 = vpop.f32.mrf.mxu0
  %v4709 = vadd.f32 %v4315, %v4708
  %v4710 = vpop.f32.mrf.mxu0
  %4711 = vmatprep.mubr.f32.mxu0 0.0
  %4712 = vmatmul.mubr.f32.gmra.mxu0 %v4399
  %v4713 = vpop.f32.mrf.mxu0
  %v4714 = vadd.f32 %v4315, %v4713
  %v4715 = vpop.f32.mrf.mxu0
  %4716 = vmatprep.mubr.f32.mxu0 0.0
  %4717 = vmatmul.mubr.f32.gmra.mxu0 %v4402
  %v4718 = vpop.f32.mrf.mxu0
  %v4719 = vadd.f32 %v4315, %v4718
  %v4720 = vpop.f32.mrf.mxu0
  %4721 = vmatprep.mubr.f32.mxu0 0.0
  %4722 = vmatmul.mubr.f32.gmra.mxu0 %v4405
  %v4723 = vpop.f32.mrf.mxu0
  %v4724 = vadd.f32 %v4315, %v4723
  %v4725 = vpop.f32.mrf.mxu0
  %4726 = vmatprep.mubr.f32.mxu0 0.0
  %4727 = vmatmul.mubr.f32.gmra.mxu0 %v4408
  %v4728 = vpop.f32.mrf.mxu0
  %v4729 = vadd.f32 %v4315, %v4728
  %v4730 = vpop.f32.mrf.mxu0
  %4731 = vmatprep.mubr.f32.mxu0 0.0
  %4732 = vmatmul.mubr.f32.gmra.mxu0 %v4411
  %v4733 = vpop.f32.mrf.mxu0
  %v4734 = vadd.f32 %v4315, %v4733
  %v4735 = vpop.f32.mrf.mxu0
  %4736 = vmatprep.mubr.f32.mxu0 0.0
  %4737 = vmatmul.mubr.f32.gmra.mxu0 %v4414
  %v4738 = vpop.f32.mrf.mxu0
  %v4739 = vadd.f32 %v4315, %v4738
  %v4740 = vpop.f32.mrf.mxu0
  %4741 = vmatprep.mubr.f32.mxu0 0.0
  %4742 = vmatmul.mubr.f32.gmra.mxu0 %v4417
  %v4743 = vpop.f32.mrf.mxu0
  %v4744 = vadd.f32 %v4315, %v4743
  %v4745 = vpop.f32.mrf.mxu0
  %4746 = vmatprep.mubr.f32.mxu0 0.0
  %4747 = vmatmul.mubr.f32.gmra.mxu0 %v4420
  %v4748 = vpop.f32.mrf.mxu0
  %v4749 = vadd.f32 %v4315, %v4748
  %v4750 = vpop.f32.mrf.mxu0
  %4751 = vmatprep.mubr.f32.mxu0 0.0
  %4752 = vmatmul.mubr.f32.gmra.mxu0 %v4423
  %v4753 = vpop.f32.mrf.mxu0
  %v4754 = vadd.f32 %v4315, %v4753
  %v4755 = vpop.f32.mrf.mxu0
  %4756 = vmatprep.mubr.f32.mxu0 0.0
  %4757 = vmatmul.mubr.f32.gmra.mxu0 %v4426
  %v4758 = vpop.f32.mrf.mxu0
  %v4759 = vadd.f32 %v4315, %v4758
  %v4760 = vpop.f32.mrf.mxu0
  %4761 = vmatprep.mubr.f32.mxu0 0.0
  %4762 = vmatmul.mubr.f32.gmra.mxu0 %v4429
  %v4763 = vpop.f32.mrf.mxu0
  %v4764 = vadd.f32 %v4315, %v4763
  %v4765 = vpop.f32.mrf.mxu0
  %4766 = vmatprep.mubr.f32.mxu0 0.0
  %4767 = vmatmul.mubr.f32.gmra.mxu0 %v4432
  %v4768 = vpop.f32.mrf.mxu0
  %v4769 = vadd.f32 %v4315, %v4768
  %v4770 = vpop.f32.mrf.mxu0
  %4771 = vmatprep.mubr.f32.mxu0 0.0
  %4772 = vmatmul.mubr.f32.gmra.mxu0 %v4435
  %v4773 = vpop.f32.mrf.mxu0
  %v4774 = vadd.f32 %v4315, %v4773
  %v4775 = vpop.f32.mrf.mxu0
  %4776 = vmatprep.mubr.f32.mxu0 0.0
  %4777 = vmatmul.mubr.f32.gmra.mxu0 %v4438
  %v4778 = vpop.f32.mrf.mxu0
  %v4779 = vadd.f32 %v4315, %v4778
  %v4780 = vpop.f32.mrf.mxu0
  %4781 = vmatprep.mubr.f32.mxu0 0.0
  %4782 = vmatmul.mubr.f32.gmra.mxu0 %v4441
  %v4783 = vpop.f32.mrf.mxu0
  %v4784 = vadd.f32 %v4315, %v4783
  %v4785 = vpop.f32.mrf.mxu0
  %4786 = vmatprep.mubr.f32.mxu0 0.0
  %4787 = vmatmul.mubr.f32.gmra.mxu0 %v4444
  %v4788 = vpop.f32.mrf.mxu0
  %v4789 = vadd.f32 %v4315, %v4788
  %v4790 = vpop.f32.mrf.mxu0
  %4791 = vmatprep.mubr.f32.mxu0 0.0
  %4792 = vmatmul.mubr.f32.gmra.mxu0 %v4447
  %v4793 = vpop.f32.mrf.mxu0
  %v4794 = vadd.f32 %v4315, %v4793
  %v4795 = vpop.f32.mrf.mxu0
  %4796 = vmatprep.mubr.f32.mxu0 0.0
  %4797 = vmatmul.mubr.f32.gmra.mxu0 %v4450
  %v4798 = vpop.f32.mrf.mxu0
  %v4799 = vadd.f32 %v4315, %v4798
  %v4800 = vpop.f32.mrf.mxu0
  %4801 = vmatprep.mubr.f32.mxu0 0.0
  %4802 = vmatmul.mubr.f32.gmra.mxu0 %v4453
  %v4803 = vpop.f32.mrf.mxu0
  %v4804 = vadd.f32 %v4315, %v4803
  %v4805 = vpop.f32.mrf.mxu0
  %4806 = vmatprep.mubr.f32.mxu0 0.0
  %4807 = vmatmul.mubr.f32.gmra.mxu0 %v4456
  %v4808 = vpop.f32.mrf.mxu0
  %v4809 = vadd.f32 %v4315, %v4808
  %v4810 = vpop.f32.mrf.mxu0
  %4811 = vmatprep.mubr.f32.mxu0 0.0
  %4812 = vmatmul.mubr.f32.gmra.mxu0 %v4459
  %v4813 = vpop.f32.mrf.mxu0
  %v4814 = vadd.f32 %v4315, %v4813
  %v4815 = vpop.f32.mrf.mxu0
  %4816 = vmatprep.mubr.f32.mxu0 0.0
  %4817 = vmatmul.mubr.f32.gmra.mxu0 %v4462
  %v4818 = vpop.f32.mrf.mxu0
  %v4819 = vadd.f32 %v4315, %v4818
  %v4820 = vpop.f32.mrf.mxu0
  %4821 = vmatprep.mubr.f32.mxu0 0.0
  %4822 = vmatmul.mubr.f32.gmra.mxu0 %v4465
  %v4823 = vpop.f32.mrf.mxu0
  %v4824 = vadd.f32 %v4315, %v4823
  %v4825 = vpop.f32.mrf.mxu0
  %4826 = vmatprep.mubr.f32.mxu0 0.0
  %4827 = vmatmul.mubr.f32.gmra.mxu0 %v4468
  %v4828 = vpop.f32.mrf.mxu0
  %v4829 = vadd.f32 %v4315, %v4828
  %v4830 = vpop.f32.mrf.mxu0
  %4831 = vmatprep.mubr.f32.mxu0 0.0
  %4832 = vmatmul.mubr.f32.gmra.mxu0 %v4471
  %v4833 = vpop.f32.mrf.mxu0
  %v4834 = vadd.f32 %v4315, %v4833
  %v4835 = vpop.f32.mrf.mxu0
  %4836 = vmatprep.mubr.f32.mxu0 0.0
  %4837 = vmatmul.mubr.f32.gmra.mxu0 %v4474
  %v4838 = vpop.f32.mrf.mxu0
  %v4839 = vadd.f32 %v4315, %v4838
  %v4840 = vpop.f32.mrf.mxu0
  %4841 = vmatprep.mubr.f32.mxu0 0.0
  %4842 = vmatmul.mubr.f32.gmra.mxu0 %v4477
  %v4843 = vpop.f32.mrf.mxu0
  %v4844 = vadd.f32 %v4315, %v4843
  %v4845 = vpop.f32.mrf.mxu0
  %4846 = vmatprep.mubr.f32.mxu0 0.0
  %4847 = vmatmul.mubr.f32.gmra.mxu0 %v4480
  %v4848 = vpop.f32.mrf.mxu0
  %v4849 = vadd.f32 %v4315, %v4848
  %v4850 = vpop.f32.mrf.mxu0
  %4851 = vmatprep.mubr.f32.mxu0 0.0
  %4852 = vmatmul.mubr.f32.gmra.mxu0 %v4483
  %v4853 = vpop.f32.mrf.mxu0
  %v4854 = vadd.f32 %v4315, %v4853
  %v4855 = vpop.f32.mrf.mxu0
  %4856 = vmatprep.mubr.f32.mxu0 0.0
  %4857 = vmatmul.mubr.f32.gmra.mxu0 %v4486
  %v4858 = vpop.f32.mrf.mxu0
  %v4859 = vadd.f32 %v4315, %v4858
  %v4860 = vpop.f32.mrf.mxu0
  %4861 = vmatprep.mubr.f32.mxu0 0.0
  %4862 = vmatmul.mubr.f32.gmra.mxu0 %v4489
  %v4863 = vpop.f32.mrf.mxu0
  %v4864 = vadd.f32 %v4315, %v4863
  %v4865 = vpop.f32.mrf.mxu0
  %4866 = vmatprep.mubr.f32.mxu0 0.0
  %4867 = vmatmul.mubr.f32.gmra.mxu0 %v4492
  %v4868 = vpop.f32.mrf.mxu0
  %v4869 = vadd.f32 %v4315, %v4868
  %v4870 = vpop.f32.mrf.mxu0
  %4871 = vmatprep.mubr.f32.mxu0 0.0
  %4872 = vmatmul.mubr.f32.gmra.mxu0 %v4495
  %v4873 = vpop.f32.mrf.mxu0
  %v4874 = vadd.f32 %v4315, %v4873
  %v4875 = vpop.f32.mrf.mxu0
  %4876 = vmatprep.mubr.f32.mxu0 0.0
  %4877 = vmatmul.mubr.f32.gmra.mxu0 %v4498
  %v4878 = vpop.f32.mrf.mxu0
  %v4879 = vadd.f32 %v4315, %v4878
  %v4880 = vpop.f32.mrf.mxu0
  %4881 = vmatprep.mubr.f32.mxu0 0.0
  %4882 = vmatmul.mubr.f32.gmra.mxu0 %v4501
  %v4883 = vpop.f32.mrf.mxu0
  %v4884 = vadd.f32 %v4315, %v4883
  %v4885 = vpop.f32.mrf.mxu0
  %4886 = vmatprep.mubr.f32.mxu0 0.0
  %4887 = vmatmul.mubr.f32.gmra.mxu0 %v4504
  %v4888 = vpop.f32.mrf.mxu0
  %v4889 = vadd.f32 %v4315, %v4888
  %v4890 = vpop.f32.mrf.mxu0
  %4891 = vmatprep.mubr.f32.mxu0 0.0
  %4892 = vmatmul.mubr.f32.gmra.mxu0 %v4507
  %v4893 = vpop.f32.mrf.mxu0
  %v4894 = vadd.f32 %v4315, %v4893
  %v4895 = vpop.f32.mrf.mxu0
  %4896 = vdwg.mxu0
  %4897 = vst [vmem:[%s7] sm:$0xff] %v4579
  %4898 = vst [vmem:[%s7 + $0x8] sm:$0xff] %v4584
  %4899 = vst [vmem:[%s7 + $0x10] sm:$0xff] %v4589
  %4900 = vst [vmem:[%s7 + $0x18] sm:$0xff] %v4594
  %4901 = vst [vmem:[%s7 + $0x20] sm:$0xff] %v4599
  %4902 = vst [vmem:[%s7 + $0x28] sm:$0xff] %v4604
  %4903 = vst [vmem:[%s7 + $0x30] sm:$0xff] %v4609
  %4904 = vst [vmem:[%s7 + $0x38] sm:$0xff] %v4614
  %4905 = vst [vmem:[%s7 + $0x40] sm:$0xff] %v4619
  %4906 = vst [vmem:[%s7 + $0x48] sm:$0xff] %v4624
  %4907 = vst [vmem:[%s7 + $0x50] sm:$0xff] %v4629
  %4908 = vst [vmem:[%s7 + $0x58] sm:$0xff] %v4634
  %4909 = vst [vmem:[%s7 + $0x60] sm:$0xff] %v4639
  %4910 = vst [vmem:[%s7 + $0x68] sm:$0xff] %v4644
  %4911 = vst [vmem:[%s7 + $0x70] sm:$0xff] %v4649
  %4912 = vst [vmem:[%s7 + $0x78] sm:$0xff] %v4654
  %4913 = vst [vmem:[%s7 + $0x80] sm:$0xff] %v4659
  %4914 = vst [vmem:[%s7 + $0x88] sm:$0xff] %v4664
  %4915 = vst [vmem:[%s7 + $0x90] sm:$0xff] %v4669
  %4916 = vst [vmem:[%s7 + $0x98] sm:$0xff] %v4674
  %4917 = vst [vmem:[%s7 + $0xa0] sm:$0xff] %v4679
  %4918 = vst [vmem:[%s7 + $0xa8] sm:$0xff] %v4684
  %4919 = vst [vmem:[%s7 + $0xb0] sm:$0xff] %v4689
  %4920 = vst [vmem:[%s7 + $0xb8] sm:$0xff] %v4694
  %4921 = vst [vmem:[%s7 + $0xc0] sm:$0xff] %v4699
  %4922 = vst [vmem:[%s7 + $0xc8] sm:$0xff] %v4704
  %4923 = vst [vmem:[%s7 + $0xd0] sm:$0xff] %v4709
  %4924 = vst [vmem:[%s7 + $0xd8] sm:$0xff] %v4714
  %4925 = vst [vmem:[%s7 + $0xe0] sm:$0xff] %v4719
  %4926 = vst [vmem:[%s7 + $0xe8] sm:$0xff] %v4724
  %4927 = vst [vmem:[%s7 + $0xf0] sm:$0xff] %v4729
  %4928 = vst [vmem:[%s7 + $0xf8] sm:$0xff] %v4734
  %4929 = vst [vmem:[%s7 + $0x100] sm:$0xff] %v4739
  %4930 = vst [vmem:[%s7 + $0x108] sm:$0xff] %v4744
  %4931 = vst [vmem:[%s7 + $0x110] sm:$0xff] %v4749
  %4932 = vst [vmem:[%s7 + $0x118] sm:$0xff] %v4754
  %4933 = vst [vmem:[%s7 + $0x120] sm:$0xff] %v4759
  %4934 = vst [vmem:[%s7 + $0x128] sm:$0xff] %v4764
  %4935 = vst [vmem:[%s7 + $0x130] sm:$0xff] %v4769
  %4936 = vst [vmem:[%s7 + $0x138] sm:$0xff] %v4774
  %4937 = vst [vmem:[%s7 + $0x140] sm:$0xff] %v4779
  %4938 = vst [vmem:[%s7 + $0x148] sm:$0xff] %v4784
  %4939 = vst [vmem:[%s7 + $0x150] sm:$0xff] %v4789
  %4940 = vst [vmem:[%s7 + $0x158] sm:$0xff] %v4794
  %4941 = vst [vmem:[%s7 + $0x160] sm:$0xff] %v4799
  %4942 = vst [vmem:[%s7 + $0x168] sm:$0xff] %v4804
  %4943 = vst [vmem:[%s7 + $0x170] sm:$0xff] %v4809
  %4944 = vst [vmem:[%s7 + $0x178] sm:$0xff] %v4814
  %4945 = vst [vmem:[%s7 + $0x180] sm:$0xff] %v4819
  %4946 = vst [vmem:[%s7 + $0x188] sm:$0xff] %v4824
  %4947 = vst [vmem:[%s7 + $0x190] sm:$0xff] %v4829
  %4948 = vst [vmem:[%s7 + $0x198] sm:$0xff] %v4834
  %4949 = vst [vmem:[%s7 + $0x1a0] sm:$0xff] %v4839
  %4950 = vst [vmem:[%s7 + $0x1a8] sm:$0xff] %v4844
  %4951 = vst [vmem:[%s7 + $0x1b0] sm:$0xff] %v4849
  %4952 = vst [vmem:[%s7 + $0x1b8] sm:$0xff] %v4854
  %4953 = vst [vmem:[%s7 + $0x1c0] sm:$0xff] %v4859
  %4954 = vst [vmem:[%s7 + $0x1c8] sm:$0xff] %v4864
  %4955 = vst [vmem:[%s7 + $0x1d0] sm:$0xff] %v4869
  %4956 = vst [vmem:[%s7 + $0x1d8] sm:$0xff] %v4874
  %4957 = vst [vmem:[%s7 + $0x1e0] sm:$0xff] %v4879
  %4958 = vst [vmem:[%s7 + $0x1e8] sm:$0xff] %v4884
  %4959 = vst [vmem:[%s7 + $0x1f0] sm:$0xff] %v4889
  %4960 = vst [vmem:[%s7 + $0x1f8] sm:$0xff] %v4894
  // Predicated region
  $region30: #{pinn_forward.1} parent=0 // pred_check
    _
  $region31: #{pinn_forward.1} parent=0 // pred_check_branch
    %4962 = sbr.rel (0) target = $region33
  $region32: #{pinn_forward.1} parent=0 // pred_region
    _
  $region33: #{pinn_forward.1} parent=0 // pred_fallthru
    _
  // Predicated region
  $region34: #{pinn_forward.1} parent=0 // pred_check
    _
  $region35: #{pinn_forward.1} parent=0 // pred_check_branch
    %4964 = sbr.rel (0) target = $region37
  $region36: #{pinn_forward.1} parent=0 // pred_region
    _
  $region37: #{pinn_forward.1} parent=0 // pred_fallthru
    _

</llo_original>
